<compile_context>
chip_gen: v6e
topology: v6e:2x2x1
jax: 0.10.0
libtpu: 0.0.40
codegen_flags: <defaults>
</compile_context>

<pallas_src>
import functools

import jax
import jax.numpy as jnp
from jax.experimental import pallas as pl
from jax.experimental.pallas import tpu as pltpu
from jax.scipy.linalg import block_diag


# ----------------------- Pallas kernel: fused multi-scale PointConv ---------
def _make_fused_kernel(*, S_tile, K_total, k_chunk, out_w):
    """refs: feats (K_total*S_tile, n_col) bf16, valid (K_total*S_tile, 1) i32,
    W1 (n_col, Hc) bf16, W2 (Hc, out_w) bf16, out (S_tile, out_w) bf16."""

    def kernel(f_ref, v_ref, w1_ref, w2_ref, o_ref):
        w1 = w1_ref[...]                                  # resident block-diag weights
        w2 = w2_ref[...]
        out = jnp.zeros((S_tile, out_w), jnp.float32)

        # k-chunked two-layer MLP + masked max: each chunk is a ~128-row MXU
        # pass; the live f32 slab stays ~64 KiB regardless of K_total.
        for c0 in range(0, K_total, k_chunk):
            ck = min(k_chunk, K_total - c0)
            rows = ck * S_tile
            r0 = c0 * S_tile

            fk = f_ref[pl.ds(r0, rows), :]                # (rows, n_col) bf16
            h = jnp.dot(fk, w1, preferred_element_type=jnp.float32)
            h = jnp.maximum(h, 0.0)                       # layer-1 ReLU (b1 folded)
            y = jnp.dot(h.astype(jnp.bfloat16), w2,
                        preferred_element_type=jnp.float32)
            y = jnp.maximum(y, 0.0)                       # layer-2 ReLU (b2 folded)

            # ONE broadcast+select per chunk.  Cross-scale columns are exactly
            # 0 by the block-diagonal construction, and every valid message is
            # >= 0 (final ReLU), so a plain max over zero-filled rows matches
            # PyG's max aggregation (empty neighborhoods -> 0).
            vk = v_ref[pl.ds(r0, rows), :] > 0            # (rows, 1)
            y = jnp.where(vk, y, 0.0)

            for j in range(ck):                           # pure VPU maxes, no selects
                out = jnp.maximum(out, y[j * S_tile:(j + 1) * S_tile, :])

        o_ref[...] = out.astype(o_ref.dtype)

    return kernel


def fused_pointconv_msg(feats, valid, w1, w2, *, S, S_tile, K_total, out_w):
    """feats: (S//S_tile * K_total * S_tile, n_col) bf16 in tile-major,
    k-major-within-tile row order; valid: same rows, (·, 1) int32."""
    assert S % S_tile == 0 and S_tile % 16 == 0
    n_col = feats.shape[1]
    hid = w1.shape[1]
    n_tiles = S // S_tile
    # ~128-row MXU passes (multiple of 128 keeps v5e's 4x128 MXU fully fed).
    k_chunk = max(1, min(K_total, 128 // S_tile))

    kernel = _make_fused_kernel(S_tile=S_tile, K_total=K_total,
                                k_chunk=k_chunk, out_w=out_w)

    # Per-step VMEM footprint (double-buffered blocks + live intermediates);
    # sized explicitly so the same config is safe on v7x's 64 MiB VMEM.
    blk_bytes = (K_total * S_tile * n_col * 2            # feats block
                 + K_total * S_tile * 4                  # valid block
                 + n_col * hid * 2 + hid * out_w * 2     # resident weights
                 + S_tile * out_w * 2)                   # output block
    live_bytes = k_chunk * S_tile * (hid + out_w) * 4 + S_tile * out_w * 4
    vmem_limit = int(min(48 * 2**20,
                         max(8 * 2**20, 8 * (2 * blk_bytes + live_bytes))))

    return pl.pallas_call(
        kernel,
        out_shape=jax.ShapeDtypeStruct((S, out_w), jnp.bfloat16),
        grid=(n_tiles,),
        in_specs=[
            pl.BlockSpec((K_total * S_tile, n_col), lambda s: (s, 0)),
            pl.BlockSpec((K_total * S_tile, 1), lambda s: (s, 0)),
            pl.BlockSpec((n_col, hid), lambda s: (0, 0)),      # stays resident
            pl.BlockSpec((hid, out_w), lambda s: (0, 0)),      # stays resident
        ],
        out_specs=pl.BlockSpec((S_tile, out_w), lambda s: (s, 0)),
        compiler_params=pltpu.CompilerParams(
            dimension_semantics=("parallel",),                 # v7x: shard over both TCs
            vmem_limit_bytes=vmem_limit),
    )(feats, valid, w1, w2)


# ----------------------- plain-JAX glue: fps / radius (ball query) ----------
def _fps_single(pos_b, num_samples):
    """Farthest point sampling on one batch element, deterministic start at 0."""
    # TODO(synk): PyG fps uses a random start point; we start at index 0.
    n = pos_b.shape[0]

    def body(i, state):
        idxs, dists = state
        last = pos_b[idxs[i - 1]]
        d = jnp.sum((pos_b - last) ** 2, axis=-1)
        dists = jnp.minimum(dists, d)
        nxt = jnp.argmax(dists).astype(jnp.int32)
        return idxs.at[i].set(nxt), dists

    idxs0 = jnp.zeros((num_samples,), jnp.int32)
    dists0 = jnp.full((n,), jnp.inf, jnp.float32)
    idxs, _ = jax.lax.fori_loop(1, num_samples, body, (idxs0, dists0))
    return idxs


def _ball_group(pos, batch, ctr_pos, ctr_batch, r, k):
    """radius(pos, pos[idx], r, batch, batch[idx], max_num_neighbors=k).

    TODO(synk): torch_cluster.radius keeps an *arbitrary* first-k subset within
    r; here we deterministically keep the k nearest within r.
    Returns neighbor indices (S, k) and per-center valid-neighbor counts (S,).
    """
    d2 = jnp.sum((ctr_pos[:, None, :] - pos[None, :, :]) ** 2, axis=-1)   # (S, N)
    valid = (d2 <= r * r) & (ctr_batch[:, None] == batch[None, :])
    key = jnp.where(valid, -d2, -jnp.inf)
    vals, nbr_idx = jax.lax.top_k(key, k)                                 # (S, k)
    cnt = jnp.sum(vals > -jnp.inf, axis=1).astype(jnp.int32)              # (S,)
    return nbr_idx.astype(jnp.int32), cnt


def _pick_s_tile(S, cap):
    t, best = 16, None
    while t <= min(S, cap):
        if S % t == 0:
            best = t
        t *= 2
    return best if best is not None else S


# ----------------------- SAModuleMSG forward ---------------------------------
def sa_module_msg_forward(params, x, pos, batch, *, sample_points, r_list,
                          group_sizes, batch_size, s_tile_cap=128,
                          return_reference=False):
    n = pos.shape[0]
    nb = n // batch_size
    s_per = int(round(sample_points / n * nb))      # fps ratio = sample_points/len(pos)

    pos_b = pos.reshape(batch_size, nb, 3)
    idx_b = jax.vmap(lambda p: _fps_single(p, s_per))(pos_b)              # (B, s_per)
    idx = (idx_b + (jnp.arange(batch_size, dtype=jnp.int32) * nb)[:, None]).reshape(-1)

    ctr_pos = pos[idx]                                                    # (S, 3)
    ctr_batch = batch[idx]                                                # (S,)
    S = idx.shape[0]
    assert S % 16 == 0, "sample count must be a multiple of 16 (bf16 tiling)"
    S_tile = _pick_s_tile(S, s_tile_cap)
    n_tiles = S // S_tile

    n_scales = len(r_list)
    cin = x.shape[1] + 3                 # [x_j, pos_j - pos_i]
    cin_aug = cin + 1                    # + ones column (folded layer-1 bias)
    cin_pad = ((cin_aug + 7) // 8) * 8   # sublane-align
    n_col = n_scales * cin_pad

    ctr_t = ctr_pos.reshape(n_tiles, S_tile, 3)

    feat_blocks, valid_blocks, w1_blks, w2_blks = [], [], [], []
    groups, Ks, Couts = [], [], []
    for i, (r, k, (w1, b1, w2, b2)) in enumerate(zip(r_list, group_sizes, params)):
        nbr_idx, cnt = _ball_group(pos, batch, ctr_pos, ctr_batch, r, k)  # (S,K), (S,)
        groups.append((nbr_idx, cnt))

        # Issue the gather directly in tile-major, k-major-within-tile order:
        # only the tiny index matrix is transposed, never the grouped tensor.
        idx_t = nbr_idx.reshape(n_tiles, S_tile, k).transpose(0, 2, 1)    # (T, K, St)
        gx = x[idx_t]                                                     # (T, K, St, C)
        gp = pos[idx_t] - ctr_t[:, None, :, :]                            # (T, K, St, 3)
        cols = [gx, gp, jnp.ones(idx_t.shape + (1,), x.dtype)]            # ones = bias fold
        if cin_pad > cin_aug:
            cols.append(jnp.zeros(idx_t.shape + (cin_pad - cin_aug,), x.dtype))
        core = jnp.concatenate(cols, axis=-1)                             # (T, K, St, cin_pad)

        # Place into this scale's disjoint input-column block (block-diag fusion).
        blocks = []
        if i > 0:
            blocks.append(jnp.zeros(core.shape[:-1] + (i * cin_pad,), core.dtype))
        blocks.append(core)
        if i < n_scales - 1:
            blocks.append(jnp.zeros(core.shape[:-1] + ((n_scales - 1 - i) * cin_pad,),
                                    core.dtype))
        feat_blocks.append(jnp.concatenate(blocks, axis=-1))              # (T, K, St, n_col)

        k_ids = jnp.arange(k, dtype=jnp.int32).reshape(1, k, 1)
        valid_blocks.append(
            (cnt.reshape(n_tiles, 1, S_tile) > k_ids).astype(jnp.int32))  # (T, K, St)

        # Block-diag weights: b1 folded via the ones input row; an extra
        # "ones pass-through" hidden column carries b2 per scale, so cross-scale
        # output columns are exactly 0.
        H = w1.shape[1]
        top = jnp.concatenate([w1, jnp.zeros((cin, 1), w1.dtype)], axis=1)        # (cin, H+1)
        bias_row = jnp.concatenate([b1[None, :], jnp.ones((1, 1), w1.dtype)], axis=1)
        parts = [top, bias_row]
        if cin_pad > cin_aug:
            parts.append(jnp.zeros((cin_pad - cin_aug, H + 1), w1.dtype))
        w1_blks.append(jnp.concatenate(parts, axis=0))                            # (cin_pad, H+1)
        w2_blks.append(jnp.concatenate([w2, b2[None, :]], axis=0))                # (H+1, Cout)
        Ks.append(k)
        Couts.append(w2.shape[1])

    K_total = sum(Ks)
    cout_total = sum(Couts)
    out_w = max(128, ((cout_total + 127) // 128) * 128)

    feats = jnp.concatenate(feat_blocks, axis=1)                          # (T, K_tot, St, n_col)
    feats = feats.astype(jnp.bfloat16).reshape(n_tiles * K_total * S_tile, n_col)
    valid = jnp.concatenate(valid_blocks, axis=1).reshape(
        n_tiles * K_total * S_tile, 1)                                    # int32

    W1 = block_diag(*w1_blks).astype(jnp.bfloat16)                        # (n_col, Hc)
    W2 = block_diag(*w2_blks)                                             # (Hc, cout_total)
    if out_w > cout_total:
        W2 = jnp.concatenate([W2, jnp.zeros((W2.shape[0], out_w - cout_total),
                                            W2.dtype)], axis=1)
    W2 = W2.astype(jnp.bfloat16)

    out_pad = fused_pointconv_msg(feats, valid, W1, W2,
                                  S=S, S_tile=S_tile, K_total=K_total, out_w=out_w)
    # bf16 lane-dense kernel output; cast back to f32 at the module boundary.
    new_x = out_pad[:, :cout_total].astype(jnp.float32)

    if return_reference:  # pure-JAX f32 reference on the SAME grouping (test only)
        refs = []
        for (nbr_idx, cnt), (w1, b1, w2, b2), k in zip(groups, params, Ks):
            gx = x[nbr_idx]                                               # (S, K, C)
            gp = pos[nbr_idx] - ctr_pos[:, None, :]
            f = jnp.concatenate([gx, gp], axis=-1)
            h = jax.nn.relu(jnp.einsum('skc,ch->skh', f, w1) + b1)
            y = jax.nn.relu(jnp.einsum('skh,hd->skd', h, w2) + b2)
            vmask = (jnp.arange(k)[None, :] < cnt[:, None])[..., None]
            refs.append(jnp.max(jnp.where(vmask, y, 0.0), axis=1))
        return (new_x, ctr_pos, ctr_batch), jnp.concatenate(refs, axis=1)

    return new_x, ctr_pos, ctr_batch


def init_params(key, nn_list):
    """Each nn_list[i] = [C_in+3, hidden, C_out] -> Linear/ReLU/Linear/ReLU MLP."""
    params = []
    for dims in nn_list:
        cin, h, cout = dims
        k1, k2, k3, k4, key = jax.random.split(key, 5)
        w1 = jax.random.normal(k1, (cin, h), jnp.float32) * 0.1
        b1 = jax.random.normal(k3, (h,), jnp.float32) * 0.01
        w2 = jax.random.normal(k2, (h, cout), jnp.float32) * 0.1
        b2 = jax.random.normal(k4, (cout,), jnp.float32) * 0.01
        params.append((w1, b1, w2, b2))
    return params


if __name__ == "__main__":
    key = jax.random.PRNGKey(0)
    B, NB, C = 2, 128, 4             # 2 point clouds, 128 points each, 4 features
    N = B * NB
    kx, kp, kw = jax.random.split(key, 3)

    pos = jax.random.uniform(kp, (N, 3), jnp.float32)
    x = jax.random.normal(kx, (N, C), jnp.float32)
    batch = jnp.repeat(jnp.arange(B, dtype=jnp.int32), NB)

    sample_points = 64
    r_list = (0.5, 1.0)
    group_sizes = (8, 16)
    nn_list = [[C + 3, 16, 32], [C + 3, 16, 64]]
    params = init_params(kw, nn_list)

    # s_tile_cap=32 at this toy size to exercise a multi-step pipelined grid;
    # at production sizes leave the default (128).
    fwd = jax.jit(functools.partial(
        sa_module_msg_forward,
        sample_points=sample_points, r_list=r_list,
        group_sizes=group_sizes, batch_size=B,
        s_tile_cap=32, return_reference=True))

    (new_x, new_pos, new_batch), ref_x = fwd(params, x, pos, batch)
    jax.block_until_ready(new_x)

    assert new_x.shape == (sample_points, 32 + 64), new_x.shape
    assert new_pos.shape == (sample_points, 3), new_pos.shape
    assert new_batch.shape == (sample_points,), new_batch.shape
    assert bool(jnp.all(jnp.isfinite(new_x)))
    # bf16 feature/weight path vs f32 reference -> tolerance check, not exact.
    err = float(jnp.max(jnp.abs(new_x - ref_x)))
    assert bool(jnp.allclose(new_x, ref_x, rtol=1e-1, atol=3e-2)), err
    print("KERNEL_OK")
</pallas_src>

<mosaic_0001>
module attributes {stable_mosaic.version = 11 : i64} {
  func.func @kernel(%arg0: i32, %arg1: memref<768x16xbf16, #tpu.memory_space<vmem>>, %arg2: memref<768x1xi32, #tpu.memory_space<vmem>>, %arg3: memref<16x34xbf16, #tpu.memory_space<vmem>>, %arg4: memref<34x128xbf16, #tpu.memory_space<vmem>>, %arg5: memref<32x128xbf16, #tpu.memory_space<vmem>>) attributes {dimension_semantics = [#tpu.dimension_semantics<parallel>], iteration_bounds = array<i64: 2>, scalar_prefetch = 0 : i64, scratch_operands = 0 : i64, tpu.core_type = #tpu.core_type<tc>, window_params = [{transform_indices = @transform_0, window_bounds = array<i64: 768, 16>}, {transform_indices = @transform_1, window_bounds = array<i64: 768, 1>}, {pipeline_mode = #tpu.pipeline_mode<synchronous>, transform_indices = @transform_2, window_bounds = array<i64: 16, 34>}, {pipeline_mode = #tpu.pipeline_mode<synchronous>, transform_indices = @transform_3, window_bounds = array<i64: 34, 128>}, {transform_indices = @transform_4, window_bounds = array<i64: 32, 128>}]} {
    %c0 = arith.constant 0 : index
    %c0_0 = arith.constant 0 : index
    %0 = vector.load %arg3[%c0, %c0_0] : memref<16x34xbf16, #tpu.memory_space<vmem>>, vector<16x34xbf16>
    %c0_1 = arith.constant 0 : index
    %c0_2 = arith.constant 0 : index
    %1 = vector.load %arg4[%c0_1, %c0_2] : memref<34x128xbf16, #tpu.memory_space<vmem>>, vector<34x128xbf16>
    %cst = arith.constant 0.000000e+00 : f32
    %2 = vector.broadcast %cst : f32 to vector<32x128xf32>
    %c0_3 = arith.constant 0 : index
    %c0_4 = arith.constant 0 : index
    %3 = vector.load %arg1[%c0_3, %c0_4] : memref<768x16xbf16, #tpu.memory_space<vmem>>, vector<128x16xbf16>
    %cst_5 = arith.constant dense<0.000000e+00> : vector<128x34xf32>
    %4 = tpu.matmul %3, %0, %cst_5 {dimension_numbers = #tpu.dot_dimension_numbers<[1], [0], [0], [1], [0, 0, 1, 1], [], []>} : vector<128x16xbf16>, vector<16x34xbf16>, vector<128x34xf32> -> vector<128x34xf32>
    %cst_6 = arith.constant 0.000000e+00 : f32
    %5 = vector.broadcast %cst_6 : f32 to vector<128x34xf32>
    %6 = arith.maximumf %4, %5 : vector<128x34xf32>
    %7 = arith.truncf %6 : vector<128x34xf32> to vector<128x34xbf16>
    %cst_7 = arith.constant dense<0.000000e+00> : vector<128x128xf32>
    %8 = tpu.matmul %7, %1, %cst_7 {dimension_numbers = #tpu.dot_dimension_numbers<[1], [0], [0], [1], [0, 0, 1, 1], [], []>} : vector<128x34xbf16>, vector<34x128xbf16>, vector<128x128xf32> -> vector<128x128xf32>
    %cst_8 = arith.constant 0.000000e+00 : f32
    %9 = vector.broadcast %cst_8 : f32 to vector<128x128xf32>
    %10 = arith.maximumf %8, %9 : vector<128x128xf32>
    %c0_9 = arith.constant 0 : index
    %c0_10 = arith.constant 0 : index
    %11 = vector.load %arg2[%c0_9, %c0_10] : memref<768x1xi32, #tpu.memory_space<vmem>>, vector<128x1xi32>
    %c0_i32 = arith.constant 0 : i32
    %12 = vector.broadcast %c0_i32 : i32 to vector<128x1xi32>
    %13 = arith.cmpi sgt, %11, %12 : vector<128x1xi32>
    %cst_11 = arith.constant 0.000000e+00 : f32
    %14 = vector.shape_cast %13 : vector<128x1xi1> to vector<128x1xi1>
    %15 = vector.broadcast %14 : vector<128x1xi1> to vector<128x128xi1>
    %16 = vector.broadcast %cst_11 : f32 to vector<128x128xf32>
    %17 = arith.select %15, %10, %16 : vector<128x128xi1>, vector<128x128xf32>
    %18 = vector.extract_strided_slice %17 {offsets = [0, 0], sizes = [32, 128], strides = [1, 1]} : vector<128x128xf32> to vector<32x128xf32>
    %19 = arith.maximumf %2, %18 : vector<32x128xf32>
    %20 = vector.extract_strided_slice %17 {offsets = [32, 0], sizes = [32, 128], strides = [1, 1]} : vector<128x128xf32> to vector<32x128xf32>
    %21 = arith.maximumf %19, %20 : vector<32x128xf32>
    %22 = vector.extract_strided_slice %17 {offsets = [64, 0], sizes = [32, 128], strides = [1, 1]} : vector<128x128xf32> to vector<32x128xf32>
    %23 = arith.maximumf %21, %22 : vector<32x128xf32>
    %24 = vector.extract_strided_slice %17 {offsets = [96, 0], sizes = [32, 128], strides = [1, 1]} : vector<128x128xf32> to vector<32x128xf32>
    %25 = arith.maximumf %23, %24 : vector<32x128xf32>
    %c128 = arith.constant 128 : index
    %c0_12 = arith.constant 0 : index
    %26 = vector.load %arg1[%c128, %c0_12] : memref<768x16xbf16, #tpu.memory_space<vmem>>, vector<128x16xbf16>
    %cst_13 = arith.constant dense<0.000000e+00> : vector<128x34xf32>
    %27 = tpu.matmul %26, %0, %cst_13 {dimension_numbers = #tpu.dot_dimension_numbers<[1], [0], [0], [1], [0, 0, 1, 1], [], []>} : vector<128x16xbf16>, vector<16x34xbf16>, vector<128x34xf32> -> vector<128x34xf32>
    %cst_14 = arith.constant 0.000000e+00 : f32
    %28 = vector.broadcast %cst_14 : f32 to vector<128x34xf32>
    %29 = arith.maximumf %27, %28 : vector<128x34xf32>
    %30 = arith.truncf %29 : vector<128x34xf32> to vector<128x34xbf16>
    %cst_15 = arith.constant dense<0.000000e+00> : vector<128x128xf32>
    %31 = tpu.matmul %30, %1, %cst_15 {dimension_numbers = #tpu.dot_dimension_numbers<[1], [0], [0], [1], [0, 0, 1, 1], [], []>} : vector<128x34xbf16>, vector<34x128xbf16>, vector<128x128xf32> -> vector<128x128xf32>
    %cst_16 = arith.constant 0.000000e+00 : f32
    %32 = vector.broadcast %cst_16 : f32 to vector<128x128xf32>
    %33 = arith.maximumf %31, %32 : vector<128x128xf32>
    %c128_17 = arith.constant 128 : index
    %c0_18 = arith.constant 0 : index
    %34 = vector.load %arg2[%c128_17, %c0_18] : memref<768x1xi32, #tpu.memory_space<vmem>>, vector<128x1xi32>
    %c0_i32_19 = arith.constant 0 : i32
    %35 = vector.broadcast %c0_i32_19 : i32 to vector<128x1xi32>
    %36 = arith.cmpi sgt, %34, %35 : vector<128x1xi32>
    %cst_20 = arith.constant 0.000000e+00 : f32
    %37 = vector.shape_cast %36 : vector<128x1xi1> to vector<128x1xi1>
    %38 = vector.broadcast %37 : vector<128x1xi1> to vector<128x128xi1>
    %39 = vector.broadcast %cst_20 : f32 to vector<128x128xf32>
    %40 = arith.select %38, %33, %39 : vector<128x128xi1>, vector<128x128xf32>
    %41 = vector.extract_strided_slice %40 {offsets = [0, 0], sizes = [32, 128], strides = [1, 1]} : vector<128x128xf32> to vector<32x128xf32>
    %42 = arith.maximumf %25, %41 : vector<32x128xf32>
    %43 = vector.extract_strided_slice %40 {offsets = [32, 0], sizes = [32, 128], strides = [1, 1]} : vector<128x128xf32> to vector<32x128xf32>
    %44 = arith.maximumf %42, %43 : vector<32x128xf32>
    %45 = vector.extract_strided_slice %40 {offsets = [64, 0], sizes = [32, 128], strides = [1, 1]} : vector<128x128xf32> to vector<32x128xf32>
    %46 = arith.maximumf %44, %45 : vector<32x128xf32>
    %47 = vector.extract_strided_slice %40 {offsets = [96, 0], sizes = [32, 128], strides = [1, 1]} : vector<128x128xf32> to vector<32x128xf32>
    %48 = arith.maximumf %46, %47 : vector<32x128xf32>
    %c256 = arith.constant 256 : index
    %c0_21 = arith.constant 0 : index
    %49 = vector.load %arg1[%c256, %c0_21] : memref<768x16xbf16, #tpu.memory_space<vmem>>, vector<128x16xbf16>
    %cst_22 = arith.constant dense<0.000000e+00> : vector<128x34xf32>
    %50 = tpu.matmul %49, %0, %cst_22 {dimension_numbers = #tpu.dot_dimension_numbers<[1], [0], [0], [1], [0, 0, 1, 1], [], []>} : vector<128x16xbf16>, vector<16x34xbf16>, vector<128x34xf32> -> vector<128x34xf32>
    %cst_23 = arith.constant 0.000000e+00 : f32
    %51 = vector.broadcast %cst_23 : f32 to vector<128x34xf32>
    %52 = arith.maximumf %50, %51 : vector<128x34xf32>
    %53 = arith.truncf %52 : vector<128x34xf32> to vector<128x34xbf16>
    %cst_24 = arith.constant dense<0.000000e+00> : vector<128x128xf32>
    %54 = tpu.matmul %53, %1, %cst_24 {dimension_numbers = #tpu.dot_dimension_numbers<[1], [0], [0], [1], [0, 0, 1, 1], [], []>} : vector<128x34xbf16>, vector<34x128xbf16>, vector<128x128xf32> -> vector<128x128xf32>
    %cst_25 = arith.constant 0.000000e+00 : f32
    %55 = vector.broadcast %cst_25 : f32 to vector<128x128xf32>
    %56 = arith.maximumf %54, %55 : vector<128x128xf32>
    %c256_26 = arith.constant 256 : index
    %c0_27 = arith.constant 0 : index
    %57 = vector.load %arg2[%c256_26, %c0_27] : memref<768x1xi32, #tpu.memory_space<vmem>>, vector<128x1xi32>
    %c0_i32_28 = arith.constant 0 : i32
    %58 = vector.broadcast %c0_i32_28 : i32 to vector<128x1xi32>
    %59 = arith.cmpi sgt, %57, %58 : vector<128x1xi32>
    %cst_29 = arith.constant 0.000000e+00 : f32
    %60 = vector.shape_cast %59 : vector<128x1xi1> to vector<128x1xi1>
    %61 = vector.broadcast %60 : vector<128x1xi1> to vector<128x128xi1>
    %62 = vector.broadcast %cst_29 : f32 to vector<128x128xf32>
    %63 = arith.select %61, %56, %62 : vector<128x128xi1>, vector<128x128xf32>
    %64 = vector.extract_strided_slice %63 {offsets = [0, 0], sizes = [32, 128], strides = [1, 1]} : vector<128x128xf32> to vector<32x128xf32>
    %65 = arith.maximumf %48, %64 : vector<32x128xf32>
    %66 = vector.extract_strided_slice %63 {offsets = [32, 0], sizes = [32, 128], strides = [1, 1]} : vector<128x128xf32> to vector<32x128xf32>
    %67 = arith.maximumf %65, %66 : vector<32x128xf32>
    %68 = vector.extract_strided_slice %63 {offsets = [64, 0], sizes = [32, 128], strides = [1, 1]} : vector<128x128xf32> to vector<32x128xf32>
    %69 = arith.maximumf %67, %68 : vector<32x128xf32>
    %70 = vector.extract_strided_slice %63 {offsets = [96, 0], sizes = [32, 128], strides = [1, 1]} : vector<128x128xf32> to vector<32x128xf32>
    %71 = arith.maximumf %69, %70 : vector<32x128xf32>
    %c384 = arith.constant 384 : index
    %c0_30 = arith.constant 0 : index
    %72 = vector.load %arg1[%c384, %c0_30] : memref<768x16xbf16, #tpu.memory_space<vmem>>, vector<128x16xbf16>
    %cst_31 = arith.constant dense<0.000000e+00> : vector<128x34xf32>
    %73 = tpu.matmul %72, %0, %cst_31 {dimension_numbers = #tpu.dot_dimension_numbers<[1], [0], [0], [1], [0, 0, 1, 1], [], []>} : vector<128x16xbf16>, vector<16x34xbf16>, vector<128x34xf32> -> vector<128x34xf32>
    %cst_32 = arith.constant 0.000000e+00 : f32
    %74 = vector.broadcast %cst_32 : f32 to vector<128x34xf32>
    %75 = arith.maximumf %73, %74 : vector<128x34xf32>
    %76 = arith.truncf %75 : vector<128x34xf32> to vector<128x34xbf16>
    %cst_33 = arith.constant dense<0.000000e+00> : vector<128x128xf32>
    %77 = tpu.matmul %76, %1, %cst_33 {dimension_numbers = #tpu.dot_dimension_numbers<[1], [0], [0], [1], [0, 0, 1, 1], [], []>} : vector<128x34xbf16>, vector<34x128xbf16>, vector<128x128xf32> -> vector<128x128xf32>
    %cst_34 = arith.constant 0.000000e+00 : f32
    %78 = vector.broadcast %cst_34 : f32 to vector<128x128xf32>
    %79 = arith.maximumf %77, %78 : vector<128x128xf32>
    %c384_35 = arith.constant 384 : index
    %c0_36 = arith.constant 0 : index
    %80 = vector.load %arg2[%c384_35, %c0_36] : memref<768x1xi32, #tpu.memory_space<vmem>>, vector<128x1xi32>
    %c0_i32_37 = arith.constant 0 : i32
    %81 = vector.broadcast %c0_i32_37 : i32 to vector<128x1xi32>
    %82 = arith.cmpi sgt, %80, %81 : vector<128x1xi32>
    %cst_38 = arith.constant 0.000000e+00 : f32
    %83 = vector.shape_cast %82 : vector<128x1xi1> to vector<128x1xi1>
    %84 = vector.broadcast %83 : vector<128x1xi1> to vector<128x128xi1>
    %85 = vector.broadcast %cst_38 : f32 to vector<128x128xf32>
    %86 = arith.select %84, %79, %85 : vector<128x128xi1>, vector<128x128xf32>
    %87 = vector.extract_strided_slice %86 {offsets = [0, 0], sizes = [32, 128], strides = [1, 1]} : vector<128x128xf32> to vector<32x128xf32>
    %88 = arith.maximumf %71, %87 : vector<32x128xf32>
    %89 = vector.extract_strided_slice %86 {offsets = [32, 0], sizes = [32, 128], strides = [1, 1]} : vector<128x128xf32> to vector<32x128xf32>
    %90 = arith.maximumf %88, %89 : vector<32x128xf32>
    %91 = vector.extract_strided_slice %86 {offsets = [64, 0], sizes = [32, 128], strides = [1, 1]} : vector<128x128xf32> to vector<32x128xf32>
    %92 = arith.maximumf %90, %91 : vector<32x128xf32>
    %93 = vector.extract_strided_slice %86 {offsets = [96, 0], sizes = [32, 128], strides = [1, 1]} : vector<128x128xf32> to vector<32x128xf32>
    %94 = arith.maximumf %92, %93 : vector<32x128xf32>
    %c512 = arith.constant 512 : index
    %c0_39 = arith.constant 0 : index
    %95 = vector.load %arg1[%c512, %c0_39] : memref<768x16xbf16, #tpu.memory_space<vmem>>, vector<128x16xbf16>
    %cst_40 = arith.constant dense<0.000000e+00> : vector<128x34xf32>
    %96 = tpu.matmul %95, %0, %cst_40 {dimension_numbers = #tpu.dot_dimension_numbers<[1], [0], [0], [1], [0, 0, 1, 1], [], []>} : vector<128x16xbf16>, vector<16x34xbf16>, vector<128x34xf32> -> vector<128x34xf32>
    %cst_41 = arith.constant 0.000000e+00 : f32
    %97 = vector.broadcast %cst_41 : f32 to vector<128x34xf32>
    %98 = arith.maximumf %96, %97 : vector<128x34xf32>
    %99 = arith.truncf %98 : vector<128x34xf32> to vector<128x34xbf16>
    %cst_42 = arith.constant dense<0.000000e+00> : vector<128x128xf32>
    %100 = tpu.matmul %99, %1, %cst_42 {dimension_numbers = #tpu.dot_dimension_numbers<[1], [0], [0], [1], [0, 0, 1, 1], [], []>} : vector<128x34xbf16>, vector<34x128xbf16>, vector<128x128xf32> -> vector<128x128xf32>
    %cst_43 = arith.constant 0.000000e+00 : f32
    %101 = vector.broadcast %cst_43 : f32 to vector<128x128xf32>
    %102 = arith.maximumf %100, %101 : vector<128x128xf32>
    %c512_44 = arith.constant 512 : index
    %c0_45 = arith.constant 0 : index
    %103 = vector.load %arg2[%c512_44, %c0_45] : memref<768x1xi32, #tpu.memory_space<vmem>>, vector<128x1xi32>
    %c0_i32_46 = arith.constant 0 : i32
    %104 = vector.broadcast %c0_i32_46 : i32 to vector<128x1xi32>
    %105 = arith.cmpi sgt, %103, %104 : vector<128x1xi32>
    %cst_47 = arith.constant 0.000000e+00 : f32
    %106 = vector.shape_cast %105 : vector<128x1xi1> to vector<128x1xi1>
    %107 = vector.broadcast %106 : vector<128x1xi1> to vector<128x128xi1>
    %108 = vector.broadcast %cst_47 : f32 to vector<128x128xf32>
    %109 = arith.select %107, %102, %108 : vector<128x128xi1>, vector<128x128xf32>
    %110 = vector.extract_strided_slice %109 {offsets = [0, 0], sizes = [32, 128], strides = [1, 1]} : vector<128x128xf32> to vector<32x128xf32>
    %111 = arith.maximumf %94, %110 : vector<32x128xf32>
    %112 = vector.extract_strided_slice %109 {offsets = [32, 0], sizes = [32, 128], strides = [1, 1]} : vector<128x128xf32> to vector<32x128xf32>
    %113 = arith.maximumf %111, %112 : vector<32x128xf32>
    %114 = vector.extract_strided_slice %109 {offsets = [64, 0], sizes = [32, 128], strides = [1, 1]} : vector<128x128xf32> to vector<32x128xf32>
    %115 = arith.maximumf %113, %114 : vector<32x128xf32>
    %116 = vector.extract_strided_slice %109 {offsets = [96, 0], sizes = [32, 128], strides = [1, 1]} : vector<128x128xf32> to vector<32x128xf32>
    %117 = arith.maximumf %115, %116 : vector<32x128xf32>
    %c640 = arith.constant 640 : index
    %c0_48 = arith.constant 0 : index
    %118 = vector.load %arg1[%c640, %c0_48] : memref<768x16xbf16, #tpu.memory_space<vmem>>, vector<128x16xbf16>
    %cst_49 = arith.constant dense<0.000000e+00> : vector<128x34xf32>
    %119 = tpu.matmul %118, %0, %cst_49 {dimension_numbers = #tpu.dot_dimension_numbers<[1], [0], [0], [1], [0, 0, 1, 1], [], []>} : vector<128x16xbf16>, vector<16x34xbf16>, vector<128x34xf32> -> vector<128x34xf32>
    %cst_50 = arith.constant 0.000000e+00 : f32
    %120 = vector.broadcast %cst_50 : f32 to vector<128x34xf32>
    %121 = arith.maximumf %119, %120 : vector<128x34xf32>
    %122 = arith.truncf %121 : vector<128x34xf32> to vector<128x34xbf16>
    %cst_51 = arith.constant dense<0.000000e+00> : vector<128x128xf32>
    %123 = tpu.matmul %122, %1, %cst_51 {dimension_numbers = #tpu.dot_dimension_numbers<[1], [0], [0], [1], [0, 0, 1, 1], [], []>} : vector<128x34xbf16>, vector<34x128xbf16>, vector<128x128xf32> -> vector<128x128xf32>
    %cst_52 = arith.constant 0.000000e+00 : f32
    %124 = vector.broadcast %cst_52 : f32 to vector<128x128xf32>
    %125 = arith.maximumf %123, %124 : vector<128x128xf32>
    %c640_53 = arith.constant 640 : index
    %c0_54 = arith.constant 0 : index
    %126 = vector.load %arg2[%c640_53, %c0_54] : memref<768x1xi32, #tpu.memory_space<vmem>>, vector<128x1xi32>
    %c0_i32_55 = arith.constant 0 : i32
    %127 = vector.broadcast %c0_i32_55 : i32 to vector<128x1xi32>
    %128 = arith.cmpi sgt, %126, %127 : vector<128x1xi32>
    %cst_56 = arith.constant 0.000000e+00 : f32
    %129 = vector.shape_cast %128 : vector<128x1xi1> to vector<128x1xi1>
    %130 = vector.broadcast %129 : vector<128x1xi1> to vector<128x128xi1>
    %131 = vector.broadcast %cst_56 : f32 to vector<128x128xf32>
    %132 = arith.select %130, %125, %131 : vector<128x128xi1>, vector<128x128xf32>
    %133 = vector.extract_strided_slice %132 {offsets = [0, 0], sizes = [32, 128], strides = [1, 1]} : vector<128x128xf32> to vector<32x128xf32>
    %134 = arith.maximumf %117, %133 : vector<32x128xf32>
    %135 = vector.extract_strided_slice %132 {offsets = [32, 0], sizes = [32, 128], strides = [1, 1]} : vector<128x128xf32> to vector<32x128xf32>
    %136 = arith.maximumf %134, %135 : vector<32x128xf32>
    %137 = vector.extract_strided_slice %132 {offsets = [64, 0], sizes = [32, 128], strides = [1, 1]} : vector<128x128xf32> to vector<32x128xf32>
    %138 = arith.maximumf %136, %137 : vector<32x128xf32>
    %139 = vector.extract_strided_slice %132 {offsets = [96, 0], sizes = [32, 128], strides = [1, 1]} : vector<128x128xf32> to vector<32x128xf32>
    %140 = arith.maximumf %138, %139 : vector<32x128xf32>
    %141 = arith.truncf %140 : vector<32x128xf32> to vector<32x128xbf16>
    %c0_57 = arith.constant 0 : index
    %c0_58 = arith.constant 0 : index
    %142 = vector.load %arg5[%c0_57, %c0_58] : memref<32x128xbf16, #tpu.memory_space<vmem>>, vector<32x128xbf16>
    tpu.vector_store %arg5[%c0_57, %c0_58], %141 {strides = array<i32>} : memref<32x128xbf16, #tpu.memory_space<vmem>>, vector<32x128xbf16>,
    return
  }
  func.func @transform_0(%arg0: i32) -> (i32, i32) {
    %c0_i32 = arith.constant 0 : i32
    %c0_i32_0 = arith.constant 0 : i32
    return %arg0, %c0_i32 : i32, i32
  }
  func.func @transform_1(%arg0: i32) -> (i32, i32) {
    %c0_i32 = arith.constant 0 : i32
    %c0_i32_0 = arith.constant 0 : i32
    return %arg0, %c0_i32 : i32, i32
  }
  func.func @transform_2(%arg0: i32) -> (i32, i32) {
    %c0_i32 = arith.constant 0 : i32
    %c0_i32_0 = arith.constant 0 : i32
    %c0_i32_1 = arith.constant 0 : i32
    return %c0_i32, %c0_i32_0 : i32, i32
  }
  func.func @transform_3(%arg0: i32) -> (i32, i32) {
    %c0_i32 = arith.constant 0 : i32
    %c0_i32_0 = arith.constant 0 : i32
    %c0_i32_1 = arith.constant 0 : i32
    return %c0_i32, %c0_i32_0 : i32, i32
  }
  func.func @transform_4(%arg0: i32) -> (i32, i32) {
    %c0_i32 = arith.constant 0 : i32
    %c0_i32_0 = arith.constant 0 : i32
    return %arg0, %c0_i32 : i32, i32
  }
}

</mosaic_0001>

<llo_original>
// kernel: custom-call.2
$region0: #{custom-call.2}
  %s0 = inlined_call_operand.vmem [shape: f32[2,128], index: 0, kind: output, shape index: {}]

// kernel: gt.32
$region0: #{gt.32}
  %s0 = inlined_call_operand.vmem [shape: s32[64], index: 0, kind: input, shape index: {}]
  %s1 = inlined_call_operand.vmem [shape: s32[2,32], index: 1, kind: output, shape index: {}]
  $region1: #{gt.32} parent=0
    #allocation0 [shape = 'u8[4096]{0}', space=vmem, size = 0x1000, scoped, tag = 'scoped mem for output reshape']
    #allocation1 [shape = 'u8[4096]{0}', space=vmem, size = 0x1000, scoped, tag = 'scoped mem for input reshape']
    %s3 = sshll.u32 1, 1
    %s4 = ssub.s32 %s3, 1
    %v5 = vld [vmem:[%s0] sm:%s4]
    %6 = vst [vmem:[#allocation1] sm:%s4] %v5
    %v7 = vld [vmem:[#allocation1] sm:$0x1]
    %vm8 = vcmask 261120
    %9 = vst.msk [vmem:[#allocation0] sm:$0x1] %vm8, %v7
    %v10 = vld [vmem:[#allocation1] sm:$0x1]
    %11 = vrot.lane.b32.xlu0 %v10, 96
    %v12 = vpop.permute.xlu0 %11
    %vm13 = vcmask 261120
    %s14 = scalar_lea.vmem [#allocation0], 1
    %15 = vst.msk [vmem:[%s14] sm:$0x1] %vm13, %v12
    %s17 = sshll.u32 1, 2
    %s18 = ssub.s32 %s17, 1
    %v20 = vld [vmem:[#allocation0] sm:%s18]
    %s21 = sshll.u32 1, 2
    %s22 = ssub.s32 %s21, 1
    %23 = vst [vmem:[%s1] sm:%s22] %v20

// kernel: sa_module_msg_forward.1
$region0: #{sa_module_msg_forward.1}
  #allocation0 [shape = 'u32[]', space=smem, size = 0x4, offset = 0x4, fixed_abs, tag = 'smem constant byte address 0x4 - core index']
  #allocation1 [shape = 'u32[144,128]{1,0:T(1,128)}', space=vmem, size = 0x12000, scoped, tag = 'internal scratch']
  %s0 = inlined_call_operand.vmem [shape: bf16[1536,16], index: 0, kind: input, shape index: {}]
  %s1 = inlined_call_operand.vmem [shape: s32[1536,1], index: 1, kind: input, shape index: {}]
  %s2 = inlined_call_operand.vmem [shape: bf16[16,34], index: 2, kind: input, shape index: {}]
  %s3 = inlined_call_operand.vmem [shape: bf16[34,128], index: 3, kind: input, shape index: {}]
  %s4 = inlined_call_operand.vmem [shape: bf16[64,128], index: 4, kind: output, shape index: {}]
  %s5 = sld [smem:[#allocation0]]
  $region49: #{sa_module_msg_forward.1} parent=0
    _
  %s7 = ssub.s32 1, %s5
  %s8 = scalar_select 0, %s7, %s5
  loop: start=0, step=1, limit=4
  $region2: #{sa_module_msg_forward.1} parent=0 // loop_pre_header
    _
  $region3: #{sa_module_msg_forward.1} parent=0 // loop_header
    %s10 = sphi 0, %s14
    %p11 = scmp.ge.s32.totalorder %s10, 4
    %s20 = sphi 0, %s22
    %s23 = sphi 0, %s20
    %s24 = sphi 0, %s23
    %s40 = sphi 0, %s24
    %s46 = sphi 0, %s48
    %s49 = sphi 0, %s46
    %s50 = sphi 0, %s49
    %s66 = sphi 0, %s50
    %s70 = sphi 0, %s70
    %s72 = sphi 0, %s70
    %s73 = sphi 0, %s72
    %s87 = sphi 0, %s73
    %s91 = sphi 0, %s91
    %s93 = sphi 0, %s91
    %s94 = sphi 0, %s93
    %s108 = sphi 0, %s94
    %s114 = sphi 0, %s116
    %s117 = sphi 0, %s114
    %s118 = sphi 0, %s117
    %s134 = sphi 0, %s118
  $region4: #{sa_module_msg_forward.1} parent=0 // loop_header_branch
    %13 = sbr.rel (%p11) target = $region8
  $region5: #{sa_module_msg_forward.1} parent=0 // loop_body
    %s15 = ssub.s32 %s10, 1
    %s16 = ssub.s32 %s10, 2
    %s17 = sadd.s32 %s10, 1
    %s18 = ssub.s32 %s10, %s17
    %p19 = scmp.eq.s32.totalorder %s18, 0
    %s21 = sadd.s32 %s20, 1
    %s22 = scalar_select %p19, %s20, %s21
    %p25 = pneg %p19
    %p26 = scmp.eq.s32.totalorder %s10, 1
    %p27 = por %p25, %p26
    %p28 = scmp.ne.s32.totalorder %s20, %s23
    %p29 = scmp.eq.s32.totalorder %s10, 0
    %p30 = por %p28, %p29
    %p31 = scmp.ne.s32.totalorder %s20, %s23
    %p32 = scmp.eq.s32.totalorder %s15, 1
    %p33 = por %p31, %p32
    %p34 = scmp.ne.s32.totalorder %s23, %s24
    %p35 = scmp.eq.s32.totalorder %s15, 0
    %p36 = por %p34, %p35
    %p37 = scmp.ne.s32.totalorder %s23, %s24
    %p38 = scmp.eq.s32.totalorder %s16, 1
    %p39 = por %p37, %p38
    %p41 = scmp.ne.s32.totalorder %s24, %s40
    %p42 = scmp.eq.s32.totalorder %s16, 0
    %p43 = por %p41, %p42
    %s44 = ssub.s32 %s10, %s17
    %p45 = scmp.eq.s32.totalorder %s44, 0
    %s47 = sadd.s32 %s46, 1
    %s48 = scalar_select %p45, %s46, %s47
    %p51 = pneg %p45
    %p52 = scmp.eq.s32.totalorder %s10, 1
    %p53 = por %p51, %p52
    %p54 = scmp.ne.s32.totalorder %s46, %s49
    %p55 = scmp.eq.s32.totalorder %s10, 0
    %p56 = por %p54, %p55
    %p57 = scmp.ne.s32.totalorder %s46, %s49
    %p58 = scmp.eq.s32.totalorder %s15, 1
    %p59 = por %p57, %p58
    %p60 = scmp.ne.s32.totalorder %s49, %s50
    %p61 = scmp.eq.s32.totalorder %s15, 0
    %p62 = por %p60, %p61
    %p63 = scmp.ne.s32.totalorder %s49, %s50
    %p64 = scmp.eq.s32.totalorder %s16, 1
    %p65 = por %p63, %p64
    %p67 = scmp.ne.s32.totalorder %s50, %s66
    %p68 = scmp.eq.s32.totalorder %s16, 0
    %p69 = por %p67, %p68
    %s71 = sadd.s32 %s70, 1
    %p74 = scmp.eq.s32.totalorder %s10, 1
    %p75 = scmp.ne.s32.totalorder %s70, %s72
    %p76 = scmp.eq.s32.totalorder %s10, 0
    %p77 = por %p75, %p76
    %p78 = scmp.ne.s32.totalorder %s70, %s72
    %p79 = scmp.eq.s32.totalorder %s15, 1
    %p80 = por %p78, %p79
    %p81 = scmp.ne.s32.totalorder %s72, %s73
    %p82 = scmp.eq.s32.totalorder %s15, 0
    %p83 = por %p81, %p82
    %p84 = scmp.ne.s32.totalorder %s72, %s73
    %p85 = scmp.eq.s32.totalorder %s16, 1
    %p86 = por %p84, %p85
    %p88 = scmp.ne.s32.totalorder %s73, %s87
    %p89 = scmp.eq.s32.totalorder %s16, 0
    %p90 = por %p88, %p89
    %s92 = sadd.s32 %s91, 1
    %p95 = scmp.eq.s32.totalorder %s10, 1
    %p96 = scmp.ne.s32.totalorder %s91, %s93
    %p97 = scmp.eq.s32.totalorder %s10, 0
    %p98 = por %p96, %p97
    %p99 = scmp.ne.s32.totalorder %s91, %s93
    %p100 = scmp.eq.s32.totalorder %s15, 1
    %p101 = por %p99, %p100
    %p102 = scmp.ne.s32.totalorder %s93, %s94
    %p103 = scmp.eq.s32.totalorder %s15, 0
    %p104 = por %p102, %p103
    %p105 = scmp.ne.s32.totalorder %s93, %s94
    %p106 = scmp.eq.s32.totalorder %s16, 1
    %p107 = por %p105, %p106
    %p109 = scmp.ne.s32.totalorder %s94, %s108
    %p110 = scmp.eq.s32.totalorder %s16, 0
    %p111 = por %p109, %p110
    %s112 = ssub.s32 %s10, %s17
    %p113 = scmp.eq.s32.totalorder %s112, 0
    %s115 = sadd.s32 %s114, 1
    %s116 = scalar_select %p113, %s114, %s115
    %p119 = pneg %p113
    %p120 = scmp.eq.s32.totalorder %s10, 1
    %p121 = por %p119, %p120
    %p122 = scmp.ne.s32.totalorder %s114, %s117
    %p123 = scmp.eq.s32.totalorder %s10, 0
    %p124 = por %p122, %p123
    %p125 = scmp.ne.s32.totalorder %s114, %s117
    %p126 = scmp.eq.s32.totalorder %s15, 1
    %p127 = por %p125, %p126
    %p128 = scmp.ne.s32.totalorder %s117, %s118
    %p129 = scmp.eq.s32.totalorder %s15, 0
    %p130 = por %p128, %p129
    %p131 = scmp.ne.s32.totalorder %s117, %s118
    %p132 = scmp.eq.s32.totalorder %s16, 1
    %p133 = por %p131, %p132
    %p135 = scmp.ne.s32.totalorder %s118, %s134
    %p136 = scmp.eq.s32.totalorder %s16, 0
    %p137 = por %p135, %p136
    %p138 = scmp.le.s32.totalorder 1, %s10
    %p139 = scmp.lt.s32.totalorder %s10, 3
    %p140 = pnand %p138, %p139
    %p141 = pneg %p140
    // Predicated region
    $region9: #{sa_module_msg_forward.1} parent=5 // pred_check
      _
    $region10: #{sa_module_msg_forward.1} parent=5 // pred_check_branch
      %143 = sbr.rel (%p140) target = $region12
    $region11: #{sa_module_msg_forward.1} parent=5 // pred_region
      %s144 = ssub.s32 %s10, 1
      // Predicated region
      $region13: #{sa_module_msg_forward.1} parent=11 // pred_check
        %p145 = pneg %p83
      $region14: #{sa_module_msg_forward.1} parent=11 // pred_check_branch
        %147 = sbr.rel (%p145) target = $region16
      $region15: #{sa_module_msg_forward.1} parent=11 // pred_region
        _
      $region16: #{sa_module_msg_forward.1} parent=11 // pred_fallthru
        _
      // Predicated region
      $region17: #{sa_module_msg_forward.1} parent=11 // pred_check
        %p148 = pneg %p104
      $region18: #{sa_module_msg_forward.1} parent=11 // pred_check_branch
        %150 = sbr.rel (%p148) target = $region20
      $region19: #{sa_module_msg_forward.1} parent=11 // pred_region
        _
      $region20: #{sa_module_msg_forward.1} parent=11 // pred_fallthru
        _
    $region12: #{sa_module_msg_forward.1} parent=5 // pred_fallthru
      _
    %p151 = scmp.lt.s32.totalorder %s10, 2
    // Predicated region
    $region21: #{sa_module_msg_forward.1} parent=5 // pred_check
      %p152 = pneg %p151
    $region22: #{sa_module_msg_forward.1} parent=5 // pred_check_branch
      %154 = sbr.rel (%p152) target = $region24
    $region23: #{sa_module_msg_forward.1} parent=5 // pred_region
      // Predicated region
      $region25: #{sa_module_msg_forward.1} parent=23 // pred_check
        %p155 = pneg %p30
      $region26: #{sa_module_msg_forward.1} parent=23 // pred_check_branch
        %157 = sbr.rel (%p155) target = $region28
      $region27: #{sa_module_msg_forward.1} parent=23 // pred_region
        %s158 = smul.u32 96, %s10
        %p159 = scmp.lt.s32.totalorder %s158, 191
        %s160 = scalar_select %p159, %s158, 191
        %s161 = smul.addr %s160, 4
        %s162 = scalar_lea.vmem %s0, %s161
        %s163 = smul.u32 96, %s10
      $region28: #{sa_module_msg_forward.1} parent=23 // pred_fallthru
        _
      // Predicated region
      $region29: #{sa_module_msg_forward.1} parent=23 // pred_check
        %p164 = pneg %p56
      $region30: #{sa_module_msg_forward.1} parent=23 // pred_check_branch
        %166 = sbr.rel (%p164) target = $region32
      $region31: #{sa_module_msg_forward.1} parent=23 // pred_region
        %s167 = smul.u32 96, %s10
        %p168 = scmp.lt.s32.totalorder %s167, 191
        %s169 = scalar_select %p168, %s167, 191
        %s170 = smul.addr %s169, 8
        %s171 = scalar_lea.vmem %s1, %s170
        %s172 = smul.u32 96, %s10
      $region32: #{sa_module_msg_forward.1} parent=23 // pred_fallthru
        _
    $region24: #{sa_module_msg_forward.1} parent=5 // pred_fallthru
      _
    %p173 = scmp.le.s32.totalorder 1, %s10
    %p174 = scmp.lt.s32.totalorder %s10, 3
    %p175 = pnand %p173, %p174
    %p176 = pneg %p175
    // Predicated region
    $region33: #{sa_module_msg_forward.1} parent=5 // pred_check
      _
    $region34: #{sa_module_msg_forward.1} parent=5 // pred_check_branch
      %178 = sbr.rel (%p175) target = $region36
    $region35: #{sa_module_msg_forward.1} parent=5 // pred_region
      %s179 = ssub.s32 %s10, 1
      %s180 = smul.u32 96, %s15
      %p181 = scmp.lt.s32.totalorder %s180, 191
      %s182 = scalar_select %p181, %s180, 191
      %s183 = smul.addr %s182, 4
      %s184 = scalar_lea.vmem %s0, %s183
      %p185 = pneg %p36
      %p186 = pneg %p33
      %s187 = smul.u32 96, %s15
      %p188 = scmp.lt.s32.totalorder %s187, 191
      %s189 = scalar_select %p188, %s187, 191
      %s190 = smul.addr %s189, 8
      %s191 = scalar_lea.vmem %s1, %s190
      %p192 = pneg %p62
      %p193 = pneg %p59
      %p194 = pneg %p83
      %p195 = pneg %p80
      %p196 = pneg %p104
      %p197 = pneg %p101
      %p198 = pneg %p130
      %p199 = pneg %p127
      %s200 = smul.u32 4, %s15
      %p201 = scmp.lt.s32.totalorder %s200, 7
      %s202 = scalar_select %p201, %s200, 7
      %s203 = smul.addr %s202, 4
      %s204 = scalar_lea.vmem %s4, %s203
      %s205 = smul.u32 96, %s15
      %p206 = scmp.lt.s32.totalorder %s205, 191
      %s207 = scalar_select %p206, %s205, 191
      %s208 = smul.addr %s207, 4
      %s209 = scalar_lea.vmem %s0, %s208
      %s210 = smul.u32 96, %s15
      %s211 = smul.u32 96, %s15
      %p212 = scmp.lt.s32.totalorder %s211, 191
      %s213 = scalar_select %p212, %s211, 191
      %s214 = smul.addr %s213, 8
      %s215 = scalar_lea.vmem %s1, %s214
      %s216 = smul.u32 96, %s15
      %s217 = smul.u32 4, %s15
      %p218 = scmp.lt.s32.totalorder %s217, 7
      %s219 = scalar_select %p218, %s217, 7
      %s220 = smul.addr %s219, 4
      %s221 = scalar_lea.vmem %s4, %s220
      %s222 = smul.u32 4, %s15
      %v224 = vld [vmem:[%s2] sm:$0xf]
      %v225 = vld [vmem:[%s2 + $0x4] sm:$0xf]
      %v226 = vld [vmem:[%s3] sm:$0xf]
      %v227 = vld [vmem:[%s3 + $0x4] sm:$0xf]
      %v228 = vld [vmem:[%s3 + $0x8] sm:$0xf]
      %v229 = vld [vmem:[%s3 + $0xc] sm:$0xf]
      %v230 = vld [vmem:[%s3 + $0x10] sm:$0x1]
      %v231 = vld [vmem:[%s209] sm:$0xf]
      %v232 = vld [vmem:[%s209 + $0x4] sm:$0xf]
      %v233 = vld [vmem:[%s209 + $0x8] sm:$0xf]
      %v234 = vld [vmem:[%s209 + $0xc] sm:$0xf]
      %v235 = vld [vmem:[%s209 + $0x10] sm:$0xf]
      %v236 = vld [vmem:[%s209 + $0x14] sm:$0xf]
      %v237 = vld [vmem:[%s209 + $0x18] sm:$0xf]
      %v238 = vld [vmem:[%s209 + $0x1c] sm:$0xf]
      %v239 = vld [vmem:[%s209 + $0x20] sm:$0xf]
      %v240 = vld [vmem:[%s209 + $0x24] sm:$0xf]
      %v241 = vld [vmem:[%s209 + $0x28] sm:$0xf]
      %v242 = vld [vmem:[%s209 + $0x2c] sm:$0xf]
      %v243 = vld [vmem:[%s209 + $0x30] sm:$0xf]
      %v244 = vld [vmem:[%s209 + $0x34] sm:$0xf]
      %v245 = vld [vmem:[%s209 + $0x38] sm:$0xf]
      %v246 = vld [vmem:[%s209 + $0x3c] sm:$0xf]
      %v263 = vunpack.c.l.b16 %v231
      %v264 = vunpack.c.l.b16 %v232
      %v265 = vunpack.c.l.b16 %v233
      %v266 = vunpack.c.l.b16 %v234
      %v267 = vunpack.c.l.b16 %v235
      %v268 = vunpack.c.l.b16 %v236
      %v269 = vunpack.c.l.b16 %v237
      %v270 = vunpack.c.l.b16 %v238
      %v271 = vunpack.c.l.b16 %v239
      %v272 = vunpack.c.l.b16 %v240
      %v273 = vunpack.c.l.b16 %v241
      %v274 = vunpack.c.l.b16 %v242
      %v275 = vunpack.c.l.b16 %v243
      %v276 = vunpack.c.l.b16 %v244
      %v277 = vunpack.c.l.b16 %v245
      %v278 = vunpack.c.l.b16 %v246
      %v279 = vpack.c.b16 %v264, %v263
      %v280 = vpack.c.b16 %v266, %v265
      %v281 = vpack.c.b16 %v268, %v267
      %v282 = vpack.c.b16 %v270, %v269
      %v283 = vpack.c.b16 %v272, %v271
      %v284 = vpack.c.b16 %v274, %v273
      %v285 = vpack.c.b16 %v276, %v275
      %v286 = vpack.c.b16 %v278, %v277
      %v289 = vunpack.c.l.b16 %v224
      %v290 = vunpack.c.l.b16 %v225
      %v291 = vpack.c.b16 %v290, %v289
      %vm293 = vcmask 130048
      %v295 = vsel %vm293, %v279, 0
      %v298 = vsel %vm293, %v280, 0
      %v301 = vsel %vm293, %v281, 0
      %v304 = vsel %vm293, %v282, 0
      %v307 = vsel %vm293, %v283, 0
      %v310 = vsel %vm293, %v284, 0
      %v313 = vsel %vm293, %v285, 0
      %v316 = vsel %vm293, %v286, 0
      %318 = vmatprep.subr.bf16.mxu0 0
      %319 = vmatpush1.bf16.msra.mxu0 0
      %320 = vmatprep.subr.bf16.mxu0 0
      %321 = vmatpush1.bf16.msra.mxu0 0
      %322 = vmatprep.subr.bf16.mxu0 0
      %323 = vmatpush1.bf16.msra.mxu0 0
      %324 = vmatprep.subr.bf16.mxu0 0
      %325 = vmatpush1.bf16.msra.mxu0 0
      %326 = vmatprep.subr.bf16.mxu0 0
      %327 = vmatpush1.bf16.msra.mxu0 0
      %328 = vmatprep.subr.bf16.mxu0 0
      %329 = vmatpush1.bf16.msra.mxu0 0
      %330 = vmatprep.subr.bf16.mxu0 0
      %331 = vmatpush1.bf16.msra.mxu0 0
      %332 = vmatprep.subr.bf16.mxu0 0
      %333 = vmatpush1.bf16.msra.mxu0 %v291
      %334 = vmatprep.subr.bf16.mxu0 0
      %335 = vmatpush2.bf16.msra.mxu0 0
      %336 = vmatprep.subr.bf16.mxu0 0
      %337 = vmatpush2.bf16.msra.mxu0 0
      %338 = vmatprep.subr.bf16.mxu0 0
      %339 = vmatpush2.bf16.msra.mxu0 0
      %340 = vmatprep.subr.bf16.mxu0 0
      %341 = vmatpush2.bf16.msra.mxu0 0
      %342 = vmatprep.subr.bf16.mxu0 0
      %343 = vmatpush2.bf16.msra.mxu0 0
      %344 = vmatprep.subr.bf16.mxu0 0
      %345 = vmatpush2.bf16.msra.mxu0 0
      %346 = vmatprep.subr.bf16.mxu0 0
      %347 = vmatpush2.bf16.msra.mxu0 0
      %348 = vmatprep.subr.bf16.mxu0 0
      %349 = vmatpush2.bf16.msra.mxu0 0
      %350 = vmatprep.mubr.bf16.mxu0 0
      %351 = vmatmul.mubr.bf16.gmra.mxu0 %v295
      %v352 = vpop.f32.mrf.mxu0
      %v353 = vadd.f32 0.0, %v352
      %v354 = vpop.f32.mrf.mxu0
      %v355 = vpop.f32.mrf.mxu0
      %v356 = vadd.f32 0.0, %v355
      %v357 = vpop.f32.mrf.mxu0
      %358 = vmatprep.mubr.bf16.mxu0 0
      %359 = vmatmul.mubr.bf16.gmra.mxu0 %v298
      %v360 = vpop.f32.mrf.mxu0
      %v361 = vadd.f32 0.0, %v360
      %v362 = vpop.f32.mrf.mxu0
      %v363 = vpop.f32.mrf.mxu0
      %v364 = vadd.f32 0.0, %v363
      %v365 = vpop.f32.mrf.mxu0
      %366 = vmatprep.mubr.bf16.mxu0 0
      %367 = vmatmul.mubr.bf16.gmra.mxu0 %v301
      %v368 = vpop.f32.mrf.mxu0
      %v369 = vadd.f32 0.0, %v368
      %v370 = vpop.f32.mrf.mxu0
      %v371 = vpop.f32.mrf.mxu0
      %v372 = vadd.f32 0.0, %v371
      %v373 = vpop.f32.mrf.mxu0
      %374 = vmatprep.mubr.bf16.mxu0 0
      %375 = vmatmul.mubr.bf16.gmra.mxu0 %v304
      %v376 = vpop.f32.mrf.mxu0
      %v377 = vadd.f32 0.0, %v376
      %v378 = vpop.f32.mrf.mxu0
      %v379 = vpop.f32.mrf.mxu0
      %v380 = vadd.f32 0.0, %v379
      %v381 = vpop.f32.mrf.mxu0
      %382 = vmatprep.mubr.bf16.mxu0 0
      %383 = vmatmul.mubr.bf16.gmra.mxu0 %v307
      %v384 = vpop.f32.mrf.mxu0
      %v385 = vadd.f32 0.0, %v384
      %v386 = vpop.f32.mrf.mxu0
      %v387 = vpop.f32.mrf.mxu0
      %v388 = vadd.f32 0.0, %v387
      %v389 = vpop.f32.mrf.mxu0
      %390 = vmatprep.mubr.bf16.mxu0 0
      %391 = vmatmul.mubr.bf16.gmra.mxu0 %v310
      %v392 = vpop.f32.mrf.mxu0
      %v393 = vadd.f32 0.0, %v392
      %v394 = vpop.f32.mrf.mxu0
      %v395 = vpop.f32.mrf.mxu0
      %v396 = vadd.f32 0.0, %v395
      %v397 = vpop.f32.mrf.mxu0
      %398 = vmatprep.mubr.bf16.mxu0 0
      %399 = vmatmul.mubr.bf16.gmra.mxu0 %v313
      %v400 = vpop.f32.mrf.mxu0
      %v401 = vadd.f32 0.0, %v400
      %v402 = vpop.f32.mrf.mxu0
      %v403 = vpop.f32.mrf.mxu0
      %v404 = vadd.f32 0.0, %v403
      %v405 = vpop.f32.mrf.mxu0
      %406 = vmatprep.mubr.bf16.mxu0 0
      %407 = vmatmul.mubr.bf16.gmra.mxu0 %v316
      %v408 = vpop.f32.mrf.mxu0
      %v409 = vadd.f32 0.0, %v408
      %v410 = vpop.f32.mrf.mxu0
      %v411 = vpop.f32.mrf.mxu0
      %v412 = vadd.f32 0.0, %v411
      %v413 = vpop.f32.mrf.mxu0
      %414 = vdwg.mxu0
      %v415 = vmax.f32 %v353, 0.0
      %v416 = vmax.f32 %v356, 0.0
      %v417 = vmax.f32 %v361, 0.0
      %v418 = vmax.f32 %v364, 0.0
      %v419 = vmax.f32 %v369, 0.0
      %v420 = vmax.f32 %v372, 0.0
      %v421 = vmax.f32 %v377, 0.0
      %v422 = vmax.f32 %v380, 0.0
      %v423 = vmax.f32 %v385, 0.0
      %v424 = vmax.f32 %v388, 0.0
      %v425 = vmax.f32 %v393, 0.0
      %v426 = vmax.f32 %v396, 0.0
      %v427 = vmax.f32 %v401, 0.0
      %v428 = vmax.f32 %v404, 0.0
      %v429 = vmax.f32 %v409, 0.0
      %v430 = vmax.f32 %v412, 0.0
      %v431 = vpack.c.bf16 %v416, %v415
      %v432 = vpack.c.bf16 %v418, %v417
      %v433 = vpack.c.bf16 %v420, %v419
      %v434 = vpack.c.bf16 %v422, %v421
      %v435 = vpack.c.bf16 %v424, %v423
      %v436 = vpack.c.bf16 %v426, %v425
      %v437 = vpack.c.bf16 %v428, %v427
      %v438 = vpack.c.bf16 %v430, %v429
      %v444 = vunpack.c.l.b16 %v226
      %v445 = vunpack.c.l.b16 %v227
      %v446 = vunpack.c.l.b16 %v228
      %v447 = vunpack.c.l.b16 %v229
      %v448 = vunpack.c.l.b16 %v230
      %v449 = vpack.c.b16 %v445, %v444
      %v450 = vpack.c.b16 %v447, %v446
      %v451 = vpack.c.b16 %v448, %v448
      %vm454 = vcmask 277504
      %v456 = vsel %vm454, %v431, 0
      %v459 = vsel %vm454, %v432, 0
      %v462 = vsel %vm454, %v433, 0
      %v465 = vsel %vm454, %v434, 0
      %v468 = vsel %vm454, %v435, 0
      %v471 = vsel %vm454, %v436, 0
      %v474 = vsel %vm454, %v437, 0
      %v477 = vsel %vm454, %v438, 0
      %vm479 = vcmask 1040384
      %v481 = vsel %vm479, %v451, 0
      %483 = vmatprep.subr.bf16.mxu0 0
      %484 = vmatpush1.bf16.msra.mxu0 0
      %485 = vmatprep.subr.bf16.mxu0 0
      %486 = vmatpush1.bf16.msra.mxu0 0
      %487 = vmatprep.subr.bf16.mxu0 0
      %488 = vmatpush1.bf16.msra.mxu0 0
      %489 = vmatprep.subr.bf16.mxu0 0
      %490 = vmatpush1.bf16.msra.mxu0 0
      %491 = vmatprep.subr.bf16.mxu0 0
      %492 = vmatpush1.bf16.msra.mxu0 0
      %493 = vmatprep.subr.bf16.mxu0 0
      %494 = vmatpush1.bf16.msra.mxu0 %v481
      %495 = vmatprep.subr.bf16.mxu0 0
      %496 = vmatpush1.bf16.msra.mxu0 %v450
      %497 = vmatprep.subr.bf16.mxu0 0
      %498 = vmatpush1.bf16.msra.mxu0 %v449
      %499 = vmatprep.subr.bf16.mxu0 0
      %500 = vmatpush2.bf16.msra.mxu0 0
      %501 = vmatprep.subr.bf16.mxu0 0
      %502 = vmatpush2.bf16.msra.mxu0 0
      %503 = vmatprep.subr.bf16.mxu0 0
      %504 = vmatpush2.bf16.msra.mxu0 0
      %505 = vmatprep.subr.bf16.mxu0 0
      %506 = vmatpush2.bf16.msra.mxu0 0
      %507 = vmatprep.subr.bf16.mxu0 0
      %508 = vmatpush2.bf16.msra.mxu0 0
      %509 = vmatprep.subr.bf16.mxu0 0
      %510 = vmatpush2.bf16.msra.mxu0 0
      %511 = vmatprep.subr.bf16.mxu0 0
      %512 = vmatpush2.bf16.msra.mxu0 0
      %513 = vmatprep.subr.bf16.mxu0 0
      %514 = vmatpush2.bf16.msra.mxu0 0
      %515 = vmatprep.mubr.bf16.mxu0 0
      %516 = vmatmul.mubr.bf16.gmra.mxu0 %v456
      %v517 = vpop.f32.mrf.mxu0
      %v518 = vadd.f32 0.0, %v517
      %v519 = vpop.f32.mrf.mxu0
      %v520 = vpop.f32.mrf.mxu0
      %v521 = vadd.f32 0.0, %v520
      %v522 = vpop.f32.mrf.mxu0
      %523 = vmatprep.mubr.bf16.mxu0 0
      %524 = vmatmul.mubr.bf16.gmra.mxu0 %v459
      %v525 = vpop.f32.mrf.mxu0
      %v526 = vadd.f32 0.0, %v525
      %v527 = vpop.f32.mrf.mxu0
      %v528 = vpop.f32.mrf.mxu0
      %v529 = vadd.f32 0.0, %v528
      %v530 = vpop.f32.mrf.mxu0
      %531 = vmatprep.mubr.bf16.mxu0 0
      %532 = vmatmul.mubr.bf16.gmra.mxu0 %v462
      %v533 = vpop.f32.mrf.mxu0
      %v534 = vadd.f32 0.0, %v533
      %v535 = vpop.f32.mrf.mxu0
      %v536 = vpop.f32.mrf.mxu0
      %v537 = vadd.f32 0.0, %v536
      %v538 = vpop.f32.mrf.mxu0
      %539 = vmatprep.mubr.bf16.mxu0 0
      %540 = vmatmul.mubr.bf16.gmra.mxu0 %v465
      %v541 = vpop.f32.mrf.mxu0
      %v542 = vadd.f32 0.0, %v541
      %v543 = vpop.f32.mrf.mxu0
      %v544 = vpop.f32.mrf.mxu0
      %v545 = vadd.f32 0.0, %v544
      %v546 = vpop.f32.mrf.mxu0
      %547 = vmatprep.mubr.bf16.mxu0 0
      %548 = vmatmul.mubr.bf16.gmra.mxu0 %v468
      %v549 = vpop.f32.mrf.mxu0
      %v550 = vadd.f32 0.0, %v549
      %v551 = vpop.f32.mrf.mxu0
      %v552 = vpop.f32.mrf.mxu0
      %v553 = vadd.f32 0.0, %v552
      %v554 = vpop.f32.mrf.mxu0
      %555 = vmatprep.mubr.bf16.mxu0 0
      %556 = vmatmul.mubr.bf16.gmra.mxu0 %v471
      %v557 = vpop.f32.mrf.mxu0
      %v558 = vadd.f32 0.0, %v557
      %v559 = vpop.f32.mrf.mxu0
      %v560 = vpop.f32.mrf.mxu0
      %v561 = vadd.f32 0.0, %v560
      %v562 = vpop.f32.mrf.mxu0
      %563 = vmatprep.mubr.bf16.mxu0 0
      %564 = vmatmul.mubr.bf16.gmra.mxu0 %v474
      %v565 = vpop.f32.mrf.mxu0
      %v566 = vadd.f32 0.0, %v565
      %v567 = vpop.f32.mrf.mxu0
      %v568 = vpop.f32.mrf.mxu0
      %v569 = vadd.f32 0.0, %v568
      %v570 = vpop.f32.mrf.mxu0
      %571 = vmatprep.mubr.bf16.mxu0 0
      %572 = vmatmul.mubr.bf16.gmra.mxu0 %v477
      %v573 = vpop.f32.mrf.mxu0
      %v574 = vadd.f32 0.0, %v573
      %v575 = vpop.f32.mrf.mxu0
      %v576 = vpop.f32.mrf.mxu0
      %v577 = vadd.f32 0.0, %v576
      %v578 = vpop.f32.mrf.mxu0
      %579 = vdwg.mxu0
      %v580 = vmax.f32 %v518, 0.0
      %v581 = vmax.f32 %v521, 0.0
      %v582 = vmax.f32 %v526, 0.0
      %v583 = vmax.f32 %v529, 0.0
      %v584 = vmax.f32 %v534, 0.0
      %v585 = vmax.f32 %v537, 0.0
      %v586 = vmax.f32 %v542, 0.0
      %v587 = vmax.f32 %v545, 0.0
      %v588 = vmax.f32 %v550, 0.0
      %v589 = vmax.f32 %v553, 0.0
      %v590 = vmax.f32 %v558, 0.0
      %v591 = vmax.f32 %v561, 0.0
      %v592 = vmax.f32 %v566, 0.0
      %v593 = vmax.f32 %v569, 0.0
      %v594 = vmax.f32 %v574, 0.0
      %v595 = vmax.f32 %v577, 0.0
      %v596 = vld [vmem:[%s215] sm:$0xff]
      %v597 = vld [vmem:[%s215 + $0x8] sm:$0xff]
      %v598 = vld [vmem:[%s215 + $0x10] sm:$0xff]
      %v599 = vld [vmem:[%s215 + $0x18] sm:$0xff]
      %v600 = vld [vmem:[%s215 + $0x20] sm:$0xff]
      %v601 = vld [vmem:[%s215 + $0x28] sm:$0xff]
      %v602 = vld [vmem:[%s215 + $0x30] sm:$0xff]
      %v603 = vld [vmem:[%s215 + $0x38] sm:$0xff]
      %v604 = vld [vmem:[%s215 + $0x40] sm:$0xff]
      %v605 = vld [vmem:[%s215 + $0x48] sm:$0xff]
      %v606 = vld [vmem:[%s215 + $0x50] sm:$0xff]
      %v607 = vld [vmem:[%s215 + $0x58] sm:$0xff]
      %v608 = vld [vmem:[%s215 + $0x60] sm:$0xff]
      %v609 = vld [vmem:[%s215 + $0x68] sm:$0xff]
      %v610 = vld [vmem:[%s215 + $0x70] sm:$0xff]
      %v611 = vld [vmem:[%s215 + $0x78] sm:$0xff]
      %vm612 = vcmp.gt.s32.totalorder %v596, 0
      %vm613 = vcmp.gt.s32.totalorder %v597, 0
      %vm614 = vcmp.gt.s32.totalorder %v598, 0
      %vm615 = vcmp.gt.s32.totalorder %v599, 0
      %vm616 = vcmp.gt.s32.totalorder %v600, 0
      %vm617 = vcmp.gt.s32.totalorder %v601, 0
      %vm618 = vcmp.gt.s32.totalorder %v602, 0
      %vm619 = vcmp.gt.s32.totalorder %v603, 0
      %vm620 = vcmp.gt.s32.totalorder %v604, 0
      %vm621 = vcmp.gt.s32.totalorder %v605, 0
      %vm622 = vcmp.gt.s32.totalorder %v606, 0
      %vm623 = vcmp.gt.s32.totalorder %v607, 0
      %vm624 = vcmp.gt.s32.totalorder %v608, 0
      %vm625 = vcmp.gt.s32.totalorder %v609, 0
      %vm626 = vcmp.gt.s32.totalorder %v610, 0
      %vm627 = vcmp.gt.s32.totalorder %v611, 0
      %v628 = vsel %vm612, 1, 0
      %v629 = vsel %vm613, 1, 0
      %v630 = vsel %vm614, 1, 0
      %v631 = vsel %vm615, 1, 0
      %v632 = vsel %vm616, 1, 0
      %v633 = vsel %vm617, 1, 0
      %v634 = vsel %vm618, 1, 0
      %v635 = vsel %vm619, 1, 0
      %v636 = vsel %vm620, 1, 0
      %v637 = vsel %vm621, 1, 0
      %v638 = vsel %vm622, 1, 0
      %v639 = vsel %vm623, 1, 0
      %v640 = vsel %vm624, 1, 0
      %v641 = vsel %vm625, 1, 0
      %v642 = vsel %vm626, 1, 0
      %v643 = vsel %vm627, 1, 0
      %644 = vset.pattern.permute.xlu0 0
      %645 = vperm.xlu0 %644, %v628
      %v646 = vpop.permute.xlu0 %645
      %647 = vset.pattern.permute.xlu0 0
      %648 = vperm.xlu0 %647, %v629
      %v649 = vpop.permute.xlu0 %648
      %650 = vset.pattern.permute.xlu0 0
      %651 = vperm.xlu0 %650, %v630
      %v652 = vpop.permute.xlu0 %651
      %653 = vset.pattern.permute.xlu0 0
      %654 = vperm.xlu0 %653, %v631
      %v655 = vpop.permute.xlu0 %654
      %656 = vset.pattern.permute.xlu0 0
      %657 = vperm.xlu0 %656, %v632
      %v658 = vpop.permute.xlu0 %657
      %659 = vset.pattern.permute.xlu0 0
      %660 = vperm.xlu0 %659, %v633
      %v661 = vpop.permute.xlu0 %660
      %662 = vset.pattern.permute.xlu0 0
      %663 = vperm.xlu0 %662, %v634
      %v664 = vpop.permute.xlu0 %663
      %665 = vset.pattern.permute.xlu0 0
      %666 = vperm.xlu0 %665, %v635
      %v667 = vpop.permute.xlu0 %666
      %668 = vset.pattern.permute.xlu0 0
      %669 = vperm.xlu0 %668, %v636
      %v670 = vpop.permute.xlu0 %669
      %671 = vset.pattern.permute.xlu0 0
      %672 = vperm.xlu0 %671, %v637
      %v673 = vpop.permute.xlu0 %672
      %674 = vset.pattern.permute.xlu0 0
      %675 = vperm.xlu0 %674, %v638
      %v676 = vpop.permute.xlu0 %675
      %677 = vset.pattern.permute.xlu0 0
      %678 = vperm.xlu0 %677, %v639
      %v679 = vpop.permute.xlu0 %678
      %680 = vset.pattern.permute.xlu0 0
      %681 = vperm.xlu0 %680, %v640
      %v682 = vpop.permute.xlu0 %681
      %683 = vset.pattern.permute.xlu0 0
      %684 = vperm.xlu0 %683, %v641
      %v685 = vpop.permute.xlu0 %684
      %686 = vset.pattern.permute.xlu0 0
      %687 = vperm.xlu0 %686, %v642
      %v688 = vpop.permute.xlu0 %687
      %689 = vset.pattern.permute.xlu0 0
      %690 = vperm.xlu0 %689, %v643
      %v691 = vpop.permute.xlu0 %690
      %vm692 = vcmp.eq.s32.totalorder %v646, 1
      %vm693 = vcmp.eq.s32.totalorder %v649, 1
      %vm694 = vcmp.eq.s32.totalorder %v652, 1
      %vm695 = vcmp.eq.s32.totalorder %v655, 1
      %vm696 = vcmp.eq.s32.totalorder %v658, 1
      %vm697 = vcmp.eq.s32.totalorder %v661, 1
      %vm698 = vcmp.eq.s32.totalorder %v664, 1
      %vm699 = vcmp.eq.s32.totalorder %v667, 1
      %vm700 = vcmp.eq.s32.totalorder %v670, 1
      %vm701 = vcmp.eq.s32.totalorder %v673, 1
      %vm702 = vcmp.eq.s32.totalorder %v676, 1
      %vm703 = vcmp.eq.s32.totalorder %v679, 1
      %vm704 = vcmp.eq.s32.totalorder %v682, 1
      %vm705 = vcmp.eq.s32.totalorder %v685, 1
      %vm706 = vcmp.eq.s32.totalorder %v688, 1
      %vm707 = vcmp.eq.s32.totalorder %v691, 1
      %v708 = vsel %vm692, %v580, 0.0
      %v709 = vsel %vm693, %v581, 0.0
      %v710 = vsel %vm694, %v582, 0.0
      %v711 = vsel %vm695, %v583, 0.0
      %v712 = vsel %vm696, %v584, 0.0
      %v713 = vsel %vm697, %v585, 0.0
      %v714 = vsel %vm698, %v586, 0.0
      %v715 = vsel %vm699, %v587, 0.0
      %v716 = vsel %vm700, %v588, 0.0
      %v717 = vsel %vm701, %v589, 0.0
      %v718 = vsel %vm702, %v590, 0.0
      %v719 = vsel %vm703, %v591, 0.0
      %v720 = vsel %vm704, %v592, 0.0
      %v721 = vsel %vm705, %v593, 0.0
      %v722 = vsel %vm706, %v594, 0.0
      %v723 = vsel %vm707, %v595, 0.0
      %v724 = vmax.f32 %v708, 0.0
      %v725 = vmax.f32 %v709, 0.0
      %v726 = vmax.f32 %v710, 0.0
      %v727 = vmax.f32 %v711, 0.0
      %v728 = vmax.f32 %v724, %v712
      %v729 = vmax.f32 %v725, %v713
      %v730 = vmax.f32 %v726, %v714
      %v731 = vmax.f32 %v727, %v715
      %v732 = vmax.f32 %v728, %v716
      %v733 = vmax.f32 %v729, %v717
      %v734 = vmax.f32 %v730, %v718
      %v735 = vmax.f32 %v731, %v719
      %v736 = vmax.f32 %v732, %v720
      %v737 = vmax.f32 %v733, %v721
      %v738 = vmax.f32 %v734, %v722
      %v739 = vmax.f32 %v735, %v723
      %v740 = vld [vmem:[%s209 + $0x40] sm:$0xf]
      %v741 = vld [vmem:[%s209 + $0x44] sm:$0xf]
      %v742 = vld [vmem:[%s209 + $0x48] sm:$0xf]
      %v743 = vld [vmem:[%s209 + $0x4c] sm:$0xf]
      %v744 = vld [vmem:[%s209 + $0x50] sm:$0xf]
      %v745 = vld [vmem:[%s209 + $0x54] sm:$0xf]
      %v746 = vld [vmem:[%s209 + $0x58] sm:$0xf]
      %v747 = vld [vmem:[%s209 + $0x5c] sm:$0xf]
      %v748 = vld [vmem:[%s209 + $0x60] sm:$0xf]
      %v749 = vld [vmem:[%s209 + $0x64] sm:$0xf]
      %v750 = vld [vmem:[%s209 + $0x68] sm:$0xf]
      %v751 = vld [vmem:[%s209 + $0x6c] sm:$0xf]
      %v752 = vld [vmem:[%s209 + $0x70] sm:$0xf]
      %v753 = vld [vmem:[%s209 + $0x74] sm:$0xf]
      %v754 = vld [vmem:[%s209 + $0x78] sm:$0xf]
      %v755 = vld [vmem:[%s209 + $0x7c] sm:$0xf]
      %v772 = vunpack.c.l.b16 %v740
      %v773 = vunpack.c.l.b16 %v741
      %v774 = vunpack.c.l.b16 %v742
      %v775 = vunpack.c.l.b16 %v743
      %v776 = vunpack.c.l.b16 %v744
      %v777 = vunpack.c.l.b16 %v745
      %v778 = vunpack.c.l.b16 %v746
      %v779 = vunpack.c.l.b16 %v747
      %v780 = vunpack.c.l.b16 %v748
      %v781 = vunpack.c.l.b16 %v749
      %v782 = vunpack.c.l.b16 %v750
      %v783 = vunpack.c.l.b16 %v751
      %v784 = vunpack.c.l.b16 %v752
      %v785 = vunpack.c.l.b16 %v753
      %v786 = vunpack.c.l.b16 %v754
      %v787 = vunpack.c.l.b16 %v755
      %v788 = vpack.c.b16 %v773, %v772
      %v789 = vpack.c.b16 %v775, %v774
      %v790 = vpack.c.b16 %v777, %v776
      %v791 = vpack.c.b16 %v779, %v778
      %v792 = vpack.c.b16 %v781, %v780
      %v793 = vpack.c.b16 %v783, %v782
      %v794 = vpack.c.b16 %v785, %v784
      %v795 = vpack.c.b16 %v787, %v786
      %v797 = vsel %vm293, %v788, 0
      %v800 = vsel %vm293, %v789, 0
      %v803 = vsel %vm293, %v790, 0
      %v806 = vsel %vm293, %v791, 0
      %v809 = vsel %vm293, %v792, 0
      %v812 = vsel %vm293, %v793, 0
      %v815 = vsel %vm293, %v794, 0
      %v818 = vsel %vm293, %v795, 0
      %820 = vmatprep.subr.bf16.mxu0 0
      %821 = vmatpush1.bf16.msra.mxu0 0
      %822 = vmatprep.subr.bf16.mxu0 0
      %823 = vmatpush1.bf16.msra.mxu0 0
      %824 = vmatprep.subr.bf16.mxu0 0
      %825 = vmatpush1.bf16.msra.mxu0 0
      %826 = vmatprep.subr.bf16.mxu0 0
      %827 = vmatpush1.bf16.msra.mxu0 0
      %828 = vmatprep.subr.bf16.mxu0 0
      %829 = vmatpush1.bf16.msra.mxu0 0
      %830 = vmatprep.subr.bf16.mxu0 0
      %831 = vmatpush1.bf16.msra.mxu0 0
      %832 = vmatprep.subr.bf16.mxu0 0
      %833 = vmatpush1.bf16.msra.mxu0 0
      %834 = vmatprep.subr.bf16.mxu0 0
      %835 = vmatpush1.bf16.msra.mxu0 %v291
      %836 = vmatprep.subr.bf16.mxu0 0
      %837 = vmatpush2.bf16.msra.mxu0 0
      %838 = vmatprep.subr.bf16.mxu0 0
      %839 = vmatpush2.bf16.msra.mxu0 0
      %840 = vmatprep.subr.bf16.mxu0 0
      %841 = vmatpush2.bf16.msra.mxu0 0
      %842 = vmatprep.subr.bf16.mxu0 0
      %843 = vmatpush2.bf16.msra.mxu0 0
      %844 = vmatprep.subr.bf16.mxu0 0
      %845 = vmatpush2.bf16.msra.mxu0 0
      %846 = vmatprep.subr.bf16.mxu0 0
      %847 = vmatpush2.bf16.msra.mxu0 0
      %848 = vmatprep.subr.bf16.mxu0 0
      %849 = vmatpush2.bf16.msra.mxu0 0
      %850 = vmatprep.subr.bf16.mxu0 0
      %851 = vmatpush2.bf16.msra.mxu0 0
      %852 = vmatprep.mubr.bf16.mxu0 0
      %853 = vmatmul.mubr.bf16.gmra.mxu0 %v797
      %v854 = vpop.f32.mrf.mxu0
      %v855 = vadd.f32 0.0, %v854
      %v856 = vpop.f32.mrf.mxu0
      %v857 = vpop.f32.mrf.mxu0
      %v858 = vadd.f32 0.0, %v857
      %v859 = vpop.f32.mrf.mxu0
      %860 = vmatprep.mubr.bf16.mxu0 0
      %861 = vmatmul.mubr.bf16.gmra.mxu0 %v800
      %v862 = vpop.f32.mrf.mxu0
      %v863 = vadd.f32 0.0, %v862
      %v864 = vpop.f32.mrf.mxu0
      %v865 = vpop.f32.mrf.mxu0
      %v866 = vadd.f32 0.0, %v865
      %v867 = vpop.f32.mrf.mxu0
      %868 = vmatprep.mubr.bf16.mxu0 0
      %869 = vmatmul.mubr.bf16.gmra.mxu0 %v803
      %v870 = vpop.f32.mrf.mxu0
      %v871 = vadd.f32 0.0, %v870
      %v872 = vpop.f32.mrf.mxu0
      %v873 = vpop.f32.mrf.mxu0
      %v874 = vadd.f32 0.0, %v873
      %v875 = vpop.f32.mrf.mxu0
      %876 = vmatprep.mubr.bf16.mxu0 0
      %877 = vmatmul.mubr.bf16.gmra.mxu0 %v806
      %v878 = vpop.f32.mrf.mxu0
      %v879 = vadd.f32 0.0, %v878
      %v880 = vpop.f32.mrf.mxu0
      %v881 = vpop.f32.mrf.mxu0
      %v882 = vadd.f32 0.0, %v881
      %v883 = vpop.f32.mrf.mxu0
      %884 = vmatprep.mubr.bf16.mxu0 0
      %885 = vmatmul.mubr.bf16.gmra.mxu0 %v809
      %v886 = vpop.f32.mrf.mxu0
      %v887 = vadd.f32 0.0, %v886
      %v888 = vpop.f32.mrf.mxu0
      %v889 = vpop.f32.mrf.mxu0
      %v890 = vadd.f32 0.0, %v889
      %v891 = vpop.f32.mrf.mxu0
      %892 = vmatprep.mubr.bf16.mxu0 0
      %893 = vmatmul.mubr.bf16.gmra.mxu0 %v812
      %v894 = vpop.f32.mrf.mxu0
      %v895 = vadd.f32 0.0, %v894
      %v896 = vpop.f32.mrf.mxu0
      %v897 = vpop.f32.mrf.mxu0
      %v898 = vadd.f32 0.0, %v897
      %v899 = vpop.f32.mrf.mxu0
      %900 = vmatprep.mubr.bf16.mxu0 0
      %901 = vmatmul.mubr.bf16.gmra.mxu0 %v815
      %v902 = vpop.f32.mrf.mxu0
      %v903 = vadd.f32 0.0, %v902
      %v904 = vpop.f32.mrf.mxu0
      %v905 = vpop.f32.mrf.mxu0
      %v906 = vadd.f32 0.0, %v905
      %v907 = vpop.f32.mrf.mxu0
      %908 = vmatprep.mubr.bf16.mxu0 0
      %909 = vmatmul.mubr.bf16.gmra.mxu0 %v818
      %v910 = vpop.f32.mrf.mxu0
      %v911 = vadd.f32 0.0, %v910
      %v912 = vpop.f32.mrf.mxu0
      %v913 = vpop.f32.mrf.mxu0
      %v914 = vadd.f32 0.0, %v913
      %v915 = vpop.f32.mrf.mxu0
      %916 = vdwg.mxu0
      %v917 = vmax.f32 %v855, 0.0
      %v918 = vmax.f32 %v858, 0.0
      %v919 = vmax.f32 %v863, 0.0
      %v920 = vmax.f32 %v866, 0.0
      %v921 = vmax.f32 %v871, 0.0
      %v922 = vmax.f32 %v874, 0.0
      %v923 = vmax.f32 %v879, 0.0
      %v924 = vmax.f32 %v882, 0.0
      %v925 = vmax.f32 %v887, 0.0
      %v926 = vmax.f32 %v890, 0.0
      %v927 = vmax.f32 %v895, 0.0
      %v928 = vmax.f32 %v898, 0.0
      %v929 = vmax.f32 %v903, 0.0
      %v930 = vmax.f32 %v906, 0.0
      %v931 = vmax.f32 %v911, 0.0
      %v932 = vmax.f32 %v914, 0.0
      %v933 = vpack.c.bf16 %v918, %v917
      %v934 = vpack.c.bf16 %v920, %v919
      %v935 = vpack.c.bf16 %v922, %v921
      %v936 = vpack.c.bf16 %v924, %v923
      %v937 = vpack.c.bf16 %v926, %v925
      %v938 = vpack.c.bf16 %v928, %v927
      %v939 = vpack.c.bf16 %v930, %v929
      %v940 = vpack.c.bf16 %v932, %v931
      %v942 = vsel %vm454, %v933, 0
      %v945 = vsel %vm454, %v934, 0
      %v948 = vsel %vm454, %v935, 0
      %v951 = vsel %vm454, %v936, 0
      %v954 = vsel %vm454, %v937, 0
      %v957 = vsel %vm454, %v938, 0
      %v960 = vsel %vm454, %v939, 0
      %v963 = vsel %vm454, %v940, 0
      %965 = vmatprep.subr.bf16.mxu0 0
      %966 = vmatpush1.bf16.msra.mxu0 0
      %967 = vmatprep.subr.bf16.mxu0 0
      %968 = vmatpush1.bf16.msra.mxu0 0
      %969 = vmatprep.subr.bf16.mxu0 0
      %970 = vmatpush1.bf16.msra.mxu0 0
      %971 = vmatprep.subr.bf16.mxu0 0
      %972 = vmatpush1.bf16.msra.mxu0 0
      %973 = vmatprep.subr.bf16.mxu0 0
      %974 = vmatpush1.bf16.msra.mxu0 0
      %975 = vmatprep.subr.bf16.mxu0 0
      %976 = vmatpush1.bf16.msra.mxu0 %v481
      %977 = vmatprep.subr.bf16.mxu0 0
      %978 = vmatpush1.bf16.msra.mxu0 %v450
      %979 = vmatprep.subr.bf16.mxu0 0
      %980 = vmatpush1.bf16.msra.mxu0 %v449
      %981 = vmatprep.subr.bf16.mxu0 0
      %982 = vmatpush2.bf16.msra.mxu0 0
      %983 = vmatprep.subr.bf16.mxu0 0
      %984 = vmatpush2.bf16.msra.mxu0 0
      %985 = vmatprep.subr.bf16.mxu0 0
      %986 = vmatpush2.bf16.msra.mxu0 0
      %987 = vmatprep.subr.bf16.mxu0 0
      %988 = vmatpush2.bf16.msra.mxu0 0
      %989 = vmatprep.subr.bf16.mxu0 0
      %990 = vmatpush2.bf16.msra.mxu0 0
      %991 = vmatprep.subr.bf16.mxu0 0
      %992 = vmatpush2.bf16.msra.mxu0 0
      %993 = vmatprep.subr.bf16.mxu0 0
      %994 = vmatpush2.bf16.msra.mxu0 0
      %995 = vmatprep.subr.bf16.mxu0 0
      %996 = vmatpush2.bf16.msra.mxu0 0
      %997 = vmatprep.mubr.bf16.mxu0 0
      %998 = vmatmul.mubr.bf16.gmra.mxu0 %v942
      %v999 = vpop.f32.mrf.mxu0
      %v1000 = vadd.f32 0.0, %v999
      %v1001 = vpop.f32.mrf.mxu0
      %v1002 = vpop.f32.mrf.mxu0
      %v1003 = vadd.f32 0.0, %v1002
      %v1004 = vpop.f32.mrf.mxu0
      %1005 = vmatprep.mubr.bf16.mxu0 0
      %1006 = vmatmul.mubr.bf16.gmra.mxu0 %v945
      %v1007 = vpop.f32.mrf.mxu0
      %v1008 = vadd.f32 0.0, %v1007
      %v1009 = vpop.f32.mrf.mxu0
      %v1010 = vpop.f32.mrf.mxu0
      %v1011 = vadd.f32 0.0, %v1010
      %v1012 = vpop.f32.mrf.mxu0
      %1013 = vmatprep.mubr.bf16.mxu0 0
      %1014 = vmatmul.mubr.bf16.gmra.mxu0 %v948
      %v1015 = vpop.f32.mrf.mxu0
      %v1016 = vadd.f32 0.0, %v1015
      %v1017 = vpop.f32.mrf.mxu0
      %v1018 = vpop.f32.mrf.mxu0
      %v1019 = vadd.f32 0.0, %v1018
      %v1020 = vpop.f32.mrf.mxu0
      %1021 = vmatprep.mubr.bf16.mxu0 0
      %1022 = vmatmul.mubr.bf16.gmra.mxu0 %v951
      %v1023 = vpop.f32.mrf.mxu0
      %v1024 = vadd.f32 0.0, %v1023
      %v1025 = vpop.f32.mrf.mxu0
      %v1026 = vpop.f32.mrf.mxu0
      %v1027 = vadd.f32 0.0, %v1026
      %v1028 = vpop.f32.mrf.mxu0
      %1029 = vmatprep.mubr.bf16.mxu0 0
      %1030 = vmatmul.mubr.bf16.gmra.mxu0 %v954
      %v1031 = vpop.f32.mrf.mxu0
      %v1032 = vadd.f32 0.0, %v1031
      %v1033 = vpop.f32.mrf.mxu0
      %v1034 = vpop.f32.mrf.mxu0
      %v1035 = vadd.f32 0.0, %v1034
      %v1036 = vpop.f32.mrf.mxu0
      %1037 = vmatprep.mubr.bf16.mxu0 0
      %1038 = vmatmul.mubr.bf16.gmra.mxu0 %v957
      %v1039 = vpop.f32.mrf.mxu0
      %v1040 = vadd.f32 0.0, %v1039
      %v1041 = vpop.f32.mrf.mxu0
      %v1042 = vpop.f32.mrf.mxu0
      %v1043 = vadd.f32 0.0, %v1042
      %v1044 = vpop.f32.mrf.mxu0
      %1045 = vmatprep.mubr.bf16.mxu0 0
      %1046 = vmatmul.mubr.bf16.gmra.mxu0 %v960
      %v1047 = vpop.f32.mrf.mxu0
      %v1048 = vadd.f32 0.0, %v1047
      %v1049 = vpop.f32.mrf.mxu0
      %v1050 = vpop.f32.mrf.mxu0
      %v1051 = vadd.f32 0.0, %v1050
      %v1052 = vpop.f32.mrf.mxu0
      %1053 = vmatprep.mubr.bf16.mxu0 0
      %1054 = vmatmul.mubr.bf16.gmra.mxu0 %v963
      %v1055 = vpop.f32.mrf.mxu0
      %v1056 = vadd.f32 0.0, %v1055
      %v1057 = vpop.f32.mrf.mxu0
      %v1058 = vpop.f32.mrf.mxu0
      %v1059 = vadd.f32 0.0, %v1058
      %v1060 = vpop.f32.mrf.mxu0
      %1061 = vdwg.mxu0
      %v1062 = vmax.f32 %v1000, 0.0
      %v1063 = vmax.f32 %v1003, 0.0
      %v1064 = vmax.f32 %v1008, 0.0
      %v1065 = vmax.f32 %v1011, 0.0
      %v1066 = vmax.f32 %v1016, 0.0
      %v1067 = vmax.f32 %v1019, 0.0
      %v1068 = vmax.f32 %v1024, 0.0
      %v1069 = vmax.f32 %v1027, 0.0
      %v1070 = vmax.f32 %v1032, 0.0
      %v1071 = vmax.f32 %v1035, 0.0
      %v1072 = vmax.f32 %v1040, 0.0
      %v1073 = vmax.f32 %v1043, 0.0
      %v1074 = vmax.f32 %v1048, 0.0
      %v1075 = vmax.f32 %v1051, 0.0
      %v1076 = vmax.f32 %v1056, 0.0
      %v1077 = vmax.f32 %v1059, 0.0
      %v1078 = vld [vmem:[%s215 + $0x80] sm:$0xff]
      %v1079 = vld [vmem:[%s215 + $0x88] sm:$0xff]
      %v1080 = vld [vmem:[%s215 + $0x90] sm:$0xff]
      %v1081 = vld [vmem:[%s215 + $0x98] sm:$0xff]
      %v1082 = vld [vmem:[%s215 + $0xa0] sm:$0xff]
      %v1083 = vld [vmem:[%s215 + $0xa8] sm:$0xff]
      %v1084 = vld [vmem:[%s215 + $0xb0] sm:$0xff]
      %v1085 = vld [vmem:[%s215 + $0xb8] sm:$0xff]
      %v1086 = vld [vmem:[%s215 + $0xc0] sm:$0xff]
      %v1087 = vld [vmem:[%s215 + $0xc8] sm:$0xff]
      %v1088 = vld [vmem:[%s215 + $0xd0] sm:$0xff]
      %v1089 = vld [vmem:[%s215 + $0xd8] sm:$0xff]
      %v1090 = vld [vmem:[%s215 + $0xe0] sm:$0xff]
      %v1091 = vld [vmem:[%s215 + $0xe8] sm:$0xff]
      %v1092 = vld [vmem:[%s215 + $0xf0] sm:$0xff]
      %v1093 = vld [vmem:[%s215 + $0xf8] sm:$0xff]
      %vm1094 = vcmp.gt.s32.totalorder %v1078, 0
      %vm1095 = vcmp.gt.s32.totalorder %v1079, 0
      %vm1096 = vcmp.gt.s32.totalorder %v1080, 0
      %vm1097 = vcmp.gt.s32.totalorder %v1081, 0
      %vm1098 = vcmp.gt.s32.totalorder %v1082, 0
      %vm1099 = vcmp.gt.s32.totalorder %v1083, 0
      %vm1100 = vcmp.gt.s32.totalorder %v1084, 0
      %vm1101 = vcmp.gt.s32.totalorder %v1085, 0
      %vm1102 = vcmp.gt.s32.totalorder %v1086, 0
      %vm1103 = vcmp.gt.s32.totalorder %v1087, 0
      %vm1104 = vcmp.gt.s32.totalorder %v1088, 0
      %vm1105 = vcmp.gt.s32.totalorder %v1089, 0
      %vm1106 = vcmp.gt.s32.totalorder %v1090, 0
      %vm1107 = vcmp.gt.s32.totalorder %v1091, 0
      %vm1108 = vcmp.gt.s32.totalorder %v1092, 0
      %vm1109 = vcmp.gt.s32.totalorder %v1093, 0
      %v1110 = vsel %vm1094, 1, 0
      %v1111 = vsel %vm1095, 1, 0
      %v1112 = vsel %vm1096, 1, 0
      %v1113 = vsel %vm1097, 1, 0
      %v1114 = vsel %vm1098, 1, 0
      %v1115 = vsel %vm1099, 1, 0
      %v1116 = vsel %vm1100, 1, 0
      %v1117 = vsel %vm1101, 1, 0
      %v1118 = vsel %vm1102, 1, 0
      %v1119 = vsel %vm1103, 1, 0
      %v1120 = vsel %vm1104, 1, 0
      %v1121 = vsel %vm1105, 1, 0
      %v1122 = vsel %vm1106, 1, 0
      %v1123 = vsel %vm1107, 1, 0
      %v1124 = vsel %vm1108, 1, 0
      %v1125 = vsel %vm1109, 1, 0
      %1126 = vset.pattern.permute.xlu0 0
      %1127 = vperm.xlu0 %1126, %v1110
      %v1128 = vpop.permute.xlu0 %1127
      %1129 = vset.pattern.permute.xlu0 0
      %1130 = vperm.xlu0 %1129, %v1111
      %v1131 = vpop.permute.xlu0 %1130
      %1132 = vset.pattern.permute.xlu0 0
      %1133 = vperm.xlu0 %1132, %v1112
      %v1134 = vpop.permute.xlu0 %1133
      %1135 = vset.pattern.permute.xlu0 0
      %1136 = vperm.xlu0 %1135, %v1113
      %v1137 = vpop.permute.xlu0 %1136
      %1138 = vset.pattern.permute.xlu0 0
      %1139 = vperm.xlu0 %1138, %v1114
      %v1140 = vpop.permute.xlu0 %1139
      %1141 = vset.pattern.permute.xlu0 0
      %1142 = vperm.xlu0 %1141, %v1115
      %v1143 = vpop.permute.xlu0 %1142
      %1144 = vset.pattern.permute.xlu0 0
      %1145 = vperm.xlu0 %1144, %v1116
      %v1146 = vpop.permute.xlu0 %1145
      %1147 = vset.pattern.permute.xlu0 0
      %1148 = vperm.xlu0 %1147, %v1117
      %v1149 = vpop.permute.xlu0 %1148
      %1150 = vset.pattern.permute.xlu0 0
      %1151 = vperm.xlu0 %1150, %v1118
      %v1152 = vpop.permute.xlu0 %1151
      %1153 = vset.pattern.permute.xlu0 0
      %1154 = vperm.xlu0 %1153, %v1119
      %v1155 = vpop.permute.xlu0 %1154
      %1156 = vset.pattern.permute.xlu0 0
      %1157 = vperm.xlu0 %1156, %v1120
      %v1158 = vpop.permute.xlu0 %1157
      %1159 = vset.pattern.permute.xlu0 0
      %1160 = vperm.xlu0 %1159, %v1121
      %v1161 = vpop.permute.xlu0 %1160
      %1162 = vset.pattern.permute.xlu0 0
      %1163 = vperm.xlu0 %1162, %v1122
      %v1164 = vpop.permute.xlu0 %1163
      %1165 = vset.pattern.permute.xlu0 0
      %1166 = vperm.xlu0 %1165, %v1123
      %v1167 = vpop.permute.xlu0 %1166
      %1168 = vset.pattern.permute.xlu0 0
      %1169 = vperm.xlu0 %1168, %v1124
      %v1170 = vpop.permute.xlu0 %1169
      %1171 = vset.pattern.permute.xlu0 0
      %1172 = vperm.xlu0 %1171, %v1125
      %v1173 = vpop.permute.xlu0 %1172
      %vm1174 = vcmp.eq.s32.totalorder %v1128, 1
      %vm1175 = vcmp.eq.s32.totalorder %v1131, 1
      %vm1176 = vcmp.eq.s32.totalorder %v1134, 1
      %vm1177 = vcmp.eq.s32.totalorder %v1137, 1
      %vm1178 = vcmp.eq.s32.totalorder %v1140, 1
      %vm1179 = vcmp.eq.s32.totalorder %v1143, 1
      %vm1180 = vcmp.eq.s32.totalorder %v1146, 1
      %vm1181 = vcmp.eq.s32.totalorder %v1149, 1
      %vm1182 = vcmp.eq.s32.totalorder %v1152, 1
      %vm1183 = vcmp.eq.s32.totalorder %v1155, 1
      %vm1184 = vcmp.eq.s32.totalorder %v1158, 1
      %vm1185 = vcmp.eq.s32.totalorder %v1161, 1
      %vm1186 = vcmp.eq.s32.totalorder %v1164, 1
      %vm1187 = vcmp.eq.s32.totalorder %v1167, 1
      %vm1188 = vcmp.eq.s32.totalorder %v1170, 1
      %vm1189 = vcmp.eq.s32.totalorder %v1173, 1
      %v1190 = vsel %vm1174, %v1062, 0.0
      %v1191 = vsel %vm1175, %v1063, 0.0
      %v1192 = vsel %vm1176, %v1064, 0.0
      %v1193 = vsel %vm1177, %v1065, 0.0
      %v1194 = vsel %vm1178, %v1066, 0.0
      %v1195 = vsel %vm1179, %v1067, 0.0
      %v1196 = vsel %vm1180, %v1068, 0.0
      %v1197 = vsel %vm1181, %v1069, 0.0
      %v1198 = vsel %vm1182, %v1070, 0.0
      %v1199 = vsel %vm1183, %v1071, 0.0
      %v1200 = vsel %vm1184, %v1072, 0.0
      %v1201 = vsel %vm1185, %v1073, 0.0
      %v1202 = vsel %vm1186, %v1074, 0.0
      %v1203 = vsel %vm1187, %v1075, 0.0
      %v1204 = vsel %vm1188, %v1076, 0.0
      %v1205 = vsel %vm1189, %v1077, 0.0
      %v1206 = vmax.f32 %v736, %v1190
      %v1207 = vmax.f32 %v737, %v1191
      %v1208 = vmax.f32 %v738, %v1192
      %v1209 = vmax.f32 %v739, %v1193
      %v1210 = vmax.f32 %v1206, %v1194
      %v1211 = vmax.f32 %v1207, %v1195
      %v1212 = vmax.f32 %v1208, %v1196
      %v1213 = vmax.f32 %v1209, %v1197
      %v1214 = vmax.f32 %v1210, %v1198
      %v1215 = vmax.f32 %v1211, %v1199
      %v1216 = vmax.f32 %v1212, %v1200
      %v1217 = vmax.f32 %v1213, %v1201
      %v1218 = vmax.f32 %v1214, %v1202
      %v1219 = vmax.f32 %v1215, %v1203
      %v1220 = vmax.f32 %v1216, %v1204
      %v1221 = vmax.f32 %v1217, %v1205
      %v1222 = vld [vmem:[%s209 + $0x80] sm:$0xf]
      %v1223 = vld [vmem:[%s209 + $0x84] sm:$0xf]
      %v1224 = vld [vmem:[%s209 + $0x88] sm:$0xf]
      %v1225 = vld [vmem:[%s209 + $0x8c] sm:$0xf]
      %v1226 = vld [vmem:[%s209 + $0x90] sm:$0xf]
      %v1227 = vld [vmem:[%s209 + $0x94] sm:$0xf]
      %v1228 = vld [vmem:[%s209 + $0x98] sm:$0xf]
      %v1229 = vld [vmem:[%s209 + $0x9c] sm:$0xf]
      %v1230 = vld [vmem:[%s209 + $0xa0] sm:$0xf]
      %v1231 = vld [vmem:[%s209 + $0xa4] sm:$0xf]
      %v1232 = vld [vmem:[%s209 + $0xa8] sm:$0xf]
      %v1233 = vld [vmem:[%s209 + $0xac] sm:$0xf]
      %v1234 = vld [vmem:[%s209 + $0xb0] sm:$0xf]
      %v1235 = vld [vmem:[%s209 + $0xb4] sm:$0xf]
      %v1236 = vld [vmem:[%s209 + $0xb8] sm:$0xf]
      %v1237 = vld [vmem:[%s209 + $0xbc] sm:$0xf]
      %v1254 = vunpack.c.l.b16 %v1222
      %v1255 = vunpack.c.l.b16 %v1223
      %v1256 = vunpack.c.l.b16 %v1224
      %v1257 = vunpack.c.l.b16 %v1225
      %v1258 = vunpack.c.l.b16 %v1226
      %v1259 = vunpack.c.l.b16 %v1227
      %v1260 = vunpack.c.l.b16 %v1228
      %v1261 = vunpack.c.l.b16 %v1229
      %v1262 = vunpack.c.l.b16 %v1230
      %v1263 = vunpack.c.l.b16 %v1231
      %v1264 = vunpack.c.l.b16 %v1232
      %v1265 = vunpack.c.l.b16 %v1233
      %v1266 = vunpack.c.l.b16 %v1234
      %v1267 = vunpack.c.l.b16 %v1235
      %v1268 = vunpack.c.l.b16 %v1236
      %v1269 = vunpack.c.l.b16 %v1237
      %v1270 = vpack.c.b16 %v1255, %v1254
      %v1271 = vpack.c.b16 %v1257, %v1256
      %v1272 = vpack.c.b16 %v1259, %v1258
      %v1273 = vpack.c.b16 %v1261, %v1260
      %v1274 = vpack.c.b16 %v1263, %v1262
      %v1275 = vpack.c.b16 %v1265, %v1264
      %v1276 = vpack.c.b16 %v1267, %v1266
      %v1277 = vpack.c.b16 %v1269, %v1268
      %v1279 = vsel %vm293, %v1270, 0
      %v1282 = vsel %vm293, %v1271, 0
      %v1285 = vsel %vm293, %v1272, 0
      %v1288 = vsel %vm293, %v1273, 0
      %v1291 = vsel %vm293, %v1274, 0
      %v1294 = vsel %vm293, %v1275, 0
      %v1297 = vsel %vm293, %v1276, 0
      %v1300 = vsel %vm293, %v1277, 0
      %1302 = vmatprep.subr.bf16.mxu0 0
      %1303 = vmatpush1.bf16.msra.mxu0 0
      %1304 = vmatprep.subr.bf16.mxu0 0
      %1305 = vmatpush1.bf16.msra.mxu0 0
      %1306 = vmatprep.subr.bf16.mxu0 0
      %1307 = vmatpush1.bf16.msra.mxu0 0
      %1308 = vmatprep.subr.bf16.mxu0 0
      %1309 = vmatpush1.bf16.msra.mxu0 0
      %1310 = vmatprep.subr.bf16.mxu0 0
      %1311 = vmatpush1.bf16.msra.mxu0 0
      %1312 = vmatprep.subr.bf16.mxu0 0
      %1313 = vmatpush1.bf16.msra.mxu0 0
      %1314 = vmatprep.subr.bf16.mxu0 0
      %1315 = vmatpush1.bf16.msra.mxu0 0
      %1316 = vmatprep.subr.bf16.mxu0 0
      %1317 = vmatpush1.bf16.msra.mxu0 %v291
      %1318 = vmatprep.subr.bf16.mxu0 0
      %1319 = vmatpush2.bf16.msra.mxu0 0
      %1320 = vmatprep.subr.bf16.mxu0 0
      %1321 = vmatpush2.bf16.msra.mxu0 0
      %1322 = vmatprep.subr.bf16.mxu0 0
      %1323 = vmatpush2.bf16.msra.mxu0 0
      %1324 = vmatprep.subr.bf16.mxu0 0
      %1325 = vmatpush2.bf16.msra.mxu0 0
      %1326 = vmatprep.subr.bf16.mxu0 0
      %1327 = vmatpush2.bf16.msra.mxu0 0
      %1328 = vmatprep.subr.bf16.mxu0 0
      %1329 = vmatpush2.bf16.msra.mxu0 0
      %1330 = vmatprep.subr.bf16.mxu0 0
      %1331 = vmatpush2.bf16.msra.mxu0 0
      %1332 = vmatprep.subr.bf16.mxu0 0
      %1333 = vmatpush2.bf16.msra.mxu0 0
      %1334 = vmatprep.mubr.bf16.mxu0 0
      %1335 = vmatmul.mubr.bf16.gmra.mxu0 %v1279
      %v1336 = vpop.f32.mrf.mxu0
      %v1337 = vadd.f32 0.0, %v1336
      %v1338 = vpop.f32.mrf.mxu0
      %v1339 = vpop.f32.mrf.mxu0
      %v1340 = vadd.f32 0.0, %v1339
      %v1341 = vpop.f32.mrf.mxu0
      %1342 = vmatprep.mubr.bf16.mxu0 0
      %1343 = vmatmul.mubr.bf16.gmra.mxu0 %v1282
      %v1344 = vpop.f32.mrf.mxu0
      %v1345 = vadd.f32 0.0, %v1344
      %v1346 = vpop.f32.mrf.mxu0
      %v1347 = vpop.f32.mrf.mxu0
      %v1348 = vadd.f32 0.0, %v1347
      %v1349 = vpop.f32.mrf.mxu0
      %1350 = vmatprep.mubr.bf16.mxu0 0
      %1351 = vmatmul.mubr.bf16.gmra.mxu0 %v1285
      %v1352 = vpop.f32.mrf.mxu0
      %v1353 = vadd.f32 0.0, %v1352
      %v1354 = vpop.f32.mrf.mxu0
      %v1355 = vpop.f32.mrf.mxu0
      %v1356 = vadd.f32 0.0, %v1355
      %v1357 = vpop.f32.mrf.mxu0
      %1358 = vmatprep.mubr.bf16.mxu0 0
      %1359 = vmatmul.mubr.bf16.gmra.mxu0 %v1288
      %v1360 = vpop.f32.mrf.mxu0
      %v1361 = vadd.f32 0.0, %v1360
      %v1362 = vpop.f32.mrf.mxu0
      %v1363 = vpop.f32.mrf.mxu0
      %v1364 = vadd.f32 0.0, %v1363
      %v1365 = vpop.f32.mrf.mxu0
      %1366 = vmatprep.mubr.bf16.mxu0 0
      %1367 = vmatmul.mubr.bf16.gmra.mxu0 %v1291
      %v1368 = vpop.f32.mrf.mxu0
      %v1369 = vadd.f32 0.0, %v1368
      %v1370 = vpop.f32.mrf.mxu0
      %v1371 = vpop.f32.mrf.mxu0
      %v1372 = vadd.f32 0.0, %v1371
      %v1373 = vpop.f32.mrf.mxu0
      %1374 = vmatprep.mubr.bf16.mxu0 0
      %1375 = vmatmul.mubr.bf16.gmra.mxu0 %v1294
      %v1376 = vpop.f32.mrf.mxu0
      %v1377 = vadd.f32 0.0, %v1376
      %v1378 = vpop.f32.mrf.mxu0
      %v1379 = vpop.f32.mrf.mxu0
      %v1380 = vadd.f32 0.0, %v1379
      %v1381 = vpop.f32.mrf.mxu0
      %1382 = vmatprep.mubr.bf16.mxu0 0
      %1383 = vmatmul.mubr.bf16.gmra.mxu0 %v1297
      %v1384 = vpop.f32.mrf.mxu0
      %v1385 = vadd.f32 0.0, %v1384
      %v1386 = vpop.f32.mrf.mxu0
      %v1387 = vpop.f32.mrf.mxu0
      %v1388 = vadd.f32 0.0, %v1387
      %v1389 = vpop.f32.mrf.mxu0
      %1390 = vmatprep.mubr.bf16.mxu0 0
      %1391 = vmatmul.mubr.bf16.gmra.mxu0 %v1300
      %v1392 = vpop.f32.mrf.mxu0
      %v1393 = vadd.f32 0.0, %v1392
      %v1394 = vpop.f32.mrf.mxu0
      %v1395 = vpop.f32.mrf.mxu0
      %v1396 = vadd.f32 0.0, %v1395
      %v1397 = vpop.f32.mrf.mxu0
      %1398 = vdwg.mxu0
      %v1399 = vmax.f32 %v1337, 0.0
      %v1400 = vmax.f32 %v1340, 0.0
      %v1401 = vmax.f32 %v1345, 0.0
      %v1402 = vmax.f32 %v1348, 0.0
      %v1403 = vmax.f32 %v1353, 0.0
      %v1404 = vmax.f32 %v1356, 0.0
      %v1405 = vmax.f32 %v1361, 0.0
      %v1406 = vmax.f32 %v1364, 0.0
      %v1407 = vmax.f32 %v1369, 0.0
      %v1408 = vmax.f32 %v1372, 0.0
      %v1409 = vmax.f32 %v1377, 0.0
      %v1410 = vmax.f32 %v1380, 0.0
      %v1411 = vmax.f32 %v1385, 0.0
      %v1412 = vmax.f32 %v1388, 0.0
      %v1413 = vmax.f32 %v1393, 0.0
      %v1414 = vmax.f32 %v1396, 0.0
      %v1415 = vpack.c.bf16 %v1400, %v1399
      %v1416 = vpack.c.bf16 %v1402, %v1401
      %v1417 = vpack.c.bf16 %v1404, %v1403
      %v1418 = vpack.c.bf16 %v1406, %v1405
      %v1419 = vpack.c.bf16 %v1408, %v1407
      %v1420 = vpack.c.bf16 %v1410, %v1409
      %v1421 = vpack.c.bf16 %v1412, %v1411
      %v1422 = vpack.c.bf16 %v1414, %v1413
      %v1424 = vsel %vm454, %v1415, 0
      %v1427 = vsel %vm454, %v1416, 0
      %v1430 = vsel %vm454, %v1417, 0
      %v1433 = vsel %vm454, %v1418, 0
      %v1436 = vsel %vm454, %v1419, 0
      %v1439 = vsel %vm454, %v1420, 0
      %v1442 = vsel %vm454, %v1421, 0
      %v1445 = vsel %vm454, %v1422, 0
      %1447 = vmatprep.subr.bf16.mxu0 0
      %1448 = vmatpush1.bf16.msra.mxu0 0
      %1449 = vmatprep.subr.bf16.mxu0 0
      %1450 = vmatpush1.bf16.msra.mxu0 0
      %1451 = vmatprep.subr.bf16.mxu0 0
      %1452 = vmatpush1.bf16.msra.mxu0 0
      %1453 = vmatprep.subr.bf16.mxu0 0
      %1454 = vmatpush1.bf16.msra.mxu0 0
      %1455 = vmatprep.subr.bf16.mxu0 0
      %1456 = vmatpush1.bf16.msra.mxu0 0
      %1457 = vmatprep.subr.bf16.mxu0 0
      %1458 = vmatpush1.bf16.msra.mxu0 %v481
      %1459 = vmatprep.subr.bf16.mxu0 0
      %1460 = vmatpush1.bf16.msra.mxu0 %v450
      %1461 = vmatprep.subr.bf16.mxu0 0
      %1462 = vmatpush1.bf16.msra.mxu0 %v449
      %1463 = vmatprep.subr.bf16.mxu0 0
      %1464 = vmatpush2.bf16.msra.mxu0 0
      %1465 = vmatprep.subr.bf16.mxu0 0
      %1466 = vmatpush2.bf16.msra.mxu0 0
      %1467 = vmatprep.subr.bf16.mxu0 0
      %1468 = vmatpush2.bf16.msra.mxu0 0
      %1469 = vmatprep.subr.bf16.mxu0 0
      %1470 = vmatpush2.bf16.msra.mxu0 0
      %1471 = vmatprep.subr.bf16.mxu0 0
      %1472 = vmatpush2.bf16.msra.mxu0 0
      %1473 = vmatprep.subr.bf16.mxu0 0
      %1474 = vmatpush2.bf16.msra.mxu0 0
      %1475 = vmatprep.subr.bf16.mxu0 0
      %1476 = vmatpush2.bf16.msra.mxu0 0
      %1477 = vmatprep.subr.bf16.mxu0 0
      %1478 = vmatpush2.bf16.msra.mxu0 0
      %1479 = vmatprep.mubr.bf16.mxu0 0
      %1480 = vmatmul.mubr.bf16.gmra.mxu0 %v1424
      %v1481 = vpop.f32.mrf.mxu0
      %v1482 = vadd.f32 0.0, %v1481
      %v1483 = vpop.f32.mrf.mxu0
      %v1484 = vpop.f32.mrf.mxu0
      %v1485 = vadd.f32 0.0, %v1484
      %v1486 = vpop.f32.mrf.mxu0
      %1487 = vmatprep.mubr.bf16.mxu0 0
      %1488 = vmatmul.mubr.bf16.gmra.mxu0 %v1427
      %v1489 = vpop.f32.mrf.mxu0
      %v1490 = vadd.f32 0.0, %v1489
      %v1491 = vpop.f32.mrf.mxu0
      %v1492 = vpop.f32.mrf.mxu0
      %v1493 = vadd.f32 0.0, %v1492
      %v1494 = vpop.f32.mrf.mxu0
      %1495 = vmatprep.mubr.bf16.mxu0 0
      %1496 = vmatmul.mubr.bf16.gmra.mxu0 %v1430
      %v1497 = vpop.f32.mrf.mxu0
      %v1498 = vadd.f32 0.0, %v1497
      %v1499 = vpop.f32.mrf.mxu0
      %v1500 = vpop.f32.mrf.mxu0
      %v1501 = vadd.f32 0.0, %v1500
      %v1502 = vpop.f32.mrf.mxu0
      %1503 = vmatprep.mubr.bf16.mxu0 0
      %1504 = vmatmul.mubr.bf16.gmra.mxu0 %v1433
      %v1505 = vpop.f32.mrf.mxu0
      %v1506 = vadd.f32 0.0, %v1505
      %v1507 = vpop.f32.mrf.mxu0
      %v1508 = vpop.f32.mrf.mxu0
      %v1509 = vadd.f32 0.0, %v1508
      %v1510 = vpop.f32.mrf.mxu0
      %1511 = vmatprep.mubr.bf16.mxu0 0
      %1512 = vmatmul.mubr.bf16.gmra.mxu0 %v1436
      %v1513 = vpop.f32.mrf.mxu0
      %v1514 = vadd.f32 0.0, %v1513
      %v1515 = vpop.f32.mrf.mxu0
      %v1516 = vpop.f32.mrf.mxu0
      %v1517 = vadd.f32 0.0, %v1516
      %v1518 = vpop.f32.mrf.mxu0
      %1519 = vmatprep.mubr.bf16.mxu0 0
      %1520 = vmatmul.mubr.bf16.gmra.mxu0 %v1439
      %v1521 = vpop.f32.mrf.mxu0
      %v1522 = vadd.f32 0.0, %v1521
      %v1523 = vpop.f32.mrf.mxu0
      %v1524 = vpop.f32.mrf.mxu0
      %v1525 = vadd.f32 0.0, %v1524
      %v1526 = vpop.f32.mrf.mxu0
      %1527 = vmatprep.mubr.bf16.mxu0 0
      %1528 = vmatmul.mubr.bf16.gmra.mxu0 %v1442
      %v1529 = vpop.f32.mrf.mxu0
      %v1530 = vadd.f32 0.0, %v1529
      %v1531 = vpop.f32.mrf.mxu0
      %v1532 = vpop.f32.mrf.mxu0
      %v1533 = vadd.f32 0.0, %v1532
      %v1534 = vpop.f32.mrf.mxu0
      %1535 = vmatprep.mubr.bf16.mxu0 0
      %1536 = vmatmul.mubr.bf16.gmra.mxu0 %v1445
      %v1537 = vpop.f32.mrf.mxu0
      %v1538 = vadd.f32 0.0, %v1537
      %v1539 = vpop.f32.mrf.mxu0
      %v1540 = vpop.f32.mrf.mxu0
      %v1541 = vadd.f32 0.0, %v1540
      %v1542 = vpop.f32.mrf.mxu0
      %1543 = vdwg.mxu0
      %v1544 = vmax.f32 %v1482, 0.0
      %v1545 = vmax.f32 %v1485, 0.0
      %v1546 = vmax.f32 %v1490, 0.0
      %v1547 = vmax.f32 %v1493, 0.0
      %v1548 = vmax.f32 %v1498, 0.0
      %v1549 = vmax.f32 %v1501, 0.0
      %v1550 = vmax.f32 %v1506, 0.0
      %v1551 = vmax.f32 %v1509, 0.0
      %v1552 = vmax.f32 %v1514, 0.0
      %v1553 = vmax.f32 %v1517, 0.0
      %v1554 = vmax.f32 %v1522, 0.0
      %v1555 = vmax.f32 %v1525, 0.0
      %v1556 = vmax.f32 %v1530, 0.0
      %v1557 = vmax.f32 %v1533, 0.0
      %v1558 = vmax.f32 %v1538, 0.0
      %v1559 = vmax.f32 %v1541, 0.0
      %v1560 = vld [vmem:[%s215 + $0x100] sm:$0xff]
      %v1561 = vld [vmem:[%s215 + $0x108] sm:$0xff]
      %v1562 = vld [vmem:[%s215 + $0x110] sm:$0xff]
      %v1563 = vld [vmem:[%s215 + $0x118] sm:$0xff]
      %v1564 = vld [vmem:[%s215 + $0x120] sm:$0xff]
      %v1565 = vld [vmem:[%s215 + $0x128] sm:$0xff]
      %v1566 = vld [vmem:[%s215 + $0x130] sm:$0xff]
      %v1567 = vld [vmem:[%s215 + $0x138] sm:$0xff]
      %v1568 = vld [vmem:[%s215 + $0x140] sm:$0xff]
      %v1569 = vld [vmem:[%s215 + $0x148] sm:$0xff]
      %v1570 = vld [vmem:[%s215 + $0x150] sm:$0xff]
      %v1571 = vld [vmem:[%s215 + $0x158] sm:$0xff]
      %v1572 = vld [vmem:[%s215 + $0x160] sm:$0xff]
      %v1573 = vld [vmem:[%s215 + $0x168] sm:$0xff]
      %v1574 = vld [vmem:[%s215 + $0x170] sm:$0xff]
      %v1575 = vld [vmem:[%s215 + $0x178] sm:$0xff]
      %vm1576 = vcmp.gt.s32.totalorder %v1560, 0
      %vm1577 = vcmp.gt.s32.totalorder %v1561, 0
      %vm1578 = vcmp.gt.s32.totalorder %v1562, 0
      %vm1579 = vcmp.gt.s32.totalorder %v1563, 0
      %vm1580 = vcmp.gt.s32.totalorder %v1564, 0
      %vm1581 = vcmp.gt.s32.totalorder %v1565, 0
      %vm1582 = vcmp.gt.s32.totalorder %v1566, 0
      %vm1583 = vcmp.gt.s32.totalorder %v1567, 0
      %vm1584 = vcmp.gt.s32.totalorder %v1568, 0
      %vm1585 = vcmp.gt.s32.totalorder %v1569, 0
      %vm1586 = vcmp.gt.s32.totalorder %v1570, 0
      %vm1587 = vcmp.gt.s32.totalorder %v1571, 0
      %vm1588 = vcmp.gt.s32.totalorder %v1572, 0
      %vm1589 = vcmp.gt.s32.totalorder %v1573, 0
      %vm1590 = vcmp.gt.s32.totalorder %v1574, 0
      %vm1591 = vcmp.gt.s32.totalorder %v1575, 0
      %v1592 = vsel %vm1576, 1, 0
      %v1593 = vsel %vm1577, 1, 0
      %v1594 = vsel %vm1578, 1, 0
      %v1595 = vsel %vm1579, 1, 0
      %v1596 = vsel %vm1580, 1, 0
      %v1597 = vsel %vm1581, 1, 0
      %v1598 = vsel %vm1582, 1, 0
      %v1599 = vsel %vm1583, 1, 0
      %v1600 = vsel %vm1584, 1, 0
      %v1601 = vsel %vm1585, 1, 0
      %v1602 = vsel %vm1586, 1, 0
      %v1603 = vsel %vm1587, 1, 0
      %v1604 = vsel %vm1588, 1, 0
      %v1605 = vsel %vm1589, 1, 0
      %v1606 = vsel %vm1590, 1, 0
      %v1607 = vsel %vm1591, 1, 0
      %1608 = vset.pattern.permute.xlu0 0
      %1609 = vperm.xlu0 %1608, %v1592
      %v1610 = vpop.permute.xlu0 %1609
      %1611 = vset.pattern.permute.xlu0 0
      %1612 = vperm.xlu0 %1611, %v1593
      %v1613 = vpop.permute.xlu0 %1612
      %1614 = vset.pattern.permute.xlu0 0
      %1615 = vperm.xlu0 %1614, %v1594
      %v1616 = vpop.permute.xlu0 %1615
      %1617 = vset.pattern.permute.xlu0 0
      %1618 = vperm.xlu0 %1617, %v1595
      %v1619 = vpop.permute.xlu0 %1618
      %1620 = vset.pattern.permute.xlu0 0
      %1621 = vperm.xlu0 %1620, %v1596
      %v1622 = vpop.permute.xlu0 %1621
      %1623 = vset.pattern.permute.xlu0 0
      %1624 = vperm.xlu0 %1623, %v1597
      %v1625 = vpop.permute.xlu0 %1624
      %1626 = vset.pattern.permute.xlu0 0
      %1627 = vperm.xlu0 %1626, %v1598
      %v1628 = vpop.permute.xlu0 %1627
      %1629 = vset.pattern.permute.xlu0 0
      %1630 = vperm.xlu0 %1629, %v1599
      %v1631 = vpop.permute.xlu0 %1630
      %1632 = vset.pattern.permute.xlu0 0
      %1633 = vperm.xlu0 %1632, %v1600
      %v1634 = vpop.permute.xlu0 %1633
      %1635 = vset.pattern.permute.xlu0 0
      %1636 = vperm.xlu0 %1635, %v1601
      %v1637 = vpop.permute.xlu0 %1636
      %1638 = vset.pattern.permute.xlu0 0
      %1639 = vperm.xlu0 %1638, %v1602
      %v1640 = vpop.permute.xlu0 %1639
      %1641 = vset.pattern.permute.xlu0 0
      %1642 = vperm.xlu0 %1641, %v1603
      %v1643 = vpop.permute.xlu0 %1642
      %1644 = vset.pattern.permute.xlu0 0
      %1645 = vperm.xlu0 %1644, %v1604
      %v1646 = vpop.permute.xlu0 %1645
      %1647 = vset.pattern.permute.xlu0 0
      %1648 = vperm.xlu0 %1647, %v1605
      %v1649 = vpop.permute.xlu0 %1648
      %1650 = vset.pattern.permute.xlu0 0
      %1651 = vperm.xlu0 %1650, %v1606
      %v1652 = vpop.permute.xlu0 %1651
      %1653 = vset.pattern.permute.xlu0 0
      %1654 = vperm.xlu0 %1653, %v1607
      %v1655 = vpop.permute.xlu0 %1654
      %vm1656 = vcmp.eq.s32.totalorder %v1610, 1
      %vm1657 = vcmp.eq.s32.totalorder %v1613, 1
      %vm1658 = vcmp.eq.s32.totalorder %v1616, 1
      %vm1659 = vcmp.eq.s32.totalorder %v1619, 1
      %vm1660 = vcmp.eq.s32.totalorder %v1622, 1
      %vm1661 = vcmp.eq.s32.totalorder %v1625, 1
      %vm1662 = vcmp.eq.s32.totalorder %v1628, 1
      %vm1663 = vcmp.eq.s32.totalorder %v1631, 1
      %vm1664 = vcmp.eq.s32.totalorder %v1634, 1
      %vm1665 = vcmp.eq.s32.totalorder %v1637, 1
      %vm1666 = vcmp.eq.s32.totalorder %v1640, 1
      %vm1667 = vcmp.eq.s32.totalorder %v1643, 1
      %vm1668 = vcmp.eq.s32.totalorder %v1646, 1
      %vm1669 = vcmp.eq.s32.totalorder %v1649, 1
      %vm1670 = vcmp.eq.s32.totalorder %v1652, 1
      %vm1671 = vcmp.eq.s32.totalorder %v1655, 1
      %v1672 = vsel %vm1656, %v1544, 0.0
      %v1673 = vsel %vm1657, %v1545, 0.0
      %v1674 = vsel %vm1658, %v1546, 0.0
      %v1675 = vsel %vm1659, %v1547, 0.0
      %v1676 = vsel %vm1660, %v1548, 0.0
      %v1677 = vsel %vm1661, %v1549, 0.0
      %v1678 = vsel %vm1662, %v1550, 0.0
      %v1679 = vsel %vm1663, %v1551, 0.0
      %v1680 = vsel %vm1664, %v1552, 0.0
      %v1681 = vsel %vm1665, %v1553, 0.0
      %v1682 = vsel %vm1666, %v1554, 0.0
      %v1683 = vsel %vm1667, %v1555, 0.0
      %v1684 = vsel %vm1668, %v1556, 0.0
      %v1685 = vsel %vm1669, %v1557, 0.0
      %v1686 = vsel %vm1670, %v1558, 0.0
      %v1687 = vsel %vm1671, %v1559, 0.0
      %v1688 = vmax.f32 %v1218, %v1672
      %v1689 = vmax.f32 %v1219, %v1673
      %v1690 = vmax.f32 %v1220, %v1674
      %v1691 = vmax.f32 %v1221, %v1675
      %v1692 = vmax.f32 %v1688, %v1676
      %v1693 = vmax.f32 %v1689, %v1677
      %v1694 = vmax.f32 %v1690, %v1678
      %v1695 = vmax.f32 %v1691, %v1679
      %v1696 = vmax.f32 %v1692, %v1680
      %v1697 = vmax.f32 %v1693, %v1681
      %v1698 = vmax.f32 %v1694, %v1682
      %v1699 = vmax.f32 %v1695, %v1683
      %v1700 = vmax.f32 %v1696, %v1684
      %v1701 = vmax.f32 %v1697, %v1685
      %v1702 = vmax.f32 %v1698, %v1686
      %v1703 = vmax.f32 %v1699, %v1687
      %v1704 = vld [vmem:[%s209 + $0xc0] sm:$0xf]
      %v1705 = vld [vmem:[%s209 + $0xc4] sm:$0xf]
      %v1706 = vld [vmem:[%s209 + $0xc8] sm:$0xf]
      %v1707 = vld [vmem:[%s209 + $0xcc] sm:$0xf]
      %v1708 = vld [vmem:[%s209 + $0xd0] sm:$0xf]
      %v1709 = vld [vmem:[%s209 + $0xd4] sm:$0xf]
      %v1710 = vld [vmem:[%s209 + $0xd8] sm:$0xf]
      %v1711 = vld [vmem:[%s209 + $0xdc] sm:$0xf]
      %v1712 = vld [vmem:[%s209 + $0xe0] sm:$0xf]
      %v1713 = vld [vmem:[%s209 + $0xe4] sm:$0xf]
      %v1714 = vld [vmem:[%s209 + $0xe8] sm:$0xf]
      %v1715 = vld [vmem:[%s209 + $0xec] sm:$0xf]
      %v1716 = vld [vmem:[%s209 + $0xf0] sm:$0xf]
      %v1717 = vld [vmem:[%s209 + $0xf4] sm:$0xf]
      %v1718 = vld [vmem:[%s209 + $0xf8] sm:$0xf]
      %v1719 = vld [vmem:[%s209 + $0xfc] sm:$0xf]
      %v1736 = vunpack.c.l.b16 %v1704
      %v1737 = vunpack.c.l.b16 %v1705
      %v1738 = vunpack.c.l.b16 %v1706
      %v1739 = vunpack.c.l.b16 %v1707
      %v1740 = vunpack.c.l.b16 %v1708
      %v1741 = vunpack.c.l.b16 %v1709
      %v1742 = vunpack.c.l.b16 %v1710
      %v1743 = vunpack.c.l.b16 %v1711
      %v1744 = vunpack.c.l.b16 %v1712
      %v1745 = vunpack.c.l.b16 %v1713
      %v1746 = vunpack.c.l.b16 %v1714
      %v1747 = vunpack.c.l.b16 %v1715
      %v1748 = vunpack.c.l.b16 %v1716
      %v1749 = vunpack.c.l.b16 %v1717
      %v1750 = vunpack.c.l.b16 %v1718
      %v1751 = vunpack.c.l.b16 %v1719
      %v1752 = vpack.c.b16 %v1737, %v1736
      %v1753 = vpack.c.b16 %v1739, %v1738
      %v1754 = vpack.c.b16 %v1741, %v1740
      %v1755 = vpack.c.b16 %v1743, %v1742
      %v1756 = vpack.c.b16 %v1745, %v1744
      %v1757 = vpack.c.b16 %v1747, %v1746
      %v1758 = vpack.c.b16 %v1749, %v1748
      %v1759 = vpack.c.b16 %v1751, %v1750
      %v1761 = vsel %vm293, %v1752, 0
      %v1764 = vsel %vm293, %v1753, 0
      %v1767 = vsel %vm293, %v1754, 0
      %v1770 = vsel %vm293, %v1755, 0
      %v1773 = vsel %vm293, %v1756, 0
      %v1776 = vsel %vm293, %v1757, 0
      %v1779 = vsel %vm293, %v1758, 0
      %v1782 = vsel %vm293, %v1759, 0
      %1784 = vmatprep.subr.bf16.mxu0 0
      %1785 = vmatpush1.bf16.msra.mxu0 0
      %1786 = vmatprep.subr.bf16.mxu0 0
      %1787 = vmatpush1.bf16.msra.mxu0 0
      %1788 = vmatprep.subr.bf16.mxu0 0
      %1789 = vmatpush1.bf16.msra.mxu0 0
      %1790 = vmatprep.subr.bf16.mxu0 0
      %1791 = vmatpush1.bf16.msra.mxu0 0
      %1792 = vmatprep.subr.bf16.mxu0 0
      %1793 = vmatpush1.bf16.msra.mxu0 0
      %1794 = vmatprep.subr.bf16.mxu0 0
      %1795 = vmatpush1.bf16.msra.mxu0 0
      %1796 = vmatprep.subr.bf16.mxu0 0
      %1797 = vmatpush1.bf16.msra.mxu0 0
      %1798 = vmatprep.subr.bf16.mxu0 0
      %1799 = vmatpush1.bf16.msra.mxu0 %v291
      %1800 = vmatprep.subr.bf16.mxu0 0
      %1801 = vmatpush2.bf16.msra.mxu0 0
      %1802 = vmatprep.subr.bf16.mxu0 0
      %1803 = vmatpush2.bf16.msra.mxu0 0
      %1804 = vmatprep.subr.bf16.mxu0 0
      %1805 = vmatpush2.bf16.msra.mxu0 0
      %1806 = vmatprep.subr.bf16.mxu0 0
      %1807 = vmatpush2.bf16.msra.mxu0 0
      %1808 = vmatprep.subr.bf16.mxu0 0
      %1809 = vmatpush2.bf16.msra.mxu0 0
      %1810 = vmatprep.subr.bf16.mxu0 0
      %1811 = vmatpush2.bf16.msra.mxu0 0
      %1812 = vmatprep.subr.bf16.mxu0 0
      %1813 = vmatpush2.bf16.msra.mxu0 0
      %1814 = vmatprep.subr.bf16.mxu0 0
      %1815 = vmatpush2.bf16.msra.mxu0 0
      %1816 = vmatprep.mubr.bf16.mxu0 0
      %1817 = vmatmul.mubr.bf16.gmra.mxu0 %v1761
      %v1818 = vpop.f32.mrf.mxu0
      %v1819 = vadd.f32 0.0, %v1818
      %v1820 = vpop.f32.mrf.mxu0
      %v1821 = vpop.f32.mrf.mxu0
      %v1822 = vadd.f32 0.0, %v1821
      %v1823 = vpop.f32.mrf.mxu0
      %1824 = vmatprep.mubr.bf16.mxu0 0
      %1825 = vmatmul.mubr.bf16.gmra.mxu0 %v1764
      %v1826 = vpop.f32.mrf.mxu0
      %v1827 = vadd.f32 0.0, %v1826
      %v1828 = vpop.f32.mrf.mxu0
      %v1829 = vpop.f32.mrf.mxu0
      %v1830 = vadd.f32 0.0, %v1829
      %v1831 = vpop.f32.mrf.mxu0
      %1832 = vmatprep.mubr.bf16.mxu0 0
      %1833 = vmatmul.mubr.bf16.gmra.mxu0 %v1767
      %v1834 = vpop.f32.mrf.mxu0
      %v1835 = vadd.f32 0.0, %v1834
      %v1836 = vpop.f32.mrf.mxu0
      %v1837 = vpop.f32.mrf.mxu0
      %v1838 = vadd.f32 0.0, %v1837
      %v1839 = vpop.f32.mrf.mxu0
      %1840 = vmatprep.mubr.bf16.mxu0 0
      %1841 = vmatmul.mubr.bf16.gmra.mxu0 %v1770
      %v1842 = vpop.f32.mrf.mxu0
      %v1843 = vadd.f32 0.0, %v1842
      %v1844 = vpop.f32.mrf.mxu0
      %v1845 = vpop.f32.mrf.mxu0
      %v1846 = vadd.f32 0.0, %v1845
      %v1847 = vpop.f32.mrf.mxu0
      %1848 = vmatprep.mubr.bf16.mxu0 0
      %1849 = vmatmul.mubr.bf16.gmra.mxu0 %v1773
      %v1850 = vpop.f32.mrf.mxu0
      %v1851 = vadd.f32 0.0, %v1850
      %v1852 = vpop.f32.mrf.mxu0
      %v1853 = vpop.f32.mrf.mxu0
      %v1854 = vadd.f32 0.0, %v1853
      %v1855 = vpop.f32.mrf.mxu0
      %1856 = vmatprep.mubr.bf16.mxu0 0
      %1857 = vmatmul.mubr.bf16.gmra.mxu0 %v1776
      %v1858 = vpop.f32.mrf.mxu0
      %v1859 = vadd.f32 0.0, %v1858
      %v1860 = vpop.f32.mrf.mxu0
      %v1861 = vpop.f32.mrf.mxu0
      %v1862 = vadd.f32 0.0, %v1861
      %v1863 = vpop.f32.mrf.mxu0
      %1864 = vmatprep.mubr.bf16.mxu0 0
      %1865 = vmatmul.mubr.bf16.gmra.mxu0 %v1779
      %v1866 = vpop.f32.mrf.mxu0
      %v1867 = vadd.f32 0.0, %v1866
      %v1868 = vpop.f32.mrf.mxu0
      %v1869 = vpop.f32.mrf.mxu0
      %v1870 = vadd.f32 0.0, %v1869
      %v1871 = vpop.f32.mrf.mxu0
      %1872 = vmatprep.mubr.bf16.mxu0 0
      %1873 = vmatmul.mubr.bf16.gmra.mxu0 %v1782
      %v1874 = vpop.f32.mrf.mxu0
      %v1875 = vadd.f32 0.0, %v1874
      %v1876 = vpop.f32.mrf.mxu0
      %v1877 = vpop.f32.mrf.mxu0
      %v1878 = vadd.f32 0.0, %v1877
      %v1879 = vpop.f32.mrf.mxu0
      %1880 = vdwg.mxu0
      %v1881 = vmax.f32 %v1819, 0.0
      %v1882 = vmax.f32 %v1822, 0.0
      %v1883 = vmax.f32 %v1827, 0.0
      %v1884 = vmax.f32 %v1830, 0.0
      %v1885 = vmax.f32 %v1835, 0.0
      %v1886 = vmax.f32 %v1838, 0.0
      %v1887 = vmax.f32 %v1843, 0.0
      %v1888 = vmax.f32 %v1846, 0.0
      %v1889 = vmax.f32 %v1851, 0.0
      %v1890 = vmax.f32 %v1854, 0.0
      %v1891 = vmax.f32 %v1859, 0.0
      %v1892 = vmax.f32 %v1862, 0.0
      %v1893 = vmax.f32 %v1867, 0.0
      %v1894 = vmax.f32 %v1870, 0.0
      %v1895 = vmax.f32 %v1875, 0.0
      %v1896 = vmax.f32 %v1878, 0.0
      %v1897 = vpack.c.bf16 %v1882, %v1881
      %v1898 = vpack.c.bf16 %v1884, %v1883
      %v1899 = vpack.c.bf16 %v1886, %v1885
      %v1900 = vpack.c.bf16 %v1888, %v1887
      %v1901 = vpack.c.bf16 %v1890, %v1889
      %v1902 = vpack.c.bf16 %v1892, %v1891
      %v1903 = vpack.c.bf16 %v1894, %v1893
      %v1904 = vpack.c.bf16 %v1896, %v1895
      %v1906 = vsel %vm454, %v1897, 0
      %v1909 = vsel %vm454, %v1898, 0
      %v1912 = vsel %vm454, %v1899, 0
      %v1915 = vsel %vm454, %v1900, 0
      %v1918 = vsel %vm454, %v1901, 0
      %v1921 = vsel %vm454, %v1902, 0
      %v1924 = vsel %vm454, %v1903, 0
      %v1927 = vsel %vm454, %v1904, 0
      %1929 = vmatprep.subr.bf16.mxu0 0
      %1930 = vmatpush1.bf16.msra.mxu0 0
      %1931 = vmatprep.subr.bf16.mxu0 0
      %1932 = vmatpush1.bf16.msra.mxu0 0
      %1933 = vmatprep.subr.bf16.mxu0 0
      %1934 = vmatpush1.bf16.msra.mxu0 0
      %1935 = vmatprep.subr.bf16.mxu0 0
      %1936 = vmatpush1.bf16.msra.mxu0 0
      %1937 = vmatprep.subr.bf16.mxu0 0
      %1938 = vmatpush1.bf16.msra.mxu0 0
      %1939 = vmatprep.subr.bf16.mxu0 0
      %1940 = vmatpush1.bf16.msra.mxu0 %v481
      %1941 = vmatprep.subr.bf16.mxu0 0
      %1942 = vmatpush1.bf16.msra.mxu0 %v450
      %1943 = vmatprep.subr.bf16.mxu0 0
      %1944 = vmatpush1.bf16.msra.mxu0 %v449
      %1945 = vmatprep.subr.bf16.mxu0 0
      %1946 = vmatpush2.bf16.msra.mxu0 0
      %1947 = vmatprep.subr.bf16.mxu0 0
      %1948 = vmatpush2.bf16.msra.mxu0 0
      %1949 = vmatprep.subr.bf16.mxu0 0
      %1950 = vmatpush2.bf16.msra.mxu0 0
      %1951 = vmatprep.subr.bf16.mxu0 0
      %1952 = vmatpush2.bf16.msra.mxu0 0
      %1953 = vmatprep.subr.bf16.mxu0 0
      %1954 = vmatpush2.bf16.msra.mxu0 0
      %1955 = vmatprep.subr.bf16.mxu0 0
      %1956 = vmatpush2.bf16.msra.mxu0 0
      %1957 = vmatprep.subr.bf16.mxu0 0
      %1958 = vmatpush2.bf16.msra.mxu0 0
      %1959 = vmatprep.subr.bf16.mxu0 0
      %1960 = vmatpush2.bf16.msra.mxu0 0
      %1961 = vmatprep.mubr.bf16.mxu0 0
      %1962 = vmatmul.mubr.bf16.gmra.mxu0 %v1906
      %v1963 = vpop.f32.mrf.mxu0
      %v1964 = vadd.f32 0.0, %v1963
      %v1965 = vpop.f32.mrf.mxu0
      %v1966 = vpop.f32.mrf.mxu0
      %v1967 = vadd.f32 0.0, %v1966
      %v1968 = vpop.f32.mrf.mxu0
      %1969 = vmatprep.mubr.bf16.mxu0 0
      %1970 = vmatmul.mubr.bf16.gmra.mxu0 %v1909
      %v1971 = vpop.f32.mrf.mxu0
      %v1972 = vadd.f32 0.0, %v1971
      %v1973 = vpop.f32.mrf.mxu0
      %v1974 = vpop.f32.mrf.mxu0
      %v1975 = vadd.f32 0.0, %v1974
      %v1976 = vpop.f32.mrf.mxu0
      %1977 = vmatprep.mubr.bf16.mxu0 0
      %1978 = vmatmul.mubr.bf16.gmra.mxu0 %v1912
      %v1979 = vpop.f32.mrf.mxu0
      %v1980 = vadd.f32 0.0, %v1979
      %v1981 = vpop.f32.mrf.mxu0
      %v1982 = vpop.f32.mrf.mxu0
      %v1983 = vadd.f32 0.0, %v1982
      %v1984 = vpop.f32.mrf.mxu0
      %1985 = vmatprep.mubr.bf16.mxu0 0
      %1986 = vmatmul.mubr.bf16.gmra.mxu0 %v1915
      %v1987 = vpop.f32.mrf.mxu0
      %v1988 = vadd.f32 0.0, %v1987
      %v1989 = vpop.f32.mrf.mxu0
      %v1990 = vpop.f32.mrf.mxu0
      %v1991 = vadd.f32 0.0, %v1990
      %v1992 = vpop.f32.mrf.mxu0
      %1993 = vmatprep.mubr.bf16.mxu0 0
      %1994 = vmatmul.mubr.bf16.gmra.mxu0 %v1918
      %v1995 = vpop.f32.mrf.mxu0
      %v1996 = vadd.f32 0.0, %v1995
      %v1997 = vpop.f32.mrf.mxu0
      %v1998 = vpop.f32.mrf.mxu0
      %v1999 = vadd.f32 0.0, %v1998
      %v2000 = vpop.f32.mrf.mxu0
      %2001 = vmatprep.mubr.bf16.mxu0 0
      %2002 = vmatmul.mubr.bf16.gmra.mxu0 %v1921
      %v2003 = vpop.f32.mrf.mxu0
      %v2004 = vadd.f32 0.0, %v2003
      %v2005 = vpop.f32.mrf.mxu0
      %v2006 = vpop.f32.mrf.mxu0
      %v2007 = vadd.f32 0.0, %v2006
      %v2008 = vpop.f32.mrf.mxu0
      %2009 = vmatprep.mubr.bf16.mxu0 0
      %2010 = vmatmul.mubr.bf16.gmra.mxu0 %v1924
      %v2011 = vpop.f32.mrf.mxu0
      %v2012 = vadd.f32 0.0, %v2011
      %v2013 = vpop.f32.mrf.mxu0
      %v2014 = vpop.f32.mrf.mxu0
      %v2015 = vadd.f32 0.0, %v2014
      %v2016 = vpop.f32.mrf.mxu0
      %2017 = vmatprep.mubr.bf16.mxu0 0
      %2018 = vmatmul.mubr.bf16.gmra.mxu0 %v1927
      %v2019 = vpop.f32.mrf.mxu0
      %v2020 = vadd.f32 0.0, %v2019
      %v2021 = vpop.f32.mrf.mxu0
      %v2022 = vpop.f32.mrf.mxu0
      %v2023 = vadd.f32 0.0, %v2022
      %v2024 = vpop.f32.mrf.mxu0
      %2025 = vdwg.mxu0
      %v2026 = vmax.f32 %v1964, 0.0
      %v2027 = vmax.f32 %v1967, 0.0
      %v2028 = vmax.f32 %v1972, 0.0
      %v2029 = vmax.f32 %v1975, 0.0
      %v2030 = vmax.f32 %v1980, 0.0
      %v2031 = vmax.f32 %v1983, 0.0
      %v2032 = vmax.f32 %v1988, 0.0
      %v2033 = vmax.f32 %v1991, 0.0
      %v2034 = vmax.f32 %v1996, 0.0
      %v2035 = vmax.f32 %v1999, 0.0
      %v2036 = vmax.f32 %v2004, 0.0
      %v2037 = vmax.f32 %v2007, 0.0
      %v2038 = vmax.f32 %v2012, 0.0
      %v2039 = vmax.f32 %v2015, 0.0
      %v2040 = vmax.f32 %v2020, 0.0
      %v2041 = vmax.f32 %v2023, 0.0
      %v2042 = vld [vmem:[%s215 + $0x180] sm:$0xff]
      %v2043 = vld [vmem:[%s215 + $0x188] sm:$0xff]
      %v2044 = vld [vmem:[%s215 + $0x190] sm:$0xff]
      %v2045 = vld [vmem:[%s215 + $0x198] sm:$0xff]
      %v2046 = vld [vmem:[%s215 + $0x1a0] sm:$0xff]
      %v2047 = vld [vmem:[%s215 + $0x1a8] sm:$0xff]
      %v2048 = vld [vmem:[%s215 + $0x1b0] sm:$0xff]
      %v2049 = vld [vmem:[%s215 + $0x1b8] sm:$0xff]
      %v2050 = vld [vmem:[%s215 + $0x1c0] sm:$0xff]
      %v2051 = vld [vmem:[%s215 + $0x1c8] sm:$0xff]
      %v2052 = vld [vmem:[%s215 + $0x1d0] sm:$0xff]
      %v2053 = vld [vmem:[%s215 + $0x1d8] sm:$0xff]
      %v2054 = vld [vmem:[%s215 + $0x1e0] sm:$0xff]
      %v2055 = vld [vmem:[%s215 + $0x1e8] sm:$0xff]
      %v2056 = vld [vmem:[%s215 + $0x1f0] sm:$0xff]
      %v2057 = vld [vmem:[%s215 + $0x1f8] sm:$0xff]
      %vm2058 = vcmp.gt.s32.totalorder %v2042, 0
      %vm2059 = vcmp.gt.s32.totalorder %v2043, 0
      %vm2060 = vcmp.gt.s32.totalorder %v2044, 0
      %vm2061 = vcmp.gt.s32.totalorder %v2045, 0
      %vm2062 = vcmp.gt.s32.totalorder %v2046, 0
      %vm2063 = vcmp.gt.s32.totalorder %v2047, 0
      %vm2064 = vcmp.gt.s32.totalorder %v2048, 0
      %vm2065 = vcmp.gt.s32.totalorder %v2049, 0
      %vm2066 = vcmp.gt.s32.totalorder %v2050, 0
      %vm2067 = vcmp.gt.s32.totalorder %v2051, 0
      %vm2068 = vcmp.gt.s32.totalorder %v2052, 0
      %vm2069 = vcmp.gt.s32.totalorder %v2053, 0
      %vm2070 = vcmp.gt.s32.totalorder %v2054, 0
      %vm2071 = vcmp.gt.s32.totalorder %v2055, 0
      %vm2072 = vcmp.gt.s32.totalorder %v2056, 0
      %vm2073 = vcmp.gt.s32.totalorder %v2057, 0
      %v2074 = vsel %vm2058, 1, 0
      %v2075 = vsel %vm2059, 1, 0
      %v2076 = vsel %vm2060, 1, 0
      %v2077 = vsel %vm2061, 1, 0
      %v2078 = vsel %vm2062, 1, 0
      %v2079 = vsel %vm2063, 1, 0
      %v2080 = vsel %vm2064, 1, 0
      %v2081 = vsel %vm2065, 1, 0
      %v2082 = vsel %vm2066, 1, 0
      %v2083 = vsel %vm2067, 1, 0
      %v2084 = vsel %vm2068, 1, 0
      %v2085 = vsel %vm2069, 1, 0
      %v2086 = vsel %vm2070, 1, 0
      %v2087 = vsel %vm2071, 1, 0
      %v2088 = vsel %vm2072, 1, 0
      %v2089 = vsel %vm2073, 1, 0
      %2090 = vset.pattern.permute.xlu0 0
      %2091 = vperm.xlu0 %2090, %v2074
      %v2092 = vpop.permute.xlu0 %2091
      %2093 = vset.pattern.permute.xlu0 0
      %2094 = vperm.xlu0 %2093, %v2075
      %v2095 = vpop.permute.xlu0 %2094
      %2096 = vset.pattern.permute.xlu0 0
      %2097 = vperm.xlu0 %2096, %v2076
      %v2098 = vpop.permute.xlu0 %2097
      %2099 = vset.pattern.permute.xlu0 0
      %2100 = vperm.xlu0 %2099, %v2077
      %v2101 = vpop.permute.xlu0 %2100
      %2102 = vset.pattern.permute.xlu0 0
      %2103 = vperm.xlu0 %2102, %v2078
      %v2104 = vpop.permute.xlu0 %2103
      %2105 = vset.pattern.permute.xlu0 0
      %2106 = vperm.xlu0 %2105, %v2079
      %v2107 = vpop.permute.xlu0 %2106
      %2108 = vset.pattern.permute.xlu0 0
      %2109 = vperm.xlu0 %2108, %v2080
      %v2110 = vpop.permute.xlu0 %2109
      %2111 = vset.pattern.permute.xlu0 0
      %2112 = vperm.xlu0 %2111, %v2081
      %v2113 = vpop.permute.xlu0 %2112
      %2114 = vset.pattern.permute.xlu0 0
      %2115 = vperm.xlu0 %2114, %v2082
      %v2116 = vpop.permute.xlu0 %2115
      %2117 = vset.pattern.permute.xlu0 0
      %2118 = vperm.xlu0 %2117, %v2083
      %v2119 = vpop.permute.xlu0 %2118
      %2120 = vset.pattern.permute.xlu0 0
      %2121 = vperm.xlu0 %2120, %v2084
      %v2122 = vpop.permute.xlu0 %2121
      %2123 = vset.pattern.permute.xlu0 0
      %2124 = vperm.xlu0 %2123, %v2085
      %v2125 = vpop.permute.xlu0 %2124
      %2126 = vset.pattern.permute.xlu0 0
      %2127 = vperm.xlu0 %2126, %v2086
      %v2128 = vpop.permute.xlu0 %2127
      %2129 = vset.pattern.permute.xlu0 0
      %2130 = vperm.xlu0 %2129, %v2087
      %v2131 = vpop.permute.xlu0 %2130
      %2132 = vset.pattern.permute.xlu0 0
      %2133 = vperm.xlu0 %2132, %v2088
      %v2134 = vpop.permute.xlu0 %2133
      %2135 = vset.pattern.permute.xlu0 0
      %2136 = vperm.xlu0 %2135, %v2089
      %v2137 = vpop.permute.xlu0 %2136
      %vm2138 = vcmp.eq.s32.totalorder %v2092, 1
      %vm2139 = vcmp.eq.s32.totalorder %v2095, 1
      %vm2140 = vcmp.eq.s32.totalorder %v2098, 1
      %vm2141 = vcmp.eq.s32.totalorder %v2101, 1
      %vm2142 = vcmp.eq.s32.totalorder %v2104, 1
      %vm2143 = vcmp.eq.s32.totalorder %v2107, 1
      %vm2144 = vcmp.eq.s32.totalorder %v2110, 1
      %vm2145 = vcmp.eq.s32.totalorder %v2113, 1
      %vm2146 = vcmp.eq.s32.totalorder %v2116, 1
      %vm2147 = vcmp.eq.s32.totalorder %v2119, 1
      %vm2148 = vcmp.eq.s32.totalorder %v2122, 1
      %vm2149 = vcmp.eq.s32.totalorder %v2125, 1
      %vm2150 = vcmp.eq.s32.totalorder %v2128, 1
      %vm2151 = vcmp.eq.s32.totalorder %v2131, 1
      %vm2152 = vcmp.eq.s32.totalorder %v2134, 1
      %vm2153 = vcmp.eq.s32.totalorder %v2137, 1
      %v2154 = vsel %vm2138, %v2026, 0.0
      %v2155 = vsel %vm2139, %v2027, 0.0
      %v2156 = vsel %vm2140, %v2028, 0.0
      %v2157 = vsel %vm2141, %v2029, 0.0
      %v2158 = vsel %vm2142, %v2030, 0.0
      %v2159 = vsel %vm2143, %v2031, 0.0
      %v2160 = vsel %vm2144, %v2032, 0.0
      %v2161 = vsel %vm2145, %v2033, 0.0
      %v2162 = vsel %vm2146, %v2034, 0.0
      %v2163 = vsel %vm2147, %v2035, 0.0
      %v2164 = vsel %vm2148, %v2036, 0.0
      %v2165 = vsel %vm2149, %v2037, 0.0
      %v2166 = vsel %vm2150, %v2038, 0.0
      %v2167 = vsel %vm2151, %v2039, 0.0
      %v2168 = vsel %vm2152, %v2040, 0.0
      %v2169 = vsel %vm2153, %v2041, 0.0
      %v2170 = vmax.f32 %v1700, %v2154
      %v2171 = vmax.f32 %v1701, %v2155
      %v2172 = vmax.f32 %v1702, %v2156
      %v2173 = vmax.f32 %v1703, %v2157
      %v2174 = vmax.f32 %v2170, %v2158
      %v2175 = vmax.f32 %v2171, %v2159
      %v2176 = vmax.f32 %v2172, %v2160
      %v2177 = vmax.f32 %v2173, %v2161
      %v2178 = vmax.f32 %v2174, %v2162
      %v2179 = vmax.f32 %v2175, %v2163
      %v2180 = vmax.f32 %v2176, %v2164
      %v2181 = vmax.f32 %v2177, %v2165
      %v2182 = vmax.f32 %v2178, %v2166
      %v2183 = vmax.f32 %v2179, %v2167
      %v2184 = vmax.f32 %v2180, %v2168
      %v2185 = vmax.f32 %v2181, %v2169
      %v2186 = vld [vmem:[%s209 + $0x100] sm:$0xf]
      %v2187 = vld [vmem:[%s209 + $0x104] sm:$0xf]
      %v2188 = vld [vmem:[%s209 + $0x108] sm:$0xf]
      %v2189 = vld [vmem:[%s209 + $0x10c] sm:$0xf]
      %v2190 = vld [vmem:[%s209 + $0x110] sm:$0xf]
      %v2191 = vld [vmem:[%s209 + $0x114] sm:$0xf]
      %v2192 = vld [vmem:[%s209 + $0x118] sm:$0xf]
      %v2193 = vld [vmem:[%s209 + $0x11c] sm:$0xf]
      %v2194 = vld [vmem:[%s209 + $0x120] sm:$0xf]
      %v2195 = vld [vmem:[%s209 + $0x124] sm:$0xf]
      %v2196 = vld [vmem:[%s209 + $0x128] sm:$0xf]
      %v2197 = vld [vmem:[%s209 + $0x12c] sm:$0xf]
      %v2198 = vld [vmem:[%s209 + $0x130] sm:$0xf]
      %v2199 = vld [vmem:[%s209 + $0x134] sm:$0xf]
      %v2200 = vld [vmem:[%s209 + $0x138] sm:$0xf]
      %v2201 = vld [vmem:[%s209 + $0x13c] sm:$0xf]
      %v2218 = vunpack.c.l.b16 %v2186
      %v2219 = vunpack.c.l.b16 %v2187
      %v2220 = vunpack.c.l.b16 %v2188
      %v2221 = vunpack.c.l.b16 %v2189
      %v2222 = vunpack.c.l.b16 %v2190
      %v2223 = vunpack.c.l.b16 %v2191
      %v2224 = vunpack.c.l.b16 %v2192
      %v2225 = vunpack.c.l.b16 %v2193
      %v2226 = vunpack.c.l.b16 %v2194
      %v2227 = vunpack.c.l.b16 %v2195
      %v2228 = vunpack.c.l.b16 %v2196
      %v2229 = vunpack.c.l.b16 %v2197
      %v2230 = vunpack.c.l.b16 %v2198
      %v2231 = vunpack.c.l.b16 %v2199
      %v2232 = vunpack.c.l.b16 %v2200
      %v2233 = vunpack.c.l.b16 %v2201
      %v2234 = vpack.c.b16 %v2219, %v2218
      %v2235 = vpack.c.b16 %v2221, %v2220
      %v2236 = vpack.c.b16 %v2223, %v2222
      %v2237 = vpack.c.b16 %v2225, %v2224
      %v2238 = vpack.c.b16 %v2227, %v2226
      %v2239 = vpack.c.b16 %v2229, %v2228
      %v2240 = vpack.c.b16 %v2231, %v2230
      %v2241 = vpack.c.b16 %v2233, %v2232
      %v2243 = vsel %vm293, %v2234, 0
      %v2246 = vsel %vm293, %v2235, 0
      %v2249 = vsel %vm293, %v2236, 0
      %v2252 = vsel %vm293, %v2237, 0
      %v2255 = vsel %vm293, %v2238, 0
      %v2258 = vsel %vm293, %v2239, 0
      %v2261 = vsel %vm293, %v2240, 0
      %v2264 = vsel %vm293, %v2241, 0
      %2266 = vmatprep.subr.bf16.mxu0 0
      %2267 = vmatpush1.bf16.msra.mxu0 0
      %2268 = vmatprep.subr.bf16.mxu0 0
      %2269 = vmatpush1.bf16.msra.mxu0 0
      %2270 = vmatprep.subr.bf16.mxu0 0
      %2271 = vmatpush1.bf16.msra.mxu0 0
      %2272 = vmatprep.subr.bf16.mxu0 0
      %2273 = vmatpush1.bf16.msra.mxu0 0
      %2274 = vmatprep.subr.bf16.mxu0 0
      %2275 = vmatpush1.bf16.msra.mxu0 0
      %2276 = vmatprep.subr.bf16.mxu0 0
      %2277 = vmatpush1.bf16.msra.mxu0 0
      %2278 = vmatprep.subr.bf16.mxu0 0
      %2279 = vmatpush1.bf16.msra.mxu0 0
      %2280 = vmatprep.subr.bf16.mxu0 0
      %2281 = vmatpush1.bf16.msra.mxu0 %v291
      %2282 = vmatprep.subr.bf16.mxu0 0
      %2283 = vmatpush2.bf16.msra.mxu0 0
      %2284 = vmatprep.subr.bf16.mxu0 0
      %2285 = vmatpush2.bf16.msra.mxu0 0
      %2286 = vmatprep.subr.bf16.mxu0 0
      %2287 = vmatpush2.bf16.msra.mxu0 0
      %2288 = vmatprep.subr.bf16.mxu0 0
      %2289 = vmatpush2.bf16.msra.mxu0 0
      %2290 = vmatprep.subr.bf16.mxu0 0
      %2291 = vmatpush2.bf16.msra.mxu0 0
      %2292 = vmatprep.subr.bf16.mxu0 0
      %2293 = vmatpush2.bf16.msra.mxu0 0
      %2294 = vmatprep.subr.bf16.mxu0 0
      %2295 = vmatpush2.bf16.msra.mxu0 0
      %2296 = vmatprep.subr.bf16.mxu0 0
      %2297 = vmatpush2.bf16.msra.mxu0 0
      %2298 = vmatprep.mubr.bf16.mxu0 0
      %2299 = vmatmul.mubr.bf16.gmra.mxu0 %v2243
      %v2300 = vpop.f32.mrf.mxu0
      %v2301 = vadd.f32 0.0, %v2300
      %v2302 = vpop.f32.mrf.mxu0
      %v2303 = vpop.f32.mrf.mxu0
      %v2304 = vadd.f32 0.0, %v2303
      %v2305 = vpop.f32.mrf.mxu0
      %2306 = vmatprep.mubr.bf16.mxu0 0
      %2307 = vmatmul.mubr.bf16.gmra.mxu0 %v2246
      %v2308 = vpop.f32.mrf.mxu0
      %v2309 = vadd.f32 0.0, %v2308
      %v2310 = vpop.f32.mrf.mxu0
      %v2311 = vpop.f32.mrf.mxu0
      %v2312 = vadd.f32 0.0, %v2311
      %v2313 = vpop.f32.mrf.mxu0
      %2314 = vmatprep.mubr.bf16.mxu0 0
      %2315 = vmatmul.mubr.bf16.gmra.mxu0 %v2249
      %v2316 = vpop.f32.mrf.mxu0
      %v2317 = vadd.f32 0.0, %v2316
      %v2318 = vpop.f32.mrf.mxu0
      %v2319 = vpop.f32.mrf.mxu0
      %v2320 = vadd.f32 0.0, %v2319
      %v2321 = vpop.f32.mrf.mxu0
      %2322 = vmatprep.mubr.bf16.mxu0 0
      %2323 = vmatmul.mubr.bf16.gmra.mxu0 %v2252
      %v2324 = vpop.f32.mrf.mxu0
      %v2325 = vadd.f32 0.0, %v2324
      %v2326 = vpop.f32.mrf.mxu0
      %v2327 = vpop.f32.mrf.mxu0
      %v2328 = vadd.f32 0.0, %v2327
      %v2329 = vpop.f32.mrf.mxu0
      %2330 = vmatprep.mubr.bf16.mxu0 0
      %2331 = vmatmul.mubr.bf16.gmra.mxu0 %v2255
      %v2332 = vpop.f32.mrf.mxu0
      %v2333 = vadd.f32 0.0, %v2332
      %v2334 = vpop.f32.mrf.mxu0
      %v2335 = vpop.f32.mrf.mxu0
      %v2336 = vadd.f32 0.0, %v2335
      %v2337 = vpop.f32.mrf.mxu0
      %2338 = vmatprep.mubr.bf16.mxu0 0
      %2339 = vmatmul.mubr.bf16.gmra.mxu0 %v2258
      %v2340 = vpop.f32.mrf.mxu0
      %v2341 = vadd.f32 0.0, %v2340
      %v2342 = vpop.f32.mrf.mxu0
      %v2343 = vpop.f32.mrf.mxu0
      %v2344 = vadd.f32 0.0, %v2343
      %v2345 = vpop.f32.mrf.mxu0
      %2346 = vmatprep.mubr.bf16.mxu0 0
      %2347 = vmatmul.mubr.bf16.gmra.mxu0 %v2261
      %v2348 = vpop.f32.mrf.mxu0
      %v2349 = vadd.f32 0.0, %v2348
      %v2350 = vpop.f32.mrf.mxu0
      %v2351 = vpop.f32.mrf.mxu0
      %v2352 = vadd.f32 0.0, %v2351
      %v2353 = vpop.f32.mrf.mxu0
      %2354 = vmatprep.mubr.bf16.mxu0 0
      %2355 = vmatmul.mubr.bf16.gmra.mxu0 %v2264
      %v2356 = vpop.f32.mrf.mxu0
      %v2357 = vadd.f32 0.0, %v2356
      %v2358 = vpop.f32.mrf.mxu0
      %v2359 = vpop.f32.mrf.mxu0
      %v2360 = vadd.f32 0.0, %v2359
      %v2361 = vpop.f32.mrf.mxu0
      %2362 = vdwg.mxu0
      %v2363 = vmax.f32 %v2301, 0.0
      %v2364 = vmax.f32 %v2304, 0.0
      %v2365 = vmax.f32 %v2309, 0.0
      %v2366 = vmax.f32 %v2312, 0.0
      %v2367 = vmax.f32 %v2317, 0.0
      %v2368 = vmax.f32 %v2320, 0.0
      %v2369 = vmax.f32 %v2325, 0.0
      %v2370 = vmax.f32 %v2328, 0.0
      %v2371 = vmax.f32 %v2333, 0.0
      %v2372 = vmax.f32 %v2336, 0.0
      %v2373 = vmax.f32 %v2341, 0.0
      %v2374 = vmax.f32 %v2344, 0.0
      %v2375 = vmax.f32 %v2349, 0.0
      %v2376 = vmax.f32 %v2352, 0.0
      %v2377 = vmax.f32 %v2357, 0.0
      %v2378 = vmax.f32 %v2360, 0.0
      %v2379 = vpack.c.bf16 %v2364, %v2363
      %v2380 = vpack.c.bf16 %v2366, %v2365
      %v2381 = vpack.c.bf16 %v2368, %v2367
      %v2382 = vpack.c.bf16 %v2370, %v2369
      %v2383 = vpack.c.bf16 %v2372, %v2371
      %v2384 = vpack.c.bf16 %v2374, %v2373
      %v2385 = vpack.c.bf16 %v2376, %v2375
      %v2386 = vpack.c.bf16 %v2378, %v2377
      %v2388 = vsel %vm454, %v2379, 0
      %v2391 = vsel %vm454, %v2380, 0
      %v2394 = vsel %vm454, %v2381, 0
      %v2397 = vsel %vm454, %v2382, 0
      %v2400 = vsel %vm454, %v2383, 0
      %v2403 = vsel %vm454, %v2384, 0
      %v2406 = vsel %vm454, %v2385, 0
      %v2409 = vsel %vm454, %v2386, 0
      %2411 = vmatprep.subr.bf16.mxu0 0
      %2412 = vmatpush1.bf16.msra.mxu0 0
      %2413 = vmatprep.subr.bf16.mxu0 0
      %2414 = vmatpush1.bf16.msra.mxu0 0
      %2415 = vmatprep.subr.bf16.mxu0 0
      %2416 = vmatpush1.bf16.msra.mxu0 0
      %2417 = vmatprep.subr.bf16.mxu0 0
      %2418 = vmatpush1.bf16.msra.mxu0 0
      %2419 = vmatprep.subr.bf16.mxu0 0
      %2420 = vmatpush1.bf16.msra.mxu0 0
      %2421 = vmatprep.subr.bf16.mxu0 0
      %2422 = vmatpush1.bf16.msra.mxu0 %v481
      %2423 = vmatprep.subr.bf16.mxu0 0
      %2424 = vmatpush1.bf16.msra.mxu0 %v450
      %2425 = vmatprep.subr.bf16.mxu0 0
      %2426 = vmatpush1.bf16.msra.mxu0 %v449
      %2427 = vmatprep.subr.bf16.mxu0 0
      %2428 = vmatpush2.bf16.msra.mxu0 0
      %2429 = vmatprep.subr.bf16.mxu0 0
      %2430 = vmatpush2.bf16.msra.mxu0 0
      %2431 = vmatprep.subr.bf16.mxu0 0
      %2432 = vmatpush2.bf16.msra.mxu0 0
      %2433 = vmatprep.subr.bf16.mxu0 0
      %2434 = vmatpush2.bf16.msra.mxu0 0
      %2435 = vmatprep.subr.bf16.mxu0 0
      %2436 = vmatpush2.bf16.msra.mxu0 0
      %2437 = vmatprep.subr.bf16.mxu0 0
      %2438 = vmatpush2.bf16.msra.mxu0 0
      %2439 = vmatprep.subr.bf16.mxu0 0
      %2440 = vmatpush2.bf16.msra.mxu0 0
      %2441 = vmatprep.subr.bf16.mxu0 0
      %2442 = vmatpush2.bf16.msra.mxu0 0
      %2443 = vmatprep.mubr.bf16.mxu0 0
      %2444 = vmatmul.mubr.bf16.gmra.mxu0 %v2388
      %v2445 = vpop.f32.mrf.mxu0
      %v2446 = vadd.f32 0.0, %v2445
      %v2447 = vpop.f32.mrf.mxu0
      %v2448 = vpop.f32.mrf.mxu0
      %v2449 = vadd.f32 0.0, %v2448
      %v2450 = vpop.f32.mrf.mxu0
      %2451 = vmatprep.mubr.bf16.mxu0 0
      %2452 = vmatmul.mubr.bf16.gmra.mxu0 %v2391
      %v2453 = vpop.f32.mrf.mxu0
      %v2454 = vadd.f32 0.0, %v2453
      %v2455 = vpop.f32.mrf.mxu0
      %v2456 = vpop.f32.mrf.mxu0
      %v2457 = vadd.f32 0.0, %v2456
      %v2458 = vpop.f32.mrf.mxu0
      %2459 = vmatprep.mubr.bf16.mxu0 0
      %2460 = vmatmul.mubr.bf16.gmra.mxu0 %v2394
      %v2461 = vpop.f32.mrf.mxu0
      %v2462 = vadd.f32 0.0, %v2461
      %v2463 = vpop.f32.mrf.mxu0
      %v2464 = vpop.f32.mrf.mxu0
      %v2465 = vadd.f32 0.0, %v2464
      %v2466 = vpop.f32.mrf.mxu0
      %2467 = vmatprep.mubr.bf16.mxu0 0
      %2468 = vmatmul.mubr.bf16.gmra.mxu0 %v2397
      %v2469 = vpop.f32.mrf.mxu0
      %v2470 = vadd.f32 0.0, %v2469
      %v2471 = vpop.f32.mrf.mxu0
      %v2472 = vpop.f32.mrf.mxu0
      %v2473 = vadd.f32 0.0, %v2472
      %v2474 = vpop.f32.mrf.mxu0
      %2475 = vmatprep.mubr.bf16.mxu0 0
      %2476 = vmatmul.mubr.bf16.gmra.mxu0 %v2400
      %v2477 = vpop.f32.mrf.mxu0
      %v2478 = vadd.f32 0.0, %v2477
      %v2479 = vpop.f32.mrf.mxu0
      %v2480 = vpop.f32.mrf.mxu0
      %v2481 = vadd.f32 0.0, %v2480
      %v2482 = vpop.f32.mrf.mxu0
      %2483 = vmatprep.mubr.bf16.mxu0 0
      %2484 = vmatmul.mubr.bf16.gmra.mxu0 %v2403
      %v2485 = vpop.f32.mrf.mxu0
      %v2486 = vadd.f32 0.0, %v2485
      %v2487 = vpop.f32.mrf.mxu0
      %v2488 = vpop.f32.mrf.mxu0
      %v2489 = vadd.f32 0.0, %v2488
      %v2490 = vpop.f32.mrf.mxu0
      %2491 = vmatprep.mubr.bf16.mxu0 0
      %2492 = vmatmul.mubr.bf16.gmra.mxu0 %v2406
      %v2493 = vpop.f32.mrf.mxu0
      %v2494 = vadd.f32 0.0, %v2493
      %v2495 = vpop.f32.mrf.mxu0
      %v2496 = vpop.f32.mrf.mxu0
      %v2497 = vadd.f32 0.0, %v2496
      %v2498 = vpop.f32.mrf.mxu0
      %2499 = vmatprep.mubr.bf16.mxu0 0
      %2500 = vmatmul.mubr.bf16.gmra.mxu0 %v2409
      %v2501 = vpop.f32.mrf.mxu0
      %v2502 = vadd.f32 0.0, %v2501
      %v2503 = vpop.f32.mrf.mxu0
      %v2504 = vpop.f32.mrf.mxu0
      %v2505 = vadd.f32 0.0, %v2504
      %v2506 = vpop.f32.mrf.mxu0
      %2507 = vdwg.mxu0
      %v2508 = vmax.f32 %v2446, 0.0
      %v2509 = vmax.f32 %v2449, 0.0
      %v2510 = vmax.f32 %v2454, 0.0
      %v2511 = vmax.f32 %v2457, 0.0
      %v2512 = vmax.f32 %v2462, 0.0
      %v2513 = vmax.f32 %v2465, 0.0
      %v2514 = vmax.f32 %v2470, 0.0
      %v2515 = vmax.f32 %v2473, 0.0
      %v2516 = vmax.f32 %v2478, 0.0
      %v2517 = vmax.f32 %v2481, 0.0
      %v2518 = vmax.f32 %v2486, 0.0
      %v2519 = vmax.f32 %v2489, 0.0
      %v2520 = vmax.f32 %v2494, 0.0
      %v2521 = vmax.f32 %v2497, 0.0
      %v2522 = vmax.f32 %v2502, 0.0
      %v2523 = vmax.f32 %v2505, 0.0
      %v2524 = vld [vmem:[%s215 + $0x200] sm:$0xff]
      %v2525 = vld [vmem:[%s215 + $0x208] sm:$0xff]
      %v2526 = vld [vmem:[%s215 + $0x210] sm:$0xff]
      %v2527 = vld [vmem:[%s215 + $0x218] sm:$0xff]
      %v2528 = vld [vmem:[%s215 + $0x220] sm:$0xff]
      %v2529 = vld [vmem:[%s215 + $0x228] sm:$0xff]
      %v2530 = vld [vmem:[%s215 + $0x230] sm:$0xff]
      %v2531 = vld [vmem:[%s215 + $0x238] sm:$0xff]
      %v2532 = vld [vmem:[%s215 + $0x240] sm:$0xff]
      %v2533 = vld [vmem:[%s215 + $0x248] sm:$0xff]
      %v2534 = vld [vmem:[%s215 + $0x250] sm:$0xff]
      %v2535 = vld [vmem:[%s215 + $0x258] sm:$0xff]
      %v2536 = vld [vmem:[%s215 + $0x260] sm:$0xff]
      %v2537 = vld [vmem:[%s215 + $0x268] sm:$0xff]
      %v2538 = vld [vmem:[%s215 + $0x270] sm:$0xff]
      %v2539 = vld [vmem:[%s215 + $0x278] sm:$0xff]
      %vm2540 = vcmp.gt.s32.totalorder %v2524, 0
      %vm2541 = vcmp.gt.s32.totalorder %v2525, 0
      %vm2542 = vcmp.gt.s32.totalorder %v2526, 0
      %vm2543 = vcmp.gt.s32.totalorder %v2527, 0
      %vm2544 = vcmp.gt.s32.totalorder %v2528, 0
      %vm2545 = vcmp.gt.s32.totalorder %v2529, 0
      %vm2546 = vcmp.gt.s32.totalorder %v2530, 0
      %vm2547 = vcmp.gt.s32.totalorder %v2531, 0
      %vm2548 = vcmp.gt.s32.totalorder %v2532, 0
      %vm2549 = vcmp.gt.s32.totalorder %v2533, 0
      %vm2550 = vcmp.gt.s32.totalorder %v2534, 0
      %vm2551 = vcmp.gt.s32.totalorder %v2535, 0
      %vm2552 = vcmp.gt.s32.totalorder %v2536, 0
      %vm2553 = vcmp.gt.s32.totalorder %v2537, 0
      %vm2554 = vcmp.gt.s32.totalorder %v2538, 0
      %vm2555 = vcmp.gt.s32.totalorder %v2539, 0
      %v2556 = vsel %vm2540, 1, 0
      %v2557 = vsel %vm2541, 1, 0
      %v2558 = vsel %vm2542, 1, 0
      %v2559 = vsel %vm2543, 1, 0
      %v2560 = vsel %vm2544, 1, 0
      %v2561 = vsel %vm2545, 1, 0
      %v2562 = vsel %vm2546, 1, 0
      %v2563 = vsel %vm2547, 1, 0
      %v2564 = vsel %vm2548, 1, 0
      %v2565 = vsel %vm2549, 1, 0
      %v2566 = vsel %vm2550, 1, 0
      %v2567 = vsel %vm2551, 1, 0
      %v2568 = vsel %vm2552, 1, 0
      %v2569 = vsel %vm2553, 1, 0
      %v2570 = vsel %vm2554, 1, 0
      %v2571 = vsel %vm2555, 1, 0
      %2572 = vset.pattern.permute.xlu0 0
      %2573 = vperm.xlu0 %2572, %v2556
      %v2574 = vpop.permute.xlu0 %2573
      %2575 = vset.pattern.permute.xlu0 0
      %2576 = vperm.xlu0 %2575, %v2557
      %v2577 = vpop.permute.xlu0 %2576
      %2578 = vset.pattern.permute.xlu0 0
      %2579 = vperm.xlu0 %2578, %v2558
      %v2580 = vpop.permute.xlu0 %2579
      %2581 = vset.pattern.permute.xlu0 0
      %2582 = vperm.xlu0 %2581, %v2559
      %v2583 = vpop.permute.xlu0 %2582
      %2584 = vset.pattern.permute.xlu0 0
      %2585 = vperm.xlu0 %2584, %v2560
      %v2586 = vpop.permute.xlu0 %2585
      %2587 = vset.pattern.permute.xlu0 0
      %2588 = vperm.xlu0 %2587, %v2561
      %v2589 = vpop.permute.xlu0 %2588
      %2590 = vset.pattern.permute.xlu0 0
      %2591 = vperm.xlu0 %2590, %v2562
      %v2592 = vpop.permute.xlu0 %2591
      %2593 = vset.pattern.permute.xlu0 0
      %2594 = vperm.xlu0 %2593, %v2563
      %v2595 = vpop.permute.xlu0 %2594
      %2596 = vset.pattern.permute.xlu0 0
      %2597 = vperm.xlu0 %2596, %v2564
      %v2598 = vpop.permute.xlu0 %2597
      %2599 = vset.pattern.permute.xlu0 0
      %2600 = vperm.xlu0 %2599, %v2565
      %v2601 = vpop.permute.xlu0 %2600
      %2602 = vset.pattern.permute.xlu0 0
      %2603 = vperm.xlu0 %2602, %v2566
      %v2604 = vpop.permute.xlu0 %2603
      %2605 = vset.pattern.permute.xlu0 0
      %2606 = vperm.xlu0 %2605, %v2567
      %v2607 = vpop.permute.xlu0 %2606
      %2608 = vset.pattern.permute.xlu0 0
      %2609 = vperm.xlu0 %2608, %v2568
      %v2610 = vpop.permute.xlu0 %2609
      %2611 = vset.pattern.permute.xlu0 0
      %2612 = vperm.xlu0 %2611, %v2569
      %v2613 = vpop.permute.xlu0 %2612
      %2614 = vset.pattern.permute.xlu0 0
      %2615 = vperm.xlu0 %2614, %v2570
      %v2616 = vpop.permute.xlu0 %2615
      %2617 = vset.pattern.permute.xlu0 0
      %2618 = vperm.xlu0 %2617, %v2571
      %v2619 = vpop.permute.xlu0 %2618
      %vm2620 = vcmp.eq.s32.totalorder %v2574, 1
      %vm2621 = vcmp.eq.s32.totalorder %v2577, 1
      %vm2622 = vcmp.eq.s32.totalorder %v2580, 1
      %vm2623 = vcmp.eq.s32.totalorder %v2583, 1
      %vm2624 = vcmp.eq.s32.totalorder %v2586, 1
      %vm2625 = vcmp.eq.s32.totalorder %v2589, 1
      %vm2626 = vcmp.eq.s32.totalorder %v2592, 1
      %vm2627 = vcmp.eq.s32.totalorder %v2595, 1
      %vm2628 = vcmp.eq.s32.totalorder %v2598, 1
      %vm2629 = vcmp.eq.s32.totalorder %v2601, 1
      %vm2630 = vcmp.eq.s32.totalorder %v2604, 1
      %vm2631 = vcmp.eq.s32.totalorder %v2607, 1
      %vm2632 = vcmp.eq.s32.totalorder %v2610, 1
      %vm2633 = vcmp.eq.s32.totalorder %v2613, 1
      %vm2634 = vcmp.eq.s32.totalorder %v2616, 1
      %vm2635 = vcmp.eq.s32.totalorder %v2619, 1
      %v2636 = vsel %vm2620, %v2508, 0.0
      %v2637 = vsel %vm2621, %v2509, 0.0
      %v2638 = vsel %vm2622, %v2510, 0.0
      %v2639 = vsel %vm2623, %v2511, 0.0
      %v2640 = vsel %vm2624, %v2512, 0.0
      %v2641 = vsel %vm2625, %v2513, 0.0
      %v2642 = vsel %vm2626, %v2514, 0.0
      %v2643 = vsel %vm2627, %v2515, 0.0
      %v2644 = vsel %vm2628, %v2516, 0.0
      %v2645 = vsel %vm2629, %v2517, 0.0
      %v2646 = vsel %vm2630, %v2518, 0.0
      %v2647 = vsel %vm2631, %v2519, 0.0
      %v2648 = vsel %vm2632, %v2520, 0.0
      %v2649 = vsel %vm2633, %v2521, 0.0
      %v2650 = vsel %vm2634, %v2522, 0.0
      %v2651 = vsel %vm2635, %v2523, 0.0
      %v2652 = vmax.f32 %v2182, %v2636
      %v2653 = vmax.f32 %v2183, %v2637
      %v2654 = vmax.f32 %v2184, %v2638
      %v2655 = vmax.f32 %v2185, %v2639
      %v2656 = vmax.f32 %v2652, %v2640
      %v2657 = vmax.f32 %v2653, %v2641
      %v2658 = vmax.f32 %v2654, %v2642
      %v2659 = vmax.f32 %v2655, %v2643
      %v2660 = vmax.f32 %v2656, %v2644
      %v2661 = vmax.f32 %v2657, %v2645
      %v2662 = vmax.f32 %v2658, %v2646
      %v2663 = vmax.f32 %v2659, %v2647
      %v2664 = vmax.f32 %v2660, %v2648
      %v2665 = vmax.f32 %v2661, %v2649
      %v2666 = vmax.f32 %v2662, %v2650
      %v2667 = vmax.f32 %v2663, %v2651
      %v2668 = vld [vmem:[%s209 + $0x140] sm:$0xf]
      %v2669 = vld [vmem:[%s209 + $0x144] sm:$0xf]
      %v2670 = vld [vmem:[%s209 + $0x148] sm:$0xf]
      %v2671 = vld [vmem:[%s209 + $0x14c] sm:$0xf]
      %v2672 = vld [vmem:[%s209 + $0x150] sm:$0xf]
      %v2673 = vld [vmem:[%s209 + $0x154] sm:$0xf]
      %v2674 = vld [vmem:[%s209 + $0x158] sm:$0xf]
      %v2675 = vld [vmem:[%s209 + $0x15c] sm:$0xf]
      %v2676 = vld [vmem:[%s209 + $0x160] sm:$0xf]
      %v2677 = vld [vmem:[%s209 + $0x164] sm:$0xf]
      %v2678 = vld [vmem:[%s209 + $0x168] sm:$0xf]
      %v2679 = vld [vmem:[%s209 + $0x16c] sm:$0xf]
      %v2680 = vld [vmem:[%s209 + $0x170] sm:$0xf]
      %v2681 = vld [vmem:[%s209 + $0x174] sm:$0xf]
      %v2682 = vld [vmem:[%s209 + $0x178] sm:$0xf]
      %v2683 = vld [vmem:[%s209 + $0x17c] sm:$0xf]
      %v2700 = vunpack.c.l.b16 %v2668
      %v2701 = vunpack.c.l.b16 %v2669
      %v2702 = vunpack.c.l.b16 %v2670
      %v2703 = vunpack.c.l.b16 %v2671
      %v2704 = vunpack.c.l.b16 %v2672
      %v2705 = vunpack.c.l.b16 %v2673
      %v2706 = vunpack.c.l.b16 %v2674
      %v2707 = vunpack.c.l.b16 %v2675
      %v2708 = vunpack.c.l.b16 %v2676
      %v2709 = vunpack.c.l.b16 %v2677
      %v2710 = vunpack.c.l.b16 %v2678
      %v2711 = vunpack.c.l.b16 %v2679
      %v2712 = vunpack.c.l.b16 %v2680
      %v2713 = vunpack.c.l.b16 %v2681
      %v2714 = vunpack.c.l.b16 %v2682
      %v2715 = vunpack.c.l.b16 %v2683
      %v2716 = vpack.c.b16 %v2701, %v2700
      %v2717 = vpack.c.b16 %v2703, %v2702
      %v2718 = vpack.c.b16 %v2705, %v2704
      %v2719 = vpack.c.b16 %v2707, %v2706
      %v2720 = vpack.c.b16 %v2709, %v2708
      %v2721 = vpack.c.b16 %v2711, %v2710
      %v2722 = vpack.c.b16 %v2713, %v2712
      %v2723 = vpack.c.b16 %v2715, %v2714
      %v2725 = vsel %vm293, %v2716, 0
      %v2728 = vsel %vm293, %v2717, 0
      %v2731 = vsel %vm293, %v2718, 0
      %v2734 = vsel %vm293, %v2719, 0
      %v2737 = vsel %vm293, %v2720, 0
      %v2740 = vsel %vm293, %v2721, 0
      %v2743 = vsel %vm293, %v2722, 0
      %v2746 = vsel %vm293, %v2723, 0
      %2748 = vmatprep.subr.bf16.mxu0 0
      %2749 = vmatpush1.bf16.msra.mxu0 0
      %2750 = vmatprep.subr.bf16.mxu0 0
      %2751 = vmatpush1.bf16.msra.mxu0 0
      %2752 = vmatprep.subr.bf16.mxu0 0
      %2753 = vmatpush1.bf16.msra.mxu0 0
      %2754 = vmatprep.subr.bf16.mxu0 0
      %2755 = vmatpush1.bf16.msra.mxu0 0
      %2756 = vmatprep.subr.bf16.mxu0 0
      %2757 = vmatpush1.bf16.msra.mxu0 0
      %2758 = vmatprep.subr.bf16.mxu0 0
      %2759 = vmatpush1.bf16.msra.mxu0 0
      %2760 = vmatprep.subr.bf16.mxu0 0
      %2761 = vmatpush1.bf16.msra.mxu0 0
      %2762 = vmatprep.subr.bf16.mxu0 0
      %2763 = vmatpush1.bf16.msra.mxu0 %v291
      %2764 = vmatprep.subr.bf16.mxu0 0
      %2765 = vmatpush2.bf16.msra.mxu0 0
      %2766 = vmatprep.subr.bf16.mxu0 0
      %2767 = vmatpush2.bf16.msra.mxu0 0
      %2768 = vmatprep.subr.bf16.mxu0 0
      %2769 = vmatpush2.bf16.msra.mxu0 0
      %2770 = vmatprep.subr.bf16.mxu0 0
      %2771 = vmatpush2.bf16.msra.mxu0 0
      %2772 = vmatprep.subr.bf16.mxu0 0
      %2773 = vmatpush2.bf16.msra.mxu0 0
      %2774 = vmatprep.subr.bf16.mxu0 0
      %2775 = vmatpush2.bf16.msra.mxu0 0
      %2776 = vmatprep.subr.bf16.mxu0 0
      %2777 = vmatpush2.bf16.msra.mxu0 0
      %2778 = vmatprep.subr.bf16.mxu0 0
      %2779 = vmatpush2.bf16.msra.mxu0 0
      %2780 = vmatprep.mubr.bf16.mxu0 0
      %2781 = vmatmul.mubr.bf16.gmra.mxu0 %v2725
      %v2782 = vpop.f32.mrf.mxu0
      %v2783 = vadd.f32 0.0, %v2782
      %v2784 = vpop.f32.mrf.mxu0
      %v2785 = vpop.f32.mrf.mxu0
      %v2786 = vadd.f32 0.0, %v2785
      %v2787 = vpop.f32.mrf.mxu0
      %2788 = vmatprep.mubr.bf16.mxu0 0
      %2789 = vmatmul.mubr.bf16.gmra.mxu0 %v2728
      %v2790 = vpop.f32.mrf.mxu0
      %v2791 = vadd.f32 0.0, %v2790
      %v2792 = vpop.f32.mrf.mxu0
      %v2793 = vpop.f32.mrf.mxu0
      %v2794 = vadd.f32 0.0, %v2793
      %v2795 = vpop.f32.mrf.mxu0
      %2796 = vmatprep.mubr.bf16.mxu0 0
      %2797 = vmatmul.mubr.bf16.gmra.mxu0 %v2731
      %v2798 = vpop.f32.mrf.mxu0
      %v2799 = vadd.f32 0.0, %v2798
      %v2800 = vpop.f32.mrf.mxu0
      %v2801 = vpop.f32.mrf.mxu0
      %v2802 = vadd.f32 0.0, %v2801
      %v2803 = vpop.f32.mrf.mxu0
      %2804 = vmatprep.mubr.bf16.mxu0 0
      %2805 = vmatmul.mubr.bf16.gmra.mxu0 %v2734
      %v2806 = vpop.f32.mrf.mxu0
      %v2807 = vadd.f32 0.0, %v2806
      %v2808 = vpop.f32.mrf.mxu0
      %v2809 = vpop.f32.mrf.mxu0
      %v2810 = vadd.f32 0.0, %v2809
      %v2811 = vpop.f32.mrf.mxu0
      %2812 = vmatprep.mubr.bf16.mxu0 0
      %2813 = vmatmul.mubr.bf16.gmra.mxu0 %v2737
      %v2814 = vpop.f32.mrf.mxu0
      %v2815 = vadd.f32 0.0, %v2814
      %v2816 = vpop.f32.mrf.mxu0
      %v2817 = vpop.f32.mrf.mxu0
      %v2818 = vadd.f32 0.0, %v2817
      %v2819 = vpop.f32.mrf.mxu0
      %2820 = vmatprep.mubr.bf16.mxu0 0
      %2821 = vmatmul.mubr.bf16.gmra.mxu0 %v2740
      %v2822 = vpop.f32.mrf.mxu0
      %v2823 = vadd.f32 0.0, %v2822
      %v2824 = vpop.f32.mrf.mxu0
      %v2825 = vpop.f32.mrf.mxu0
      %v2826 = vadd.f32 0.0, %v2825
      %v2827 = vpop.f32.mrf.mxu0
      %2828 = vmatprep.mubr.bf16.mxu0 0
      %2829 = vmatmul.mubr.bf16.gmra.mxu0 %v2743
      %v2830 = vpop.f32.mrf.mxu0
      %v2831 = vadd.f32 0.0, %v2830
      %v2832 = vpop.f32.mrf.mxu0
      %v2833 = vpop.f32.mrf.mxu0
      %v2834 = vadd.f32 0.0, %v2833
      %v2835 = vpop.f32.mrf.mxu0
      %2836 = vmatprep.mubr.bf16.mxu0 0
      %2837 = vmatmul.mubr.bf16.gmra.mxu0 %v2746
      %v2838 = vpop.f32.mrf.mxu0
      %v2839 = vadd.f32 0.0, %v2838
      %v2840 = vpop.f32.mrf.mxu0
      %v2841 = vpop.f32.mrf.mxu0
      %v2842 = vadd.f32 0.0, %v2841
      %v2843 = vpop.f32.mrf.mxu0
      %2844 = vdwg.mxu0
      %v2845 = vmax.f32 %v2783, 0.0
      %v2846 = vmax.f32 %v2786, 0.0
      %v2847 = vmax.f32 %v2791, 0.0
      %v2848 = vmax.f32 %v2794, 0.0
      %v2849 = vmax.f32 %v2799, 0.0
      %v2850 = vmax.f32 %v2802, 0.0
      %v2851 = vmax.f32 %v2807, 0.0
      %v2852 = vmax.f32 %v2810, 0.0
      %v2853 = vmax.f32 %v2815, 0.0
      %v2854 = vmax.f32 %v2818, 0.0
      %v2855 = vmax.f32 %v2823, 0.0
      %v2856 = vmax.f32 %v2826, 0.0
      %v2857 = vmax.f32 %v2831, 0.0
      %v2858 = vmax.f32 %v2834, 0.0
      %v2859 = vmax.f32 %v2839, 0.0
      %v2860 = vmax.f32 %v2842, 0.0
      %v2861 = vpack.c.bf16 %v2846, %v2845
      %v2862 = vpack.c.bf16 %v2848, %v2847
      %v2863 = vpack.c.bf16 %v2850, %v2849
      %v2864 = vpack.c.bf16 %v2852, %v2851
      %v2865 = vpack.c.bf16 %v2854, %v2853
      %v2866 = vpack.c.bf16 %v2856, %v2855
      %v2867 = vpack.c.bf16 %v2858, %v2857
      %v2868 = vpack.c.bf16 %v2860, %v2859
      %v2870 = vsel %vm454, %v2861, 0
      %v2873 = vsel %vm454, %v2862, 0
      %v2876 = vsel %vm454, %v2863, 0
      %v2879 = vsel %vm454, %v2864, 0
      %v2882 = vsel %vm454, %v2865, 0
      %v2885 = vsel %vm454, %v2866, 0
      %v2888 = vsel %vm454, %v2867, 0
      %v2891 = vsel %vm454, %v2868, 0
      %2893 = vmatprep.subr.bf16.mxu0 0
      %2894 = vmatpush1.bf16.msra.mxu0 0
      %2895 = vmatprep.subr.bf16.mxu0 0
      %2896 = vmatpush1.bf16.msra.mxu0 0
      %2897 = vmatprep.subr.bf16.mxu0 0
      %2898 = vmatpush1.bf16.msra.mxu0 0
      %2899 = vmatprep.subr.bf16.mxu0 0
      %2900 = vmatpush1.bf16.msra.mxu0 0
      %2901 = vmatprep.subr.bf16.mxu0 0
      %2902 = vmatpush1.bf16.msra.mxu0 0
      %2903 = vmatprep.subr.bf16.mxu0 0
      %2904 = vmatpush1.bf16.msra.mxu0 %v481
      %2905 = vmatprep.subr.bf16.mxu0 0
      %2906 = vmatpush1.bf16.msra.mxu0 %v450
      %2907 = vmatprep.subr.bf16.mxu0 0
      %2908 = vmatpush1.bf16.msra.mxu0 %v449
      %2909 = vmatprep.subr.bf16.mxu0 0
      %2910 = vmatpush2.bf16.msra.mxu0 0
      %2911 = vmatprep.subr.bf16.mxu0 0
      %2912 = vmatpush2.bf16.msra.mxu0 0
      %2913 = vmatprep.subr.bf16.mxu0 0
      %2914 = vmatpush2.bf16.msra.mxu0 0
      %2915 = vmatprep.subr.bf16.mxu0 0
      %2916 = vmatpush2.bf16.msra.mxu0 0
      %2917 = vmatprep.subr.bf16.mxu0 0
      %2918 = vmatpush2.bf16.msra.mxu0 0
      %2919 = vmatprep.subr.bf16.mxu0 0
      %2920 = vmatpush2.bf16.msra.mxu0 0
      %2921 = vmatprep.subr.bf16.mxu0 0
      %2922 = vmatpush2.bf16.msra.mxu0 0
      %2923 = vmatprep.subr.bf16.mxu0 0
      %2924 = vmatpush2.bf16.msra.mxu0 0
      %2925 = vmatprep.mubr.bf16.mxu0 0
      %2926 = vmatmul.mubr.bf16.gmra.mxu0 %v2870
      %v2927 = vpop.f32.mrf.mxu0
      %v2928 = vadd.f32 0.0, %v2927
      %v2929 = vpop.f32.mrf.mxu0
      %v2930 = vpop.f32.mrf.mxu0
      %v2931 = vadd.f32 0.0, %v2930
      %v2932 = vpop.f32.mrf.mxu0
      %2933 = vmatprep.mubr.bf16.mxu0 0
      %2934 = vmatmul.mubr.bf16.gmra.mxu0 %v2873
      %v2935 = vpop.f32.mrf.mxu0
      %v2936 = vadd.f32 0.0, %v2935
      %v2937 = vpop.f32.mrf.mxu0
      %v2938 = vpop.f32.mrf.mxu0
      %v2939 = vadd.f32 0.0, %v2938
      %v2940 = vpop.f32.mrf.mxu0
      %2941 = vmatprep.mubr.bf16.mxu0 0
      %2942 = vmatmul.mubr.bf16.gmra.mxu0 %v2876
      %v2943 = vpop.f32.mrf.mxu0
      %v2944 = vadd.f32 0.0, %v2943
      %v2945 = vpop.f32.mrf.mxu0
      %v2946 = vpop.f32.mrf.mxu0
      %v2947 = vadd.f32 0.0, %v2946
      %v2948 = vpop.f32.mrf.mxu0
      %2949 = vmatprep.mubr.bf16.mxu0 0
      %2950 = vmatmul.mubr.bf16.gmra.mxu0 %v2879
      %v2951 = vpop.f32.mrf.mxu0
      %v2952 = vadd.f32 0.0, %v2951
      %v2953 = vpop.f32.mrf.mxu0
      %v2954 = vpop.f32.mrf.mxu0
      %v2955 = vadd.f32 0.0, %v2954
      %v2956 = vpop.f32.mrf.mxu0
      %2957 = vmatprep.mubr.bf16.mxu0 0
      %2958 = vmatmul.mubr.bf16.gmra.mxu0 %v2882
      %v2959 = vpop.f32.mrf.mxu0
      %v2960 = vadd.f32 0.0, %v2959
      %v2961 = vpop.f32.mrf.mxu0
      %v2962 = vpop.f32.mrf.mxu0
      %v2963 = vadd.f32 0.0, %v2962
      %v2964 = vpop.f32.mrf.mxu0
      %2965 = vmatprep.mubr.bf16.mxu0 0
      %2966 = vmatmul.mubr.bf16.gmra.mxu0 %v2885
      %v2967 = vpop.f32.mrf.mxu0
      %v2968 = vadd.f32 0.0, %v2967
      %v2969 = vpop.f32.mrf.mxu0
      %v2970 = vpop.f32.mrf.mxu0
      %v2971 = vadd.f32 0.0, %v2970
      %v2972 = vpop.f32.mrf.mxu0
      %2973 = vmatprep.mubr.bf16.mxu0 0
      %2974 = vmatmul.mubr.bf16.gmra.mxu0 %v2888
      %v2975 = vpop.f32.mrf.mxu0
      %v2976 = vadd.f32 0.0, %v2975
      %v2977 = vpop.f32.mrf.mxu0
      %v2978 = vpop.f32.mrf.mxu0
      %v2979 = vadd.f32 0.0, %v2978
      %v2980 = vpop.f32.mrf.mxu0
      %2981 = vmatprep.mubr.bf16.mxu0 0
      %2982 = vmatmul.mubr.bf16.gmra.mxu0 %v2891
      %v2983 = vpop.f32.mrf.mxu0
      %v2984 = vadd.f32 0.0, %v2983
      %v2985 = vpop.f32.mrf.mxu0
      %v2986 = vpop.f32.mrf.mxu0
      %v2987 = vadd.f32 0.0, %v2986
      %v2988 = vpop.f32.mrf.mxu0
      %2989 = vdwg.mxu0
      %v2990 = vmax.f32 %v2928, 0.0
      %v2991 = vmax.f32 %v2931, 0.0
      %v2992 = vmax.f32 %v2936, 0.0
      %v2993 = vmax.f32 %v2939, 0.0
      %v2994 = vmax.f32 %v2944, 0.0
      %v2995 = vmax.f32 %v2947, 0.0
      %v2996 = vmax.f32 %v2952, 0.0
      %v2997 = vmax.f32 %v2955, 0.0
      %v2998 = vmax.f32 %v2960, 0.0
      %v2999 = vmax.f32 %v2963, 0.0
      %v3000 = vmax.f32 %v2968, 0.0
      %v3001 = vmax.f32 %v2971, 0.0
      %v3002 = vmax.f32 %v2976, 0.0
      %v3003 = vmax.f32 %v2979, 0.0
      %v3004 = vmax.f32 %v2984, 0.0
      %v3005 = vmax.f32 %v2987, 0.0
      %v3006 = vld [vmem:[%s215 + $0x280] sm:$0xff]
      %v3007 = vld [vmem:[%s215 + $0x288] sm:$0xff]
      %v3008 = vld [vmem:[%s215 + $0x290] sm:$0xff]
      %v3009 = vld [vmem:[%s215 + $0x298] sm:$0xff]
      %v3010 = vld [vmem:[%s215 + $0x2a0] sm:$0xff]
      %v3011 = vld [vmem:[%s215 + $0x2a8] sm:$0xff]
      %v3012 = vld [vmem:[%s215 + $0x2b0] sm:$0xff]
      %v3013 = vld [vmem:[%s215 + $0x2b8] sm:$0xff]
      %v3014 = vld [vmem:[%s215 + $0x2c0] sm:$0xff]
      %v3015 = vld [vmem:[%s215 + $0x2c8] sm:$0xff]
      %v3016 = vld [vmem:[%s215 + $0x2d0] sm:$0xff]
      %v3017 = vld [vmem:[%s215 + $0x2d8] sm:$0xff]
      %v3018 = vld [vmem:[%s215 + $0x2e0] sm:$0xff]
      %v3019 = vld [vmem:[%s215 + $0x2e8] sm:$0xff]
      %v3020 = vld [vmem:[%s215 + $0x2f0] sm:$0xff]
      %v3021 = vld [vmem:[%s215 + $0x2f8] sm:$0xff]
      %vm3022 = vcmp.gt.s32.totalorder %v3006, 0
      %vm3023 = vcmp.gt.s32.totalorder %v3007, 0
      %vm3024 = vcmp.gt.s32.totalorder %v3008, 0
      %vm3025 = vcmp.gt.s32.totalorder %v3009, 0
      %vm3026 = vcmp.gt.s32.totalorder %v3010, 0
      %vm3027 = vcmp.gt.s32.totalorder %v3011, 0
      %vm3028 = vcmp.gt.s32.totalorder %v3012, 0
      %vm3029 = vcmp.gt.s32.totalorder %v3013, 0
      %vm3030 = vcmp.gt.s32.totalorder %v3014, 0
      %vm3031 = vcmp.gt.s32.totalorder %v3015, 0
      %vm3032 = vcmp.gt.s32.totalorder %v3016, 0
      %vm3033 = vcmp.gt.s32.totalorder %v3017, 0
      %vm3034 = vcmp.gt.s32.totalorder %v3018, 0
      %vm3035 = vcmp.gt.s32.totalorder %v3019, 0
      %vm3036 = vcmp.gt.s32.totalorder %v3020, 0
      %vm3037 = vcmp.gt.s32.totalorder %v3021, 0
      %v3038 = vsel %vm3022, 1, 0
      %v3039 = vsel %vm3023, 1, 0
      %v3040 = vsel %vm3024, 1, 0
      %v3041 = vsel %vm3025, 1, 0
      %v3042 = vsel %vm3026, 1, 0
      %v3043 = vsel %vm3027, 1, 0
      %v3044 = vsel %vm3028, 1, 0
      %v3045 = vsel %vm3029, 1, 0
      %v3046 = vsel %vm3030, 1, 0
      %v3047 = vsel %vm3031, 1, 0
      %v3048 = vsel %vm3032, 1, 0
      %v3049 = vsel %vm3033, 1, 0
      %v3050 = vsel %vm3034, 1, 0
      %v3051 = vsel %vm3035, 1, 0
      %v3052 = vsel %vm3036, 1, 0
      %v3053 = vsel %vm3037, 1, 0
      %3054 = vset.pattern.permute.xlu0 0
      %3055 = vperm.xlu0 %3054, %v3038
      %v3056 = vpop.permute.xlu0 %3055
      %3057 = vset.pattern.permute.xlu0 0
      %3058 = vperm.xlu0 %3057, %v3039
      %v3059 = vpop.permute.xlu0 %3058
      %3060 = vset.pattern.permute.xlu0 0
      %3061 = vperm.xlu0 %3060, %v3040
      %v3062 = vpop.permute.xlu0 %3061
      %3063 = vset.pattern.permute.xlu0 0
      %3064 = vperm.xlu0 %3063, %v3041
      %v3065 = vpop.permute.xlu0 %3064
      %3066 = vset.pattern.permute.xlu0 0
      %3067 = vperm.xlu0 %3066, %v3042
      %v3068 = vpop.permute.xlu0 %3067
      %3069 = vset.pattern.permute.xlu0 0
      %3070 = vperm.xlu0 %3069, %v3043
      %v3071 = vpop.permute.xlu0 %3070
      %3072 = vset.pattern.permute.xlu0 0
      %3073 = vperm.xlu0 %3072, %v3044
      %v3074 = vpop.permute.xlu0 %3073
      %3075 = vset.pattern.permute.xlu0 0
      %3076 = vperm.xlu0 %3075, %v3045
      %v3077 = vpop.permute.xlu0 %3076
      %3078 = vset.pattern.permute.xlu0 0
      %3079 = vperm.xlu0 %3078, %v3046
      %v3080 = vpop.permute.xlu0 %3079
      %3081 = vset.pattern.permute.xlu0 0
      %3082 = vperm.xlu0 %3081, %v3047
      %v3083 = vpop.permute.xlu0 %3082
      %3084 = vset.pattern.permute.xlu0 0
      %3085 = vperm.xlu0 %3084, %v3048
      %v3086 = vpop.permute.xlu0 %3085
      %3087 = vset.pattern.permute.xlu0 0
      %3088 = vperm.xlu0 %3087, %v3049
      %v3089 = vpop.permute.xlu0 %3088
      %3090 = vset.pattern.permute.xlu0 0
      %3091 = vperm.xlu0 %3090, %v3050
      %v3092 = vpop.permute.xlu0 %3091
      %3093 = vset.pattern.permute.xlu0 0
      %3094 = vperm.xlu0 %3093, %v3051
      %v3095 = vpop.permute.xlu0 %3094
      %3096 = vset.pattern.permute.xlu0 0
      %3097 = vperm.xlu0 %3096, %v3052
      %v3098 = vpop.permute.xlu0 %3097
      %3099 = vset.pattern.permute.xlu0 0
      %3100 = vperm.xlu0 %3099, %v3053
      %v3101 = vpop.permute.xlu0 %3100
      %vm3102 = vcmp.eq.s32.totalorder %v3056, 1
      %vm3103 = vcmp.eq.s32.totalorder %v3059, 1
      %vm3104 = vcmp.eq.s32.totalorder %v3062, 1
      %vm3105 = vcmp.eq.s32.totalorder %v3065, 1
      %vm3106 = vcmp.eq.s32.totalorder %v3068, 1
      %vm3107 = vcmp.eq.s32.totalorder %v3071, 1
      %vm3108 = vcmp.eq.s32.totalorder %v3074, 1
      %vm3109 = vcmp.eq.s32.totalorder %v3077, 1
      %vm3110 = vcmp.eq.s32.totalorder %v3080, 1
      %vm3111 = vcmp.eq.s32.totalorder %v3083, 1
      %vm3112 = vcmp.eq.s32.totalorder %v3086, 1
      %vm3113 = vcmp.eq.s32.totalorder %v3089, 1
      %vm3114 = vcmp.eq.s32.totalorder %v3092, 1
      %vm3115 = vcmp.eq.s32.totalorder %v3095, 1
      %vm3116 = vcmp.eq.s32.totalorder %v3098, 1
      %vm3117 = vcmp.eq.s32.totalorder %v3101, 1
      %v3118 = vsel %vm3102, %v2990, 0.0
      %v3119 = vsel %vm3103, %v2991, 0.0
      %v3120 = vsel %vm3104, %v2992, 0.0
      %v3121 = vsel %vm3105, %v2993, 0.0
      %v3122 = vsel %vm3106, %v2994, 0.0
      %v3123 = vsel %vm3107, %v2995, 0.0
      %v3124 = vsel %vm3108, %v2996, 0.0
      %v3125 = vsel %vm3109, %v2997, 0.0
      %v3126 = vsel %vm3110, %v2998, 0.0
      %v3127 = vsel %vm3111, %v2999, 0.0
      %v3128 = vsel %vm3112, %v3000, 0.0
      %v3129 = vsel %vm3113, %v3001, 0.0
      %v3130 = vsel %vm3114, %v3002, 0.0
      %v3131 = vsel %vm3115, %v3003, 0.0
      %v3132 = vsel %vm3116, %v3004, 0.0
      %v3133 = vsel %vm3117, %v3005, 0.0
      %v3134 = vmax.f32 %v2664, %v3118
      %v3135 = vmax.f32 %v2665, %v3119
      %v3136 = vmax.f32 %v2666, %v3120
      %v3137 = vmax.f32 %v2667, %v3121
      %v3138 = vmax.f32 %v3134, %v3122
      %v3139 = vmax.f32 %v3135, %v3123
      %v3140 = vmax.f32 %v3136, %v3124
      %v3141 = vmax.f32 %v3137, %v3125
      %v3142 = vmax.f32 %v3138, %v3126
      %v3143 = vmax.f32 %v3139, %v3127
      %v3144 = vmax.f32 %v3140, %v3128
      %v3145 = vmax.f32 %v3141, %v3129
      %v3146 = vmax.f32 %v3142, %v3130
      %v3147 = vmax.f32 %v3143, %v3131
      %v3148 = vmax.f32 %v3144, %v3132
      %v3149 = vmax.f32 %v3145, %v3133
      %v3150 = vpack.c.bf16 %v3147, %v3146
      %v3151 = vpack.c.bf16 %v3149, %v3148
      %v3154 = vunpack.c.l.b16 %v3150
      %v3155 = vunpack.c.h.b16 %v3150
      %v3156 = vunpack.c.l.b16 %v3151
      %v3157 = vunpack.c.h.b16 %v3151
      %v3158 = vpack.c.b16 %v3154, %v3154
      %v3159 = vpack.c.b16 %v3155, %v3155
      %v3160 = vpack.c.b16 %v3156, %v3156
      %v3161 = vpack.c.b16 %v3157, %v3157
      %3166 = vst [vmem:[%s221] sm:$0xf] %v3158
      %3167 = vst [vmem:[%s221 + $0x4] sm:$0xf] %v3159
      %3168 = vst [vmem:[%s221 + $0x8] sm:$0xf] %v3160
      %3169 = vst [vmem:[%s221 + $0xc] sm:$0xf] %v3161
      %s3170 = smul.u32 4, %s15
      %p3171 = scmp.lt.s32.totalorder %s3170, 7
      %s3172 = scalar_select %p3171, %s3170, 7
      %s3173 = smul.addr %s3172, 4
      %s3174 = scalar_lea.vmem %s4, %s3173
      // Predicated region
      $region37: #{sa_module_msg_forward.1} parent=35 // pred_check
        %p3175 = pneg %p127
      $region38: #{sa_module_msg_forward.1} parent=35 // pred_check_branch
        %3177 = sbr.rel (%p3175) target = $region40
      $region39: #{sa_module_msg_forward.1} parent=35 // pred_region
        %s3178 = smul.u32 4, %s15
      $region40: #{sa_module_msg_forward.1} parent=35 // pred_fallthru
        _
    $region36: #{sa_module_msg_forward.1} parent=5 // pred_fallthru
      _
    %p3179 = scmp.le.s32.totalorder 2, %s10
    // Predicated region
    $region41: #{sa_module_msg_forward.1} parent=5 // pred_check
      %p3180 = pneg %p3179
    $region42: #{sa_module_msg_forward.1} parent=5 // pred_check_branch
      %3182 = sbr.rel (%p3180) target = $region44
    $region43: #{sa_module_msg_forward.1} parent=5 // pred_region
      %s3183 = ssub.s32 %s10, 2
      // Predicated region
      $region45: #{sa_module_msg_forward.1} parent=43 // pred_check
        %p3184 = pneg %p133
      $region46: #{sa_module_msg_forward.1} parent=43 // pred_check_branch
        %3186 = sbr.rel (%p3184) target = $region48
      $region47: #{sa_module_msg_forward.1} parent=43 // pred_region
        %s3187 = smul.u32 4, %s16
        %p3188 = scmp.lt.s32.totalorder %s3187, 7
        %s3189 = scalar_select %p3188, %s3187, 7
        %s3190 = smul.addr %s3189, 4
        %s3191 = scalar_lea.vmem %s4, %s3190
      $region48: #{sa_module_msg_forward.1} parent=43 // pred_fallthru
        _
    $region44: #{sa_module_msg_forward.1} parent=5 // pred_fallthru
      _
  $region6: #{sa_module_msg_forward.1} parent=0 // loop_footer
    %s14 = sadd.s32 1, %s10
  $region7: #{sa_module_msg_forward.1} parent=0 // loop_footer_branch
    %9 = sbr.rel target = $region3
  $region8: #{sa_module_msg_forward.1} parent=0 // loop_exit
    _

</llo_original>
